<compile_context>
chip_gen: v5e
topology: v5e:2x2
jax: 0.10.0
libtpu: 0.0.40
codegen_flags: <defaults>
</compile_context>

<pallas_src>
import jax
import jax.numpy as jnp
from jax import lax
from jax.experimental import pallas as pl
from jax.experimental.pallas import tpu as pltpu


def apply_act(x, name):
    if name == "tanh":
        return jnp.tanh(x)
    if name == "elu":
        return jax.nn.elu(x)
    if name == "relu":
        return jnp.maximum(x, 0.0)
    if name == "selu":
        return jax.nn.selu(x)
    if name == "sigmoid":
        return jax.nn.sigmoid(x)
    return x  # 'linear' / default


# ----------------------------------------------------------------------------
# Pallas kernel
# ----------------------------------------------------------------------------
def make_dec_kernel(T, Bp, F, H, A, D, dec_act):
    """T timesteps, Bp padded batch (multiple of 8), F input feats, H hidden."""
    TB = T * Bp
    H2, H4, H8, H12, H16 = 2 * H, 4 * H, 8 * H, 12 * H, 16 * H
    n_rows = (T - A) * Bp

    def kernel(x_ref, wx_ref, bpre_ref, wbig_ref, wscal_ref, bsc_ref,
               out_ref, pre_ref, hist_ref):
        f32 = jnp.float32

        # ---- stage 1a: batched per-timestep additive terms (x-path + biases)
        pre_ref[...] = (jnp.dot(x_ref[...], wx_ref[...],
                                preferred_element_type=f32) + bpre_ref[...])

        # Lane mask: [0:2H) = layer-0 cells (chain1|chain2), [2H:4H) = layer-1.
        col = lax.broadcasted_iota(jnp.int32, (Bp, H4), 1)
        l0_mask = col < H2

        def gates(S, h_all):
            # S layout (16H): [r 4H | z 4H | gh_n 4H | gi_n 4H], cell order
            # [L0c1|L0c2|L1c1|L1c2] inside each gate group (matches h_all).
            rz = jax.nn.sigmoid(S[:, :H8])
            r = rz[:, :H4]
            z = rz[:, H4:H8]
            n = jnp.tanh(S[:, H12:H16] + r * S[:, H8:H12])
            return n + z * (h_all - n)

        # ---- step 0: only layer-0 cells for t=0 (h_all == 0 -> G == 0) -------
        h_all = jnp.zeros((Bp, H4), f32)
        h_new = gates(pre_ref[0:Bp, :], h_all)
        h_all = jnp.where(l0_mask, h_new, h_all)

        # ---- steps 1..T-1: layer-0 at time s, layer-1 at time s-1 (fused) ----
        for s in range(1, T):
            r0 = s * Bp
            G = jnp.dot(h_all, wbig_ref[...], preferred_element_type=f32)
            h_all = gates(G + pre_ref[r0:r0 + Bp, :], h_all)
            hist_ref[r0 - Bp:r0, :] = h_all          # L1 half = rnn_out[s-1]

        # ---- step T: only layer-1 cells, time T-1 -----------------------------
        G = jnp.dot(h_all, wbig_ref[...], preferred_element_type=f32)
        h_new = gates(G + pre_ref[(T - 1) * Bp:TB, :], h_all)
        h_all = jnp.where(l0_mask, h_all, h_new)
        hist_ref[(T - 1) * Bp:TB, :] = h_all

        # ---- stage 2/3: folded attention + context + output head -------------
        # One dot yields per-(t, batch) scalars for BOTH chains (lane-packed):
        # cols: [eh1, eh2, ep1, ep2, p1, p2, q1, q2, w0_1, w0_2, bo, 0...].
        # ba folded into eh cols, bc@wo folded into q cols, bo in col 10.
        scal = (jnp.dot(hist_ref[...], wscal_ref[...],
                        preferred_element_type=f32) + bsc_ref[...])   # (TB, 16)
        eh = scal[:, 0:2]
        ep = scal[:, 2:4]
        pp = scal[:, 4:6]
        qq = scal[:, 6:8]
        w0 = scal[:, 8:10]
        bo = scal[:, 10:11]

        eh_t = eh[A * Bp:, :]                                      # (n_rows, 2)
        es = [eh_t + ep[k * Bp:(T - A + k) * Bp, :] for k in range(A)]
        m = es[0]
        for k in range(1, A):
            m = jnp.maximum(m, es[k])
        ps = [jnp.exp(e - m) for e in es]
        den = ps[0]
        for k in range(1, A):
            den = den + ps[k]
        ctx = ps[0] * pp[0:n_rows, :]
        for k in range(1, A):
            ctx = ctx + ps[k] * pp[k * Bp:(T - A + k) * Bp, :]
        d_core = ctx * pl.reciprocal(den, approx=False) + qq[A * Bp:, :]
        head = jnp.concatenate([w0[0:Bp, :]] * A, axis=0)          # (A*Bp, 2)
        d = jnp.concatenate([head, d_core], axis=0)                # (TB, 2)

        d1 = d[:, 0:1]
        d2 = d[:, 1:2]
        # rt_d index = min(t + D, T - 1): shift by D blocks, repeat last D times
        d2s = jnp.concatenate([d2[D * Bp:, :]]
                              + [d2[(T - 1) * Bp:, :]] * D, axis=0)
        out_ref[...] = jax.nn.sigmoid(apply_act(d1 + d2s + bo, dec_act))

    return kernel


# ----------------------------------------------------------------------------
# Wrapper-side weight packing (parameter-only, amortized)
# ----------------------------------------------------------------------------
def _g(w, k, H):
    return w[:, k * H:(k + 1) * H]


def build_recurrence_weight(params, H):
    """W_big (4H, 16H): rows = [h1_0 | h2_0 | h1_1 | h2_1]; cols gate-major."""
    f32 = jnp.float32
    Z = jnp.zeros((H, H), f32)
    wh10, wh20 = params["w1h0"].astype(f32), params["w2h0"].astype(f32)
    wh11, wh21 = params["w1h1"].astype(f32), params["w2h1"].astype(f32)
    wi11, wi21 = params["w1i1"].astype(f32), params["w2i1"].astype(f32)

    def colblk(b0, b1, b2, b3):
        return jnp.concatenate([b0, b1, b2, b3], axis=0)          # (4H, H)

    blocks = []
    for k in (0, 1):  # r, z gates: L1 gets gi+gh summed (same column)
        blocks += [colblk(_g(wh10, k, H), Z, Z, Z),
                   colblk(Z, _g(wh20, k, H), Z, Z),
                   colblk(_g(wi11, k, H), Z, _g(wh11, k, H), Z),
                   colblk(Z, _g(wi21, k, H), Z, _g(wh21, k, H))]
    # gh_n (kept separate: multiplied by r before the tanh)
    blocks += [colblk(_g(wh10, 2, H), Z, Z, Z),
               colblk(Z, _g(wh20, 2, H), Z, Z),
               colblk(Z, Z, _g(wh11, 2, H), Z),
               colblk(Z, Z, Z, _g(wh21, 2, H))]
    # gi_n: layer-0 part comes from the batched x-path (zero columns here),
    #       layer-1 part comes from the layer-0 hidden (wavefront input).
    blocks += [colblk(Z, Z, Z, Z),
               colblk(Z, Z, Z, Z),
               colblk(_g(wi11, 2, H), Z, Z, Z),
               colblk(Z, _g(wi21, 2, H), Z, Z)]
    return jnp.concatenate(blocks, axis=1)                         # (4H, 16H)


def build_pre_weights(params, F, H):
    """wx (F, 16H) and bpre (1, 16H): x-path weights + all GRU biases."""
    f32 = jnp.float32
    ZF = jnp.zeros((F, H), f32)
    wi10, wi20 = params["w1i0"].astype(f32), params["w2i0"].astype(f32)
    bi10, bh10 = params["b1i0"].astype(f32), params["b1h0"].astype(f32)
    bi20, bh20 = params["b2i0"].astype(f32), params["b2h0"].astype(f32)
    bi11, bh11 = params["b1i1"].astype(f32), params["b1h1"].astype(f32)
    bi21, bh21 = params["b2i1"].astype(f32), params["b2h1"].astype(f32)

    wx_blocks = [
        _g(wi10, 0, H), _g(wi20, 0, H), ZF, ZF,        # r
        _g(wi10, 1, H), _g(wi20, 1, H), ZF, ZF,        # z
        ZF, ZF, ZF, ZF,                                # gh_n
        _g(wi10, 2, H), _g(wi20, 2, H), ZF, ZF,        # gi_n
    ]
    b_blocks = [
        _g(bi10, 0, H) + _g(bh10, 0, H), _g(bi20, 0, H) + _g(bh20, 0, H),
        _g(bi11, 0, H) + _g(bh11, 0, H), _g(bi21, 0, H) + _g(bh21, 0, H),
        _g(bi10, 1, H) + _g(bh10, 1, H), _g(bi20, 1, H) + _g(bh20, 1, H),
        _g(bi11, 1, H) + _g(bh11, 1, H), _g(bi21, 1, H) + _g(bh21, 1, H),
        _g(bh10, 2, H), _g(bh20, 2, H), _g(bh11, 2, H), _g(bh21, 2, H),
        _g(bi10, 2, H), _g(bi20, 2, H), _g(bi11, 2, H), _g(bi21, 2, H),
    ]
    wx = jnp.concatenate(wx_blocks, axis=1)                        # (F, 16H)
    bpre = jnp.concatenate(b_blocks, axis=1)                       # (1, 16H)
    return wx, bpre


def build_head_weights(params, H):
    """w_scal (4H, 16) and bsc (1, 16): attention/context folded into w_out."""
    f32 = jnp.float32
    wa = params["w_attn"].astype(f32)[0]                           # (2H,)
    wo = params["w_out"].astype(f32)[0]                            # (2H,)
    wc = params["w_ctx"].astype(f32)                               # (2H, H)
    bc = params["b_ctx"].astype(f32)[0]                            # (H,)
    ba = params["b_attn"].astype(f32)[0, 0]
    bo = params["b_out"].astype(f32)[0, 0]
    wa_h, wa_p = wa[:H], wa[H:]
    wo_l, wo_r = wo[:H], wo[H:]
    uc1, uc2 = wc[:H] @ wo_l, wc[:H] @ wo_r
    uh1, uh2 = wc[H:] @ wo_l, wc[H:] @ wo_r
    beta1, beta2 = bc @ wo_l, bc @ wo_r

    Zc = jnp.zeros((H,), f32)
    # cols: [eh1, eh2, ep1, ep2, p1, p2, q1, q2, w0_1, w0_2, bo, pad...]
    c1 = [wa_h, Zc, wa_p, Zc, uc1, Zc, uh1, Zc, wo_l, Zc] + [Zc] * 6
    c2 = [Zc, wa_h, Zc, wa_p, Zc, uc2, Zc, uh2, Zc, wo_r] + [Zc] * 6
    w_c1 = jnp.stack(c1, axis=1)                                   # (H, 16)
    w_c2 = jnp.stack(c2, axis=1)                                   # (H, 16)
    w_scal = jnp.concatenate([jnp.zeros((2 * H, 16), f32), w_c1, w_c2], axis=0)

    bsc = jnp.zeros((16,), f32)
    bsc = (bsc.at[0].set(ba).at[1].set(ba)
              .at[6].set(beta1).at[7].set(beta2).at[10].set(bo))
    return w_scal, bsc.reshape(1, 16)


def dec_forward(x, params, *, attn_num, D, dec_act="linear"):
    """x: (B, T, F) batch-first like the PyTorch module. Returns (B, T, 1)."""
    B, T, F = x.shape
    H = params["w_ctx"].shape[1]
    Bp = ((B + 7) // 8) * 8                    # pad batch to full sublane tiles

    x_tm = jnp.transpose(x.astype(jnp.float32), (1, 0, 2))          # (T, B, F)
    x_tm = jnp.pad(x_tm, ((0, 0), (0, Bp - B), (0, 0)))             # (T, Bp, F)
    x_flat = x_tm.reshape(T * Bp, F)                                # (T*Bp, F)

    wx, bpre = build_pre_weights(params, F, H)
    w_big = build_recurrence_weight(params, H)
    w_scal, bsc = build_head_weights(params, H)

    kernel = make_dec_kernel(T, Bp, F, H, attn_num, D, dec_act)
    out_flat = pl.pallas_call(
        kernel,
        out_shape=jax.ShapeDtypeStruct((T * Bp, 1), jnp.float32),
        in_specs=[pl.BlockSpec(memory_space=pltpu.MemorySpace.VMEM)] * 6,
        out_specs=pl.BlockSpec(memory_space=pltpu.MemorySpace.VMEM),
        scratch_shapes=[
            pltpu.VMEM((T * Bp, 16 * H), jnp.float32),   # pre (x-path + biases)
            pltpu.VMEM((T * Bp, 4 * H), jnp.float32),    # hidden history
        ],
    )(x_flat, wx, bpre, w_big, w_scal, bsc)

    out = out_flat.reshape(T, Bp, 1)[:, :B, :]                      # (T, B, 1)
    return jnp.transpose(out, (1, 0, 2))                            # (B, T, 1)


# ----------------------------------------------------------------------------
# Pure-JAX reference (mirrors the PyTorch forward) for verification
# ----------------------------------------------------------------------------
def _gru_ref(x_tbf, layers):
    h_all = x_tbf
    for (wih, whh, bih, bhh) in layers:
        H = whh.shape[0]

        def step(h, xt):
            gi = xt @ wih + bih[0]
            gh = h @ whh + bhh[0]
            r = jax.nn.sigmoid(gi[:, :H] + gh[:, :H])
            z = jax.nn.sigmoid(gi[:, H:2 * H] + gh[:, H:2 * H])
            n = jnp.tanh(gi[:, 2 * H:] + r * gh[:, 2 * H:])
            hn = (1.0 - z) * n + z * h
            return hn, hn

        h0 = jnp.zeros((x_tbf.shape[1], H), jnp.float32)
        _, h_all = lax.scan(step, h0, h_all)
    return h_all


def ref_forward(x, params, *, attn_num, D, dec_act="linear"):
    B, T, F = x.shape
    xt = jnp.transpose(x.astype(jnp.float32), (1, 0, 2))
    r1 = _gru_ref(xt, [(params["w1i0"], params["w1h0"], params["b1i0"], params["b1h0"]),
                       (params["w1i1"], params["w1h1"], params["b1i1"], params["b1h1"])])
    r2 = _gru_ref(xt, [(params["w2i0"], params["w2h0"], params["b2i0"], params["b2h0"]),
                       (params["w2i1"], params["w2h1"], params["b2i1"], params["b2h1"])])
    r1 = jnp.transpose(r1, (1, 0, 2))
    r2 = jnp.transpose(r2, (1, 0, 2))
    H = r1.shape[-1]
    wa, ba = params["w_attn"], params["b_attn"]
    wc, bc = params["w_ctx"], params["b_ctx"]
    wo, bo = params["w_out"], params["b_out"]

    def process(r):
        cp = jnp.zeros_like(r)
        cp = cp.at[:, 0:attn_num, :].set(r[:, 0:1, :])
        for t in range(attn_num, T):
            hidden = r[:, t, :]
            prev = r[:, t - attn_num:t, :]
            e = (jnp.sum(hidden[:, None, :] * wa[:, :H], -1)
                 + jnp.sum(prev * wa[:, H:], -1) + ba[0, 0])         # (B, A)
            a = jax.nn.softmax(e, axis=-1)
            c = jnp.sum(a[:, :, None] * prev, axis=1)
            new = c @ wc[:H] + hidden @ wc[H:] + bc[0]
            cp = cp.at[:, t, :].set(new)
        return cp

    cp1, cp2 = process(r1), process(r2)
    outs = []
    for i in range(T):
        j = T - 1 if i >= T - D - 1 else i + D
        rt, rt_d = cp1[:, i, :], cp2[:, j, :]
        dec = (jnp.sum(rt * wo[:, :H], -1, keepdims=True)
               + jnp.sum(rt_d * wo[:, H:], -1, keepdims=True) + bo[0])
        outs.append(apply_act(dec, dec_act))
    return jax.nn.sigmoid(jnp.stack(outs, axis=1))                   # (B, T, 1)


# ----------------------------------------------------------------------------
# Deterministic parameter init (PyTorch-style uniform fan scaling)
# ----------------------------------------------------------------------------
def init_params(key, F, H):
    ks = list(jax.random.split(key, 22))

    def u(k, shape, fan):
        b = float(fan) ** -0.5
        return jax.random.uniform(k, shape, jnp.float32, -b, b)

    p, i = {}, 0
    for rnn in (1, 2):
        for layer, in_dim in ((0, F), (1, H)):
            p[f"w{rnn}i{layer}"] = u(ks[i], (in_dim, 3 * H), H); i += 1
            p[f"w{rnn}h{layer}"] = u(ks[i], (H, 3 * H), H); i += 1
            p[f"b{rnn}i{layer}"] = u(ks[i], (1, 3 * H), H); i += 1
            p[f"b{rnn}h{layer}"] = u(ks[i], (1, 3 * H), H); i += 1
    p["w_attn"] = u(ks[i], (1, 2 * H), 2 * H); i += 1
    p["b_attn"] = u(ks[i], (1, 1), 2 * H); i += 1
    p["w_ctx"] = u(ks[i], (2 * H, H), 2 * H); i += 1
    p["b_ctx"] = u(ks[i], (1, H), 2 * H); i += 1
    p["w_out"] = u(ks[i], (1, 2 * H), 2 * H); i += 1
    p["b_out"] = u(ks[i], (1, 1), 2 * H); i += 1
    return p


if __name__ == "__main__":
    # args: code_rate_n=2, code_rate_k=1 -> F=2; dec_num_unit=32; block_len=16;
    #       attn_num=4; D=2; dec_rnn='gru'; dec_act='linear'; dropout=0
    B, T, F, H = 2, 16, 2, 32
    attn_num, D = 4, 2
    dec_act = "linear"

    key = jax.random.PRNGKey(0)
    kx, kp = jax.random.split(key)
    x = jax.random.normal(kx, (B, T, F), jnp.float32)
    params = init_params(kp, F, H)

    out = dec_forward(x, params, attn_num=attn_num, D=D, dec_act=dec_act)
    out = jax.block_until_ready(out)

    ref = ref_forward(x, params, attn_num=attn_num, D=D, dec_act=dec_act)
    err = float(jnp.max(jnp.abs(out - ref)))
    assert out.shape == (B, T, 1), out.shape
    assert err < 2e-3, f"max abs err {err}"
    print("KERNEL_OK")
</pallas_src>

<mosaic_0001>
module attributes {stable_mosaic.version = 11 : i64} {
  func.func @kernel(%arg0: memref<128x2xf32, #tpu.memory_space<vmem>>, %arg1: memref<2x512xf32, #tpu.memory_space<vmem>>, %arg2: memref<1x512xf32, #tpu.memory_space<vmem>>, %arg3: memref<128x512xf32, #tpu.memory_space<vmem>>, %arg4: memref<128x16xf32, #tpu.memory_space<vmem>>, %arg5: memref<1x16xf32, #tpu.memory_space<vmem>>, %arg6: memref<128x1xf32, #tpu.memory_space<vmem>>, %arg7: memref<128x512xf32, #tpu.memory_space<vmem>>, %arg8: memref<128x128xf32, #tpu.memory_space<vmem>>) attributes {dimension_semantics = [], scalar_prefetch = 0 : i64, scratch_operands = 2 : i64, tpu.core_type = #tpu.core_type<tc>} {
    %c0 = arith.constant 0 : index
    %c0_0 = arith.constant 0 : index
    %0 = vector.load %arg0[%c0, %c0_0] : memref<128x2xf32, #tpu.memory_space<vmem>>, vector<128x2xf32>
    %c0_1 = arith.constant 0 : index
    %c0_2 = arith.constant 0 : index
    %1 = vector.load %arg1[%c0_1, %c0_2] : memref<2x512xf32, #tpu.memory_space<vmem>>, vector<2x512xf32>
    %cst = arith.constant dense<0.000000e+00> : vector<128x512xf32>
    %2 = tpu.matmul %0, %1, %cst {dimension_numbers = #tpu.dot_dimension_numbers<[1], [0], [0], [1], [0, 0, 1, 1], [], []>} : vector<128x2xf32>, vector<2x512xf32>, vector<128x512xf32> -> vector<128x512xf32>
    %c0_3 = arith.constant 0 : index
    %c0_4 = arith.constant 0 : index
    %3 = vector.load %arg2[%c0_3, %c0_4] : memref<1x512xf32, #tpu.memory_space<vmem>>, vector<1x512xf32>
    %4 = vector.broadcast %3 : vector<1x512xf32> to vector<128x512xf32>
    %5 = arith.addf %2, %4 : vector<128x512xf32>
    %c0_5 = arith.constant 0 : index
    %c0_6 = arith.constant 0 : index
    %6 = vector.load %arg7[%c0_5, %c0_6] : memref<128x512xf32, #tpu.memory_space<vmem>>, vector<128x512xf32>
    tpu.vector_store %arg7[%c0_5, %c0_6], %5 {strides = array<i32>} : memref<128x512xf32, #tpu.memory_space<vmem>>, vector<128x512xf32>,
    %7 = tpu.iota {dimensions = array<i32: 1>} : vector<8x128xi32>
    %c64_i32 = arith.constant 64 : i32
    %8 = vector.broadcast %c64_i32 : i32 to vector<8x128xi32>
    %9 = arith.cmpi slt, %7, %8 : vector<8x128xi32>
    %cst_7 = arith.constant 0.000000e+00 : f32
    %10 = vector.broadcast %cst_7 : f32 to vector<8x128xf32>
    %c0_8 = arith.constant 0 : index
    %c0_9 = arith.constant 0 : index
    %11 = vector.load %arg7[%c0_8, %c0_9] : memref<128x512xf32, #tpu.memory_space<vmem>>, vector<8x512xf32>
    %12 = vector.extract_strided_slice %11 {offsets = [0, 0], sizes = [8, 256], strides = [1, 1]} : vector<8x512xf32> to vector<8x256xf32>
    %13 = arith.negf %12 : vector<8x256xf32>
    %14 = math.exp %13 : vector<8x256xf32>
    %cst_10 = arith.constant 1.000000e+00 : f32
    %15 = vector.broadcast %cst_10 : f32 to vector<8x256xf32>
    %16 = arith.addf %15, %14 : vector<8x256xf32>
    %17 = arith.divf %15, %16 : vector<8x256xf32>
    %18 = vector.extract_strided_slice %17 {offsets = [0, 0], sizes = [8, 128], strides = [1, 1]} : vector<8x256xf32> to vector<8x128xf32>
    %19 = vector.extract_strided_slice %17 {offsets = [0, 128], sizes = [8, 128], strides = [1, 1]} : vector<8x256xf32> to vector<8x128xf32>
    %20 = vector.extract_strided_slice %11 {offsets = [0, 384], sizes = [8, 128], strides = [1, 1]} : vector<8x512xf32> to vector<8x128xf32>
    %21 = vector.extract_strided_slice %11 {offsets = [0, 256], sizes = [8, 128], strides = [1, 1]} : vector<8x512xf32> to vector<8x128xf32>
    %22 = arith.mulf %18, %21 : vector<8x128xf32>
    %23 = arith.addf %20, %22 : vector<8x128xf32>
    %24 = math.tanh %23 : vector<8x128xf32>
    %25 = arith.subf %10, %24 : vector<8x128xf32>
    %26 = arith.mulf %19, %25 : vector<8x128xf32>
    %27 = arith.addf %24, %26 : vector<8x128xf32>
    %28 = arith.select %9, %27, %10 : vector<8x128xi1>, vector<8x128xf32>
    %c0_11 = arith.constant 0 : index
    %c0_12 = arith.constant 0 : index
    %29 = vector.load %arg3[%c0_11, %c0_12] : memref<128x512xf32, #tpu.memory_space<vmem>>, vector<128x512xf32>
    %cst_13 = arith.constant dense<0.000000e+00> : vector<8x512xf32>
    %30 = tpu.matmul %28, %29, %cst_13 {dimension_numbers = #tpu.dot_dimension_numbers<[1], [0], [0], [1], [0, 0, 1, 1], [], []>} : vector<8x128xf32>, vector<128x512xf32>, vector<8x512xf32> -> vector<8x512xf32>
    %c8 = arith.constant 8 : index
    %c0_14 = arith.constant 0 : index
    %31 = vector.load %arg7[%c8, %c0_14] : memref<128x512xf32, #tpu.memory_space<vmem>>, vector<8x512xf32>
    %32 = arith.addf %30, %31 : vector<8x512xf32>
    %33 = vector.extract_strided_slice %32 {offsets = [0, 0], sizes = [8, 256], strides = [1, 1]} : vector<8x512xf32> to vector<8x256xf32>
    %34 = arith.negf %33 : vector<8x256xf32>
    %35 = math.exp %34 : vector<8x256xf32>
    %cst_15 = arith.constant 1.000000e+00 : f32
    %36 = vector.broadcast %cst_15 : f32 to vector<8x256xf32>
    %37 = arith.addf %36, %35 : vector<8x256xf32>
    %38 = arith.divf %36, %37 : vector<8x256xf32>
    %39 = vector.extract_strided_slice %38 {offsets = [0, 0], sizes = [8, 128], strides = [1, 1]} : vector<8x256xf32> to vector<8x128xf32>
    %40 = vector.extract_strided_slice %38 {offsets = [0, 128], sizes = [8, 128], strides = [1, 1]} : vector<8x256xf32> to vector<8x128xf32>
    %41 = vector.extract_strided_slice %32 {offsets = [0, 384], sizes = [8, 128], strides = [1, 1]} : vector<8x512xf32> to vector<8x128xf32>
    %42 = vector.extract_strided_slice %32 {offsets = [0, 256], sizes = [8, 128], strides = [1, 1]} : vector<8x512xf32> to vector<8x128xf32>
    %43 = arith.mulf %39, %42 : vector<8x128xf32>
    %44 = arith.addf %41, %43 : vector<8x128xf32>
    %45 = math.tanh %44 : vector<8x128xf32>
    %46 = arith.subf %28, %45 : vector<8x128xf32>
    %47 = arith.mulf %40, %46 : vector<8x128xf32>
    %48 = arith.addf %45, %47 : vector<8x128xf32>
    %c0_16 = arith.constant 0 : index
    %c0_17 = arith.constant 0 : index
    %49 = vector.load %arg8[%c0_16, %c0_17] : memref<128x128xf32, #tpu.memory_space<vmem>>, vector<8x128xf32>
    tpu.vector_store %arg8[%c0_16, %c0_17], %48 {strides = array<i32>} : memref<128x128xf32, #tpu.memory_space<vmem>>, vector<8x128xf32>,
    %c0_18 = arith.constant 0 : index
    %c0_19 = arith.constant 0 : index
    %50 = vector.load %arg3[%c0_18, %c0_19] : memref<128x512xf32, #tpu.memory_space<vmem>>, vector<128x512xf32>
    %cst_20 = arith.constant dense<0.000000e+00> : vector<8x512xf32>
    %51 = tpu.matmul %48, %50, %cst_20 {dimension_numbers = #tpu.dot_dimension_numbers<[1], [0], [0], [1], [0, 0, 1, 1], [], []>} : vector<8x128xf32>, vector<128x512xf32>, vector<8x512xf32> -> vector<8x512xf32>
    %c16 = arith.constant 16 : index
    %c0_21 = arith.constant 0 : index
    %52 = vector.load %arg7[%c16, %c0_21] : memref<128x512xf32, #tpu.memory_space<vmem>>, vector<8x512xf32>
    %53 = arith.addf %51, %52 : vector<8x512xf32>
    %54 = vector.extract_strided_slice %53 {offsets = [0, 0], sizes = [8, 256], strides = [1, 1]} : vector<8x512xf32> to vector<8x256xf32>
    %55 = arith.negf %54 : vector<8x256xf32>
    %56 = math.exp %55 : vector<8x256xf32>
    %cst_22 = arith.constant 1.000000e+00 : f32
    %57 = vector.broadcast %cst_22 : f32 to vector<8x256xf32>
    %58 = arith.addf %57, %56 : vector<8x256xf32>
    %59 = arith.divf %57, %58 : vector<8x256xf32>
    %60 = vector.extract_strided_slice %59 {offsets = [0, 0], sizes = [8, 128], strides = [1, 1]} : vector<8x256xf32> to vector<8x128xf32>
    %61 = vector.extract_strided_slice %59 {offsets = [0, 128], sizes = [8, 128], strides = [1, 1]} : vector<8x256xf32> to vector<8x128xf32>
    %62 = vector.extract_strided_slice %53 {offsets = [0, 384], sizes = [8, 128], strides = [1, 1]} : vector<8x512xf32> to vector<8x128xf32>
    %63 = vector.extract_strided_slice %53 {offsets = [0, 256], sizes = [8, 128], strides = [1, 1]} : vector<8x512xf32> to vector<8x128xf32>
    %64 = arith.mulf %60, %63 : vector<8x128xf32>
    %65 = arith.addf %62, %64 : vector<8x128xf32>
    %66 = math.tanh %65 : vector<8x128xf32>
    %67 = arith.subf %48, %66 : vector<8x128xf32>
    %68 = arith.mulf %61, %67 : vector<8x128xf32>
    %69 = arith.addf %66, %68 : vector<8x128xf32>
    %c8_23 = arith.constant 8 : index
    %c0_24 = arith.constant 0 : index
    %70 = vector.load %arg8[%c8_23, %c0_24] : memref<128x128xf32, #tpu.memory_space<vmem>>, vector<8x128xf32>
    tpu.vector_store %arg8[%c8_23, %c0_24], %69 {strides = array<i32>} : memref<128x128xf32, #tpu.memory_space<vmem>>, vector<8x128xf32>,
    %c0_25 = arith.constant 0 : index
    %c0_26 = arith.constant 0 : index
    %71 = vector.load %arg3[%c0_25, %c0_26] : memref<128x512xf32, #tpu.memory_space<vmem>>, vector<128x512xf32>
    %cst_27 = arith.constant dense<0.000000e+00> : vector<8x512xf32>
    %72 = tpu.matmul %69, %71, %cst_27 {dimension_numbers = #tpu.dot_dimension_numbers<[1], [0], [0], [1], [0, 0, 1, 1], [], []>} : vector<8x128xf32>, vector<128x512xf32>, vector<8x512xf32> -> vector<8x512xf32>
    %c24 = arith.constant 24 : index
    %c0_28 = arith.constant 0 : index
    %73 = vector.load %arg7[%c24, %c0_28] : memref<128x512xf32, #tpu.memory_space<vmem>>, vector<8x512xf32>
    %74 = arith.addf %72, %73 : vector<8x512xf32>
    %75 = vector.extract_strided_slice %74 {offsets = [0, 0], sizes = [8, 256], strides = [1, 1]} : vector<8x512xf32> to vector<8x256xf32>
    %76 = arith.negf %75 : vector<8x256xf32>
    %77 = math.exp %76 : vector<8x256xf32>
    %cst_29 = arith.constant 1.000000e+00 : f32
    %78 = vector.broadcast %cst_29 : f32 to vector<8x256xf32>
    %79 = arith.addf %78, %77 : vector<8x256xf32>
    %80 = arith.divf %78, %79 : vector<8x256xf32>
    %81 = vector.extract_strided_slice %80 {offsets = [0, 0], sizes = [8, 128], strides = [1, 1]} : vector<8x256xf32> to vector<8x128xf32>
    %82 = vector.extract_strided_slice %80 {offsets = [0, 128], sizes = [8, 128], strides = [1, 1]} : vector<8x256xf32> to vector<8x128xf32>
    %83 = vector.extract_strided_slice %74 {offsets = [0, 384], sizes = [8, 128], strides = [1, 1]} : vector<8x512xf32> to vector<8x128xf32>
    %84 = vector.extract_strided_slice %74 {offsets = [0, 256], sizes = [8, 128], strides = [1, 1]} : vector<8x512xf32> to vector<8x128xf32>
    %85 = arith.mulf %81, %84 : vector<8x128xf32>
    %86 = arith.addf %83, %85 : vector<8x128xf32>
    %87 = math.tanh %86 : vector<8x128xf32>
    %88 = arith.subf %69, %87 : vector<8x128xf32>
    %89 = arith.mulf %82, %88 : vector<8x128xf32>
    %90 = arith.addf %87, %89 : vector<8x128xf32>
    %c16_30 = arith.constant 16 : index
    %c0_31 = arith.constant 0 : index
    %91 = vector.load %arg8[%c16_30, %c0_31] : memref<128x128xf32, #tpu.memory_space<vmem>>, vector<8x128xf32>
    tpu.vector_store %arg8[%c16_30, %c0_31], %90 {strides = array<i32>} : memref<128x128xf32, #tpu.memory_space<vmem>>, vector<8x128xf32>,
    %c0_32 = arith.constant 0 : index
    %c0_33 = arith.constant 0 : index
    %92 = vector.load %arg3[%c0_32, %c0_33] : memref<128x512xf32, #tpu.memory_space<vmem>>, vector<128x512xf32>
    %cst_34 = arith.constant dense<0.000000e+00> : vector<8x512xf32>
    %93 = tpu.matmul %90, %92, %cst_34 {dimension_numbers = #tpu.dot_dimension_numbers<[1], [0], [0], [1], [0, 0, 1, 1], [], []>} : vector<8x128xf32>, vector<128x512xf32>, vector<8x512xf32> -> vector<8x512xf32>
    %c32 = arith.constant 32 : index
    %c0_35 = arith.constant 0 : index
    %94 = vector.load %arg7[%c32, %c0_35] : memref<128x512xf32, #tpu.memory_space<vmem>>, vector<8x512xf32>
    %95 = arith.addf %93, %94 : vector<8x512xf32>
    %96 = vector.extract_strided_slice %95 {offsets = [0, 0], sizes = [8, 256], strides = [1, 1]} : vector<8x512xf32> to vector<8x256xf32>
    %97 = arith.negf %96 : vector<8x256xf32>
    %98 = math.exp %97 : vector<8x256xf32>
    %cst_36 = arith.constant 1.000000e+00 : f32
    %99 = vector.broadcast %cst_36 : f32 to vector<8x256xf32>
    %100 = arith.addf %99, %98 : vector<8x256xf32>
    %101 = arith.divf %99, %100 : vector<8x256xf32>
    %102 = vector.extract_strided_slice %101 {offsets = [0, 0], sizes = [8, 128], strides = [1, 1]} : vector<8x256xf32> to vector<8x128xf32>
    %103 = vector.extract_strided_slice %101 {offsets = [0, 128], sizes = [8, 128], strides = [1, 1]} : vector<8x256xf32> to vector<8x128xf32>
    %104 = vector.extract_strided_slice %95 {offsets = [0, 384], sizes = [8, 128], strides = [1, 1]} : vector<8x512xf32> to vector<8x128xf32>
    %105 = vector.extract_strided_slice %95 {offsets = [0, 256], sizes = [8, 128], strides = [1, 1]} : vector<8x512xf32> to vector<8x128xf32>
    %106 = arith.mulf %102, %105 : vector<8x128xf32>
    %107 = arith.addf %104, %106 : vector<8x128xf32>
    %108 = math.tanh %107 : vector<8x128xf32>
    %109 = arith.subf %90, %108 : vector<8x128xf32>
    %110 = arith.mulf %103, %109 : vector<8x128xf32>
    %111 = arith.addf %108, %110 : vector<8x128xf32>
    %c24_37 = arith.constant 24 : index
    %c0_38 = arith.constant 0 : index
    %112 = vector.load %arg8[%c24_37, %c0_38] : memref<128x128xf32, #tpu.memory_space<vmem>>, vector<8x128xf32>
    tpu.vector_store %arg8[%c24_37, %c0_38], %111 {strides = array<i32>} : memref<128x128xf32, #tpu.memory_space<vmem>>, vector<8x128xf32>,
    %c0_39 = arith.constant 0 : index
    %c0_40 = arith.constant 0 : index
    %113 = vector.load %arg3[%c0_39, %c0_40] : memref<128x512xf32, #tpu.memory_space<vmem>>, vector<128x512xf32>
    %cst_41 = arith.constant dense<0.000000e+00> : vector<8x512xf32>
    %114 = tpu.matmul %111, %113, %cst_41 {dimension_numbers = #tpu.dot_dimension_numbers<[1], [0], [0], [1], [0, 0, 1, 1], [], []>} : vector<8x128xf32>, vector<128x512xf32>, vector<8x512xf32> -> vector<8x512xf32>
    %c40 = arith.constant 40 : index
    %c0_42 = arith.constant 0 : index
    %115 = vector.load %arg7[%c40, %c0_42] : memref<128x512xf32, #tpu.memory_space<vmem>>, vector<8x512xf32>
    %116 = arith.addf %114, %115 : vector<8x512xf32>
    %117 = vector.extract_strided_slice %116 {offsets = [0, 0], sizes = [8, 256], strides = [1, 1]} : vector<8x512xf32> to vector<8x256xf32>
    %118 = arith.negf %117 : vector<8x256xf32>
    %119 = math.exp %118 : vector<8x256xf32>
    %cst_43 = arith.constant 1.000000e+00 : f32
    %120 = vector.broadcast %cst_43 : f32 to vector<8x256xf32>
    %121 = arith.addf %120, %119 : vector<8x256xf32>
    %122 = arith.divf %120, %121 : vector<8x256xf32>
    %123 = vector.extract_strided_slice %122 {offsets = [0, 0], sizes = [8, 128], strides = [1, 1]} : vector<8x256xf32> to vector<8x128xf32>
    %124 = vector.extract_strided_slice %122 {offsets = [0, 128], sizes = [8, 128], strides = [1, 1]} : vector<8x256xf32> to vector<8x128xf32>
    %125 = vector.extract_strided_slice %116 {offsets = [0, 384], sizes = [8, 128], strides = [1, 1]} : vector<8x512xf32> to vector<8x128xf32>
    %126 = vector.extract_strided_slice %116 {offsets = [0, 256], sizes = [8, 128], strides = [1, 1]} : vector<8x512xf32> to vector<8x128xf32>
    %127 = arith.mulf %123, %126 : vector<8x128xf32>
    %128 = arith.addf %125, %127 : vector<8x128xf32>
    %129 = math.tanh %128 : vector<8x128xf32>
    %130 = arith.subf %111, %129 : vector<8x128xf32>
    %131 = arith.mulf %124, %130 : vector<8x128xf32>
    %132 = arith.addf %129, %131 : vector<8x128xf32>
    %c32_44 = arith.constant 32 : index
    %c0_45 = arith.constant 0 : index
    %133 = vector.load %arg8[%c32_44, %c0_45] : memref<128x128xf32, #tpu.memory_space<vmem>>, vector<8x128xf32>
    tpu.vector_store %arg8[%c32_44, %c0_45], %132 {strides = array<i32>} : memref<128x128xf32, #tpu.memory_space<vmem>>, vector<8x128xf32>,
    %c0_46 = arith.constant 0 : index
    %c0_47 = arith.constant 0 : index
    %134 = vector.load %arg3[%c0_46, %c0_47] : memref<128x512xf32, #tpu.memory_space<vmem>>, vector<128x512xf32>
    %cst_48 = arith.constant dense<0.000000e+00> : vector<8x512xf32>
    %135 = tpu.matmul %132, %134, %cst_48 {dimension_numbers = #tpu.dot_dimension_numbers<[1], [0], [0], [1], [0, 0, 1, 1], [], []>} : vector<8x128xf32>, vector<128x512xf32>, vector<8x512xf32> -> vector<8x512xf32>
    %c48 = arith.constant 48 : index
    %c0_49 = arith.constant 0 : index
    %136 = vector.load %arg7[%c48, %c0_49] : memref<128x512xf32, #tpu.memory_space<vmem>>, vector<8x512xf32>
    %137 = arith.addf %135, %136 : vector<8x512xf32>
    %138 = vector.extract_strided_slice %137 {offsets = [0, 0], sizes = [8, 256], strides = [1, 1]} : vector<8x512xf32> to vector<8x256xf32>
    %139 = arith.negf %138 : vector<8x256xf32>
    %140 = math.exp %139 : vector<8x256xf32>
    %cst_50 = arith.constant 1.000000e+00 : f32
    %141 = vector.broadcast %cst_50 : f32 to vector<8x256xf32>
    %142 = arith.addf %141, %140 : vector<8x256xf32>
    %143 = arith.divf %141, %142 : vector<8x256xf32>
    %144 = vector.extract_strided_slice %143 {offsets = [0, 0], sizes = [8, 128], strides = [1, 1]} : vector<8x256xf32> to vector<8x128xf32>
    %145 = vector.extract_strided_slice %143 {offsets = [0, 128], sizes = [8, 128], strides = [1, 1]} : vector<8x256xf32> to vector<8x128xf32>
    %146 = vector.extract_strided_slice %137 {offsets = [0, 384], sizes = [8, 128], strides = [1, 1]} : vector<8x512xf32> to vector<8x128xf32>
    %147 = vector.extract_strided_slice %137 {offsets = [0, 256], sizes = [8, 128], strides = [1, 1]} : vector<8x512xf32> to vector<8x128xf32>
    %148 = arith.mulf %144, %147 : vector<8x128xf32>
    %149 = arith.addf %146, %148 : vector<8x128xf32>
    %150 = math.tanh %149 : vector<8x128xf32>
    %151 = arith.subf %132, %150 : vector<8x128xf32>
    %152 = arith.mulf %145, %151 : vector<8x128xf32>
    %153 = arith.addf %150, %152 : vector<8x128xf32>
    %c40_51 = arith.constant 40 : index
    %c0_52 = arith.constant 0 : index
    %154 = vector.load %arg8[%c40_51, %c0_52] : memref<128x128xf32, #tpu.memory_space<vmem>>, vector<8x128xf32>
    tpu.vector_store %arg8[%c40_51, %c0_52], %153 {strides = array<i32>} : memref<128x128xf32, #tpu.memory_space<vmem>>, vector<8x128xf32>,
    %c0_53 = arith.constant 0 : index
    %c0_54 = arith.constant 0 : index
    %155 = vector.load %arg3[%c0_53, %c0_54] : memref<128x512xf32, #tpu.memory_space<vmem>>, vector<128x512xf32>
    %cst_55 = arith.constant dense<0.000000e+00> : vector<8x512xf32>
    %156 = tpu.matmul %153, %155, %cst_55 {dimension_numbers = #tpu.dot_dimension_numbers<[1], [0], [0], [1], [0, 0, 1, 1], [], []>} : vector<8x128xf32>, vector<128x512xf32>, vector<8x512xf32> -> vector<8x512xf32>
    %c56 = arith.constant 56 : index
    %c0_56 = arith.constant 0 : index
    %157 = vector.load %arg7[%c56, %c0_56] : memref<128x512xf32, #tpu.memory_space<vmem>>, vector<8x512xf32>
    %158 = arith.addf %156, %157 : vector<8x512xf32>
    %159 = vector.extract_strided_slice %158 {offsets = [0, 0], sizes = [8, 256], strides = [1, 1]} : vector<8x512xf32> to vector<8x256xf32>
    %160 = arith.negf %159 : vector<8x256xf32>
    %161 = math.exp %160 : vector<8x256xf32>
    %cst_57 = arith.constant 1.000000e+00 : f32
    %162 = vector.broadcast %cst_57 : f32 to vector<8x256xf32>
    %163 = arith.addf %162, %161 : vector<8x256xf32>
    %164 = arith.divf %162, %163 : vector<8x256xf32>
    %165 = vector.extract_strided_slice %164 {offsets = [0, 0], sizes = [8, 128], strides = [1, 1]} : vector<8x256xf32> to vector<8x128xf32>
    %166 = vector.extract_strided_slice %164 {offsets = [0, 128], sizes = [8, 128], strides = [1, 1]} : vector<8x256xf32> to vector<8x128xf32>
    %167 = vector.extract_strided_slice %158 {offsets = [0, 384], sizes = [8, 128], strides = [1, 1]} : vector<8x512xf32> to vector<8x128xf32>
    %168 = vector.extract_strided_slice %158 {offsets = [0, 256], sizes = [8, 128], strides = [1, 1]} : vector<8x512xf32> to vector<8x128xf32>
    %169 = arith.mulf %165, %168 : vector<8x128xf32>
    %170 = arith.addf %167, %169 : vector<8x128xf32>
    %171 = math.tanh %170 : vector<8x128xf32>
    %172 = arith.subf %153, %171 : vector<8x128xf32>
    %173 = arith.mulf %166, %172 : vector<8x128xf32>
    %174 = arith.addf %171, %173 : vector<8x128xf32>
    %c48_58 = arith.constant 48 : index
    %c0_59 = arith.constant 0 : index
    %175 = vector.load %arg8[%c48_58, %c0_59] : memref<128x128xf32, #tpu.memory_space<vmem>>, vector<8x128xf32>
    tpu.vector_store %arg8[%c48_58, %c0_59], %174 {strides = array<i32>} : memref<128x128xf32, #tpu.memory_space<vmem>>, vector<8x128xf32>,
    %c0_60 = arith.constant 0 : index
    %c0_61 = arith.constant 0 : index
    %176 = vector.load %arg3[%c0_60, %c0_61] : memref<128x512xf32, #tpu.memory_space<vmem>>, vector<128x512xf32>
    %cst_62 = arith.constant dense<0.000000e+00> : vector<8x512xf32>
    %177 = tpu.matmul %174, %176, %cst_62 {dimension_numbers = #tpu.dot_dimension_numbers<[1], [0], [0], [1], [0, 0, 1, 1], [], []>} : vector<8x128xf32>, vector<128x512xf32>, vector<8x512xf32> -> vector<8x512xf32>
    %c64 = arith.constant 64 : index
    %c0_63 = arith.constant 0 : index
    %178 = vector.load %arg7[%c64, %c0_63] : memref<128x512xf32, #tpu.memory_space<vmem>>, vector<8x512xf32>
    %179 = arith.addf %177, %178 : vector<8x512xf32>
    %180 = vector.extract_strided_slice %179 {offsets = [0, 0], sizes = [8, 256], strides = [1, 1]} : vector<8x512xf32> to vector<8x256xf32>
    %181 = arith.negf %180 : vector<8x256xf32>
    %182 = math.exp %181 : vector<8x256xf32>
    %cst_64 = arith.constant 1.000000e+00 : f32
    %183 = vector.broadcast %cst_64 : f32 to vector<8x256xf32>
    %184 = arith.addf %183, %182 : vector<8x256xf32>
    %185 = arith.divf %183, %184 : vector<8x256xf32>
    %186 = vector.extract_strided_slice %185 {offsets = [0, 0], sizes = [8, 128], strides = [1, 1]} : vector<8x256xf32> to vector<8x128xf32>
    %187 = vector.extract_strided_slice %185 {offsets = [0, 128], sizes = [8, 128], strides = [1, 1]} : vector<8x256xf32> to vector<8x128xf32>
    %188 = vector.extract_strided_slice %179 {offsets = [0, 384], sizes = [8, 128], strides = [1, 1]} : vector<8x512xf32> to vector<8x128xf32>
    %189 = vector.extract_strided_slice %179 {offsets = [0, 256], sizes = [8, 128], strides = [1, 1]} : vector<8x512xf32> to vector<8x128xf32>
    %190 = arith.mulf %186, %189 : vector<8x128xf32>
    %191 = arith.addf %188, %190 : vector<8x128xf32>
    %192 = math.tanh %191 : vector<8x128xf32>
    %193 = arith.subf %174, %192 : vector<8x128xf32>
    %194 = arith.mulf %187, %193 : vector<8x128xf32>
    %195 = arith.addf %192, %194 : vector<8x128xf32>
    %c56_65 = arith.constant 56 : index
    %c0_66 = arith.constant 0 : index
    %196 = vector.load %arg8[%c56_65, %c0_66] : memref<128x128xf32, #tpu.memory_space<vmem>>, vector<8x128xf32>
    tpu.vector_store %arg8[%c56_65, %c0_66], %195 {strides = array<i32>} : memref<128x128xf32, #tpu.memory_space<vmem>>, vector<8x128xf32>,
    %c0_67 = arith.constant 0 : index
    %c0_68 = arith.constant 0 : index
    %197 = vector.load %arg3[%c0_67, %c0_68] : memref<128x512xf32, #tpu.memory_space<vmem>>, vector<128x512xf32>
    %cst_69 = arith.constant dense<0.000000e+00> : vector<8x512xf32>
    %198 = tpu.matmul %195, %197, %cst_69 {dimension_numbers = #tpu.dot_dimension_numbers<[1], [0], [0], [1], [0, 0, 1, 1], [], []>} : vector<8x128xf32>, vector<128x512xf32>, vector<8x512xf32> -> vector<8x512xf32>
    %c72 = arith.constant 72 : index
    %c0_70 = arith.constant 0 : index
    %199 = vector.load %arg7[%c72, %c0_70] : memref<128x512xf32, #tpu.memory_space<vmem>>, vector<8x512xf32>
    %200 = arith.addf %198, %199 : vector<8x512xf32>
    %201 = vector.extract_strided_slice %200 {offsets = [0, 0], sizes = [8, 256], strides = [1, 1]} : vector<8x512xf32> to vector<8x256xf32>
    %202 = arith.negf %201 : vector<8x256xf32>
    %203 = math.exp %202 : vector<8x256xf32>
    %cst_71 = arith.constant 1.000000e+00 : f32
    %204 = vector.broadcast %cst_71 : f32 to vector<8x256xf32>
    %205 = arith.addf %204, %203 : vector<8x256xf32>
    %206 = arith.divf %204, %205 : vector<8x256xf32>
    %207 = vector.extract_strided_slice %206 {offsets = [0, 0], sizes = [8, 128], strides = [1, 1]} : vector<8x256xf32> to vector<8x128xf32>
    %208 = vector.extract_strided_slice %206 {offsets = [0, 128], sizes = [8, 128], strides = [1, 1]} : vector<8x256xf32> to vector<8x128xf32>
    %209 = vector.extract_strided_slice %200 {offsets = [0, 384], sizes = [8, 128], strides = [1, 1]} : vector<8x512xf32> to vector<8x128xf32>
    %210 = vector.extract_strided_slice %200 {offsets = [0, 256], sizes = [8, 128], strides = [1, 1]} : vector<8x512xf32> to vector<8x128xf32>
    %211 = arith.mulf %207, %210 : vector<8x128xf32>
    %212 = arith.addf %209, %211 : vector<8x128xf32>
    %213 = math.tanh %212 : vector<8x128xf32>
    %214 = arith.subf %195, %213 : vector<8x128xf32>
    %215 = arith.mulf %208, %214 : vector<8x128xf32>
    %216 = arith.addf %213, %215 : vector<8x128xf32>
    %c64_72 = arith.constant 64 : index
    %c0_73 = arith.constant 0 : index
    %217 = vector.load %arg8[%c64_72, %c0_73] : memref<128x128xf32, #tpu.memory_space<vmem>>, vector<8x128xf32>
    tpu.vector_store %arg8[%c64_72, %c0_73], %216 {strides = array<i32>} : memref<128x128xf32, #tpu.memory_space<vmem>>, vector<8x128xf32>,
    %c0_74 = arith.constant 0 : index
    %c0_75 = arith.constant 0 : index
    %218 = vector.load %arg3[%c0_74, %c0_75] : memref<128x512xf32, #tpu.memory_space<vmem>>, vector<128x512xf32>
    %cst_76 = arith.constant dense<0.000000e+00> : vector<8x512xf32>
    %219 = tpu.matmul %216, %218, %cst_76 {dimension_numbers = #tpu.dot_dimension_numbers<[1], [0], [0], [1], [0, 0, 1, 1], [], []>} : vector<8x128xf32>, vector<128x512xf32>, vector<8x512xf32> -> vector<8x512xf32>
    %c80 = arith.constant 80 : index
    %c0_77 = arith.constant 0 : index
    %220 = vector.load %arg7[%c80, %c0_77] : memref<128x512xf32, #tpu.memory_space<vmem>>, vector<8x512xf32>
    %221 = arith.addf %219, %220 : vector<8x512xf32>
    %222 = vector.extract_strided_slice %221 {offsets = [0, 0], sizes = [8, 256], strides = [1, 1]} : vector<8x512xf32> to vector<8x256xf32>
    %223 = arith.negf %222 : vector<8x256xf32>
    %224 = math.exp %223 : vector<8x256xf32>
    %cst_78 = arith.constant 1.000000e+00 : f32
    %225 = vector.broadcast %cst_78 : f32 to vector<8x256xf32>
    %226 = arith.addf %225, %224 : vector<8x256xf32>
    %227 = arith.divf %225, %226 : vector<8x256xf32>
    %228 = vector.extract_strided_slice %227 {offsets = [0, 0], sizes = [8, 128], strides = [1, 1]} : vector<8x256xf32> to vector<8x128xf32>
    %229 = vector.extract_strided_slice %227 {offsets = [0, 128], sizes = [8, 128], strides = [1, 1]} : vector<8x256xf32> to vector<8x128xf32>
    %230 = vector.extract_strided_slice %221 {offsets = [0, 384], sizes = [8, 128], strides = [1, 1]} : vector<8x512xf32> to vector<8x128xf32>
    %231 = vector.extract_strided_slice %221 {offsets = [0, 256], sizes = [8, 128], strides = [1, 1]} : vector<8x512xf32> to vector<8x128xf32>
    %232 = arith.mulf %228, %231 : vector<8x128xf32>
    %233 = arith.addf %230, %232 : vector<8x128xf32>
    %234 = math.tanh %233 : vector<8x128xf32>
    %235 = arith.subf %216, %234 : vector<8x128xf32>
    %236 = arith.mulf %229, %235 : vector<8x128xf32>
    %237 = arith.addf %234, %236 : vector<8x128xf32>
    %c72_79 = arith.constant 72 : index
    %c0_80 = arith.constant 0 : index
    %238 = vector.load %arg8[%c72_79, %c0_80] : memref<128x128xf32, #tpu.memory_space<vmem>>, vector<8x128xf32>
    tpu.vector_store %arg8[%c72_79, %c0_80], %237 {strides = array<i32>} : memref<128x128xf32, #tpu.memory_space<vmem>>, vector<8x128xf32>,
    %c0_81 = arith.constant 0 : index
    %c0_82 = arith.constant 0 : index
    %239 = vector.load %arg3[%c0_81, %c0_82] : memref<128x512xf32, #tpu.memory_space<vmem>>, vector<128x512xf32>
    %cst_83 = arith.constant dense<0.000000e+00> : vector<8x512xf32>
    %240 = tpu.matmul %237, %239, %cst_83 {dimension_numbers = #tpu.dot_dimension_numbers<[1], [0], [0], [1], [0, 0, 1, 1], [], []>} : vector<8x128xf32>, vector<128x512xf32>, vector<8x512xf32> -> vector<8x512xf32>
    %c88 = arith.constant 88 : index
    %c0_84 = arith.constant 0 : index
    %241 = vector.load %arg7[%c88, %c0_84] : memref<128x512xf32, #tpu.memory_space<vmem>>, vector<8x512xf32>
    %242 = arith.addf %240, %241 : vector<8x512xf32>
    %243 = vector.extract_strided_slice %242 {offsets = [0, 0], sizes = [8, 256], strides = [1, 1]} : vector<8x512xf32> to vector<8x256xf32>
    %244 = arith.negf %243 : vector<8x256xf32>
    %245 = math.exp %244 : vector<8x256xf32>
    %cst_85 = arith.constant 1.000000e+00 : f32
    %246 = vector.broadcast %cst_85 : f32 to vector<8x256xf32>
    %247 = arith.addf %246, %245 : vector<8x256xf32>
    %248 = arith.divf %246, %247 : vector<8x256xf32>
    %249 = vector.extract_strided_slice %248 {offsets = [0, 0], sizes = [8, 128], strides = [1, 1]} : vector<8x256xf32> to vector<8x128xf32>
    %250 = vector.extract_strided_slice %248 {offsets = [0, 128], sizes = [8, 128], strides = [1, 1]} : vector<8x256xf32> to vector<8x128xf32>
    %251 = vector.extract_strided_slice %242 {offsets = [0, 384], sizes = [8, 128], strides = [1, 1]} : vector<8x512xf32> to vector<8x128xf32>
    %252 = vector.extract_strided_slice %242 {offsets = [0, 256], sizes = [8, 128], strides = [1, 1]} : vector<8x512xf32> to vector<8x128xf32>
    %253 = arith.mulf %249, %252 : vector<8x128xf32>
    %254 = arith.addf %251, %253 : vector<8x128xf32>
    %255 = math.tanh %254 : vector<8x128xf32>
    %256 = arith.subf %237, %255 : vector<8x128xf32>
    %257 = arith.mulf %250, %256 : vector<8x128xf32>
    %258 = arith.addf %255, %257 : vector<8x128xf32>
    %c80_86 = arith.constant 80 : index
    %c0_87 = arith.constant 0 : index
    %259 = vector.load %arg8[%c80_86, %c0_87] : memref<128x128xf32, #tpu.memory_space<vmem>>, vector<8x128xf32>
    tpu.vector_store %arg8[%c80_86, %c0_87], %258 {strides = array<i32>} : memref<128x128xf32, #tpu.memory_space<vmem>>, vector<8x128xf32>,
    %c0_88 = arith.constant 0 : index
    %c0_89 = arith.constant 0 : index
    %260 = vector.load %arg3[%c0_88, %c0_89] : memref<128x512xf32, #tpu.memory_space<vmem>>, vector<128x512xf32>
    %cst_90 = arith.constant dense<0.000000e+00> : vector<8x512xf32>
    %261 = tpu.matmul %258, %260, %cst_90 {dimension_numbers = #tpu.dot_dimension_numbers<[1], [0], [0], [1], [0, 0, 1, 1], [], []>} : vector<8x128xf32>, vector<128x512xf32>, vector<8x512xf32> -> vector<8x512xf32>
    %c96 = arith.constant 96 : index
    %c0_91 = arith.constant 0 : index
    %262 = vector.load %arg7[%c96, %c0_91] : memref<128x512xf32, #tpu.memory_space<vmem>>, vector<8x512xf32>
    %263 = arith.addf %261, %262 : vector<8x512xf32>
    %264 = vector.extract_strided_slice %263 {offsets = [0, 0], sizes = [8, 256], strides = [1, 1]} : vector<8x512xf32> to vector<8x256xf32>
    %265 = arith.negf %264 : vector<8x256xf32>
    %266 = math.exp %265 : vector<8x256xf32>
    %cst_92 = arith.constant 1.000000e+00 : f32
    %267 = vector.broadcast %cst_92 : f32 to vector<8x256xf32>
    %268 = arith.addf %267, %266 : vector<8x256xf32>
    %269 = arith.divf %267, %268 : vector<8x256xf32>
    %270 = vector.extract_strided_slice %269 {offsets = [0, 0], sizes = [8, 128], strides = [1, 1]} : vector<8x256xf32> to vector<8x128xf32>
    %271 = vector.extract_strided_slice %269 {offsets = [0, 128], sizes = [8, 128], strides = [1, 1]} : vector<8x256xf32> to vector<8x128xf32>
    %272 = vector.extract_strided_slice %263 {offsets = [0, 384], sizes = [8, 128], strides = [1, 1]} : vector<8x512xf32> to vector<8x128xf32>
    %273 = vector.extract_strided_slice %263 {offsets = [0, 256], sizes = [8, 128], strides = [1, 1]} : vector<8x512xf32> to vector<8x128xf32>
    %274 = arith.mulf %270, %273 : vector<8x128xf32>
    %275 = arith.addf %272, %274 : vector<8x128xf32>
    %276 = math.tanh %275 : vector<8x128xf32>
    %277 = arith.subf %258, %276 : vector<8x128xf32>
    %278 = arith.mulf %271, %277 : vector<8x128xf32>
    %279 = arith.addf %276, %278 : vector<8x128xf32>
    %c88_93 = arith.constant 88 : index
    %c0_94 = arith.constant 0 : index
    %280 = vector.load %arg8[%c88_93, %c0_94] : memref<128x128xf32, #tpu.memory_space<vmem>>, vector<8x128xf32>
    tpu.vector_store %arg8[%c88_93, %c0_94], %279 {strides = array<i32>} : memref<128x128xf32, #tpu.memory_space<vmem>>, vector<8x128xf32>,
    %c0_95 = arith.constant 0 : index
    %c0_96 = arith.constant 0 : index
    %281 = vector.load %arg3[%c0_95, %c0_96] : memref<128x512xf32, #tpu.memory_space<vmem>>, vector<128x512xf32>
    %cst_97 = arith.constant dense<0.000000e+00> : vector<8x512xf32>
    %282 = tpu.matmul %279, %281, %cst_97 {dimension_numbers = #tpu.dot_dimension_numbers<[1], [0], [0], [1], [0, 0, 1, 1], [], []>} : vector<8x128xf32>, vector<128x512xf32>, vector<8x512xf32> -> vector<8x512xf32>
    %c104 = arith.constant 104 : index
    %c0_98 = arith.constant 0 : index
    %283 = vector.load %arg7[%c104, %c0_98] : memref<128x512xf32, #tpu.memory_space<vmem>>, vector<8x512xf32>
    %284 = arith.addf %282, %283 : vector<8x512xf32>
    %285 = vector.extract_strided_slice %284 {offsets = [0, 0], sizes = [8, 256], strides = [1, 1]} : vector<8x512xf32> to vector<8x256xf32>
    %286 = arith.negf %285 : vector<8x256xf32>
    %287 = math.exp %286 : vector<8x256xf32>
    %cst_99 = arith.constant 1.000000e+00 : f32
    %288 = vector.broadcast %cst_99 : f32 to vector<8x256xf32>
    %289 = arith.addf %288, %287 : vector<8x256xf32>
    %290 = arith.divf %288, %289 : vector<8x256xf32>
    %291 = vector.extract_strided_slice %290 {offsets = [0, 0], sizes = [8, 128], strides = [1, 1]} : vector<8x256xf32> to vector<8x128xf32>
    %292 = vector.extract_strided_slice %290 {offsets = [0, 128], sizes = [8, 128], strides = [1, 1]} : vector<8x256xf32> to vector<8x128xf32>
    %293 = vector.extract_strided_slice %284 {offsets = [0, 384], sizes = [8, 128], strides = [1, 1]} : vector<8x512xf32> to vector<8x128xf32>
    %294 = vector.extract_strided_slice %284 {offsets = [0, 256], sizes = [8, 128], strides = [1, 1]} : vector<8x512xf32> to vector<8x128xf32>
    %295 = arith.mulf %291, %294 : vector<8x128xf32>
    %296 = arith.addf %293, %295 : vector<8x128xf32>
    %297 = math.tanh %296 : vector<8x128xf32>
    %298 = arith.subf %279, %297 : vector<8x128xf32>
    %299 = arith.mulf %292, %298 : vector<8x128xf32>
    %300 = arith.addf %297, %299 : vector<8x128xf32>
    %c96_100 = arith.constant 96 : index
    %c0_101 = arith.constant 0 : index
    %301 = vector.load %arg8[%c96_100, %c0_101] : memref<128x128xf32, #tpu.memory_space<vmem>>, vector<8x128xf32>
    tpu.vector_store %arg8[%c96_100, %c0_101], %300 {strides = array<i32>} : memref<128x128xf32, #tpu.memory_space<vmem>>, vector<8x128xf32>,
    %c0_102 = arith.constant 0 : index
    %c0_103 = arith.constant 0 : index
    %302 = vector.load %arg3[%c0_102, %c0_103] : memref<128x512xf32, #tpu.memory_space<vmem>>, vector<128x512xf32>
    %cst_104 = arith.constant dense<0.000000e+00> : vector<8x512xf32>
    %303 = tpu.matmul %300, %302, %cst_104 {dimension_numbers = #tpu.dot_dimension_numbers<[1], [0], [0], [1], [0, 0, 1, 1], [], []>} : vector<8x128xf32>, vector<128x512xf32>, vector<8x512xf32> -> vector<8x512xf32>
    %c112 = arith.constant 112 : index
    %c0_105 = arith.constant 0 : index
    %304 = vector.load %arg7[%c112, %c0_105] : memref<128x512xf32, #tpu.memory_space<vmem>>, vector<8x512xf32>
    %305 = arith.addf %303, %304 : vector<8x512xf32>
    %306 = vector.extract_strided_slice %305 {offsets = [0, 0], sizes = [8, 256], strides = [1, 1]} : vector<8x512xf32> to vector<8x256xf32>
    %307 = arith.negf %306 : vector<8x256xf32>
    %308 = math.exp %307 : vector<8x256xf32>
    %cst_106 = arith.constant 1.000000e+00 : f32
    %309 = vector.broadcast %cst_106 : f32 to vector<8x256xf32>
    %310 = arith.addf %309, %308 : vector<8x256xf32>
    %311 = arith.divf %309, %310 : vector<8x256xf32>
    %312 = vector.extract_strided_slice %311 {offsets = [0, 0], sizes = [8, 128], strides = [1, 1]} : vector<8x256xf32> to vector<8x128xf32>
    %313 = vector.extract_strided_slice %311 {offsets = [0, 128], sizes = [8, 128], strides = [1, 1]} : vector<8x256xf32> to vector<8x128xf32>
    %314 = vector.extract_strided_slice %305 {offsets = [0, 384], sizes = [8, 128], strides = [1, 1]} : vector<8x512xf32> to vector<8x128xf32>
    %315 = vector.extract_strided_slice %305 {offsets = [0, 256], sizes = [8, 128], strides = [1, 1]} : vector<8x512xf32> to vector<8x128xf32>
    %316 = arith.mulf %312, %315 : vector<8x128xf32>
    %317 = arith.addf %314, %316 : vector<8x128xf32>
    %318 = math.tanh %317 : vector<8x128xf32>
    %319 = arith.subf %300, %318 : vector<8x128xf32>
    %320 = arith.mulf %313, %319 : vector<8x128xf32>
    %321 = arith.addf %318, %320 : vector<8x128xf32>
    %c104_107 = arith.constant 104 : index
    %c0_108 = arith.constant 0 : index
    %322 = vector.load %arg8[%c104_107, %c0_108] : memref<128x128xf32, #tpu.memory_space<vmem>>, vector<8x128xf32>
    tpu.vector_store %arg8[%c104_107, %c0_108], %321 {strides = array<i32>} : memref<128x128xf32, #tpu.memory_space<vmem>>, vector<8x128xf32>,
    %c0_109 = arith.constant 0 : index
    %c0_110 = arith.constant 0 : index
    %323 = vector.load %arg3[%c0_109, %c0_110] : memref<128x512xf32, #tpu.memory_space<vmem>>, vector<128x512xf32>
    %cst_111 = arith.constant dense<0.000000e+00> : vector<8x512xf32>
    %324 = tpu.matmul %321, %323, %cst_111 {dimension_numbers = #tpu.dot_dimension_numbers<[1], [0], [0], [1], [0, 0, 1, 1], [], []>} : vector<8x128xf32>, vector<128x512xf32>, vector<8x512xf32> -> vector<8x512xf32>
    %c120 = arith.constant 120 : index
    %c0_112 = arith.constant 0 : index
    %325 = vector.load %arg7[%c120, %c0_112] : memref<128x512xf32, #tpu.memory_space<vmem>>, vector<8x512xf32>
    %326 = arith.addf %324, %325 : vector<8x512xf32>
    %327 = vector.extract_strided_slice %326 {offsets = [0, 0], sizes = [8, 256], strides = [1, 1]} : vector<8x512xf32> to vector<8x256xf32>
    %328 = arith.negf %327 : vector<8x256xf32>
    %329 = math.exp %328 : vector<8x256xf32>
    %cst_113 = arith.constant 1.000000e+00 : f32
    %330 = vector.broadcast %cst_113 : f32 to vector<8x256xf32>
    %331 = arith.addf %330, %329 : vector<8x256xf32>
    %332 = arith.divf %330, %331 : vector<8x256xf32>
    %333 = vector.extract_strided_slice %332 {offsets = [0, 0], sizes = [8, 128], strides = [1, 1]} : vector<8x256xf32> to vector<8x128xf32>
    %334 = vector.extract_strided_slice %332 {offsets = [0, 128], sizes = [8, 128], strides = [1, 1]} : vector<8x256xf32> to vector<8x128xf32>
    %335 = vector.extract_strided_slice %326 {offsets = [0, 384], sizes = [8, 128], strides = [1, 1]} : vector<8x512xf32> to vector<8x128xf32>
    %336 = vector.extract_strided_slice %326 {offsets = [0, 256], sizes = [8, 128], strides = [1, 1]} : vector<8x512xf32> to vector<8x128xf32>
    %337 = arith.mulf %333, %336 : vector<8x128xf32>
    %338 = arith.addf %335, %337 : vector<8x128xf32>
    %339 = math.tanh %338 : vector<8x128xf32>
    %340 = arith.subf %321, %339 : vector<8x128xf32>
    %341 = arith.mulf %334, %340 : vector<8x128xf32>
    %342 = arith.addf %339, %341 : vector<8x128xf32>
    %c112_114 = arith.constant 112 : index
    %c0_115 = arith.constant 0 : index
    %343 = vector.load %arg8[%c112_114, %c0_115] : memref<128x128xf32, #tpu.memory_space<vmem>>, vector<8x128xf32>
    tpu.vector_store %arg8[%c112_114, %c0_115], %342 {strides = array<i32>} : memref<128x128xf32, #tpu.memory_space<vmem>>, vector<8x128xf32>,
    %c0_116 = arith.constant 0 : index
    %c0_117 = arith.constant 0 : index
    %344 = vector.load %arg3[%c0_116, %c0_117] : memref<128x512xf32, #tpu.memory_space<vmem>>, vector<128x512xf32>
    %cst_118 = arith.constant dense<0.000000e+00> : vector<8x512xf32>
    %345 = tpu.matmul %342, %344, %cst_118 {dimension_numbers = #tpu.dot_dimension_numbers<[1], [0], [0], [1], [0, 0, 1, 1], [], []>} : vector<8x128xf32>, vector<128x512xf32>, vector<8x512xf32> -> vector<8x512xf32>
    %c120_119 = arith.constant 120 : index
    %c0_120 = arith.constant 0 : index
    %346 = vector.load %arg7[%c120_119, %c0_120] : memref<128x512xf32, #tpu.memory_space<vmem>>, vector<8x512xf32>
    %347 = arith.addf %345, %346 : vector<8x512xf32>
    %348 = vector.extract_strided_slice %347 {offsets = [0, 0], sizes = [8, 256], strides = [1, 1]} : vector<8x512xf32> to vector<8x256xf32>
    %349 = arith.negf %348 : vector<8x256xf32>
    %350 = math.exp %349 : vector<8x256xf32>
    %cst_121 = arith.constant 1.000000e+00 : f32
    %351 = vector.broadcast %cst_121 : f32 to vector<8x256xf32>
    %352 = arith.addf %351, %350 : vector<8x256xf32>
    %353 = arith.divf %351, %352 : vector<8x256xf32>
    %354 = vector.extract_strided_slice %353 {offsets = [0, 0], sizes = [8, 128], strides = [1, 1]} : vector<8x256xf32> to vector<8x128xf32>
    %355 = vector.extract_strided_slice %353 {offsets = [0, 128], sizes = [8, 128], strides = [1, 1]} : vector<8x256xf32> to vector<8x128xf32>
    %356 = vector.extract_strided_slice %347 {offsets = [0, 384], sizes = [8, 128], strides = [1, 1]} : vector<8x512xf32> to vector<8x128xf32>
    %357 = vector.extract_strided_slice %347 {offsets = [0, 256], sizes = [8, 128], strides = [1, 1]} : vector<8x512xf32> to vector<8x128xf32>
    %358 = arith.mulf %354, %357 : vector<8x128xf32>
    %359 = arith.addf %356, %358 : vector<8x128xf32>
    %360 = math.tanh %359 : vector<8x128xf32>
    %361 = arith.subf %342, %360 : vector<8x128xf32>
    %362 = arith.mulf %355, %361 : vector<8x128xf32>
    %363 = arith.addf %360, %362 : vector<8x128xf32>
    %364 = arith.select %9, %342, %363 : vector<8x128xi1>, vector<8x128xf32>
    %c120_122 = arith.constant 120 : index
    %c0_123 = arith.constant 0 : index
    %365 = vector.load %arg8[%c120_122, %c0_123] : memref<128x128xf32, #tpu.memory_space<vmem>>, vector<8x128xf32>
    tpu.vector_store %arg8[%c120_122, %c0_123], %364 {strides = array<i32>} : memref<128x128xf32, #tpu.memory_space<vmem>>, vector<8x128xf32>,
    %c0_124 = arith.constant 0 : index
    %c0_125 = arith.constant 0 : index
    %366 = vector.load %arg8[%c0_124, %c0_125] : memref<128x128xf32, #tpu.memory_space<vmem>>, vector<128x128xf32>
    %c0_126 = arith.constant 0 : index
    %c0_127 = arith.constant 0 : index
    %367 = vector.load %arg4[%c0_126, %c0_127] : memref<128x16xf32, #tpu.memory_space<vmem>>, vector<128x16xf32>
    %cst_128 = arith.constant dense<0.000000e+00> : vector<128x16xf32>
    %368 = tpu.matmul %366, %367, %cst_128 {dimension_numbers = #tpu.dot_dimension_numbers<[1], [0], [0], [1], [0, 0, 1, 1], [], []>} : vector<128x128xf32>, vector<128x16xf32>, vector<128x16xf32> -> vector<128x16xf32>
    %c0_129 = arith.constant 0 : index
    %c0_130 = arith.constant 0 : index
    %369 = vector.load %arg5[%c0_129, %c0_130] : memref<1x16xf32, #tpu.memory_space<vmem>>, vector<1x16xf32>
    %370 = vector.broadcast %369 : vector<1x16xf32> to vector<128x16xf32>
    %371 = arith.addf %368, %370 : vector<128x16xf32>
    %372 = vector.extract_strided_slice %371 {offsets = [0, 0], sizes = [128, 2], strides = [1, 1]} : vector<128x16xf32> to vector<128x2xf32>
    %373 = vector.extract_strided_slice %371 {offsets = [0, 2], sizes = [128, 2], strides = [1, 1]} : vector<128x16xf32> to vector<128x2xf32>
    %374 = vector.extract_strided_slice %371 {offsets = [0, 4], sizes = [128, 2], strides = [1, 1]} : vector<128x16xf32> to vector<128x2xf32>
    %375 = vector.extract_strided_slice %371 {offsets = [0, 6], sizes = [128, 2], strides = [1, 1]} : vector<128x16xf32> to vector<128x2xf32>
    %376 = vector.extract_strided_slice %371 {offsets = [0, 8], sizes = [128, 2], strides = [1, 1]} : vector<128x16xf32> to vector<128x2xf32>
    %377 = vector.extract_strided_slice %371 {offsets = [0, 10], sizes = [128, 1], strides = [1, 1]} : vector<128x16xf32> to vector<128x1xf32>
    %378 = vector.extract_strided_slice %372 {offsets = [32, 0], sizes = [96, 2], strides = [1, 1]} : vector<128x2xf32> to vector<96x2xf32>
    %379 = vector.extract_strided_slice %373 {offsets = [0, 0], sizes = [96, 2], strides = [1, 1]} : vector<128x2xf32> to vector<96x2xf32>
    %380 = arith.addf %378, %379 : vector<96x2xf32>
    %381 = vector.extract_strided_slice %373 {offsets = [8, 0], sizes = [96, 2], strides = [1, 1]} : vector<128x2xf32> to vector<96x2xf32>
    %382 = arith.addf %378, %381 : vector<96x2xf32>
    %383 = vector.extract_strided_slice %373 {offsets = [16, 0], sizes = [96, 2], strides = [1, 1]} : vector<128x2xf32> to vector<96x2xf32>
    %384 = arith.addf %378, %383 : vector<96x2xf32>
    %385 = vector.extract_strided_slice %373 {offsets = [24, 0], sizes = [96, 2], strides = [1, 1]} : vector<128x2xf32> to vector<96x2xf32>
    %386 = arith.addf %378, %385 : vector<96x2xf32>
    %387 = arith.maximumf %380, %382 : vector<96x2xf32>
    %388 = arith.maximumf %387, %384 : vector<96x2xf32>
    %389 = arith.maximumf %388, %386 : vector<96x2xf32>
    %390 = arith.subf %380, %389 : vector<96x2xf32>
    %391 = math.exp %390 : vector<96x2xf32>
    %392 = arith.subf %382, %389 : vector<96x2xf32>
    %393 = math.exp %392 : vector<96x2xf32>
    %394 = arith.subf %384, %389 : vector<96x2xf32>
    %395 = math.exp %394 : vector<96x2xf32>
    %396 = arith.subf %386, %389 : vector<96x2xf32>
    %397 = math.exp %396 : vector<96x2xf32>
    %398 = arith.addf %391, %393 : vector<96x2xf32>
    %399 = arith.addf %398, %395 : vector<96x2xf32>
    %400 = arith.addf %399, %397 : vector<96x2xf32>
    %401 = vector.extract_strided_slice %374 {offsets = [0, 0], sizes = [96, 2], strides = [1, 1]} : vector<128x2xf32> to vector<96x2xf32>
    %402 = arith.mulf %391, %401 : vector<96x2xf32>
    %403 = vector.extract_strided_slice %374 {offsets = [8, 0], sizes = [96, 2], strides = [1, 1]} : vector<128x2xf32> to vector<96x2xf32>
    %404 = arith.mulf %393, %403 : vector<96x2xf32>
    %405 = arith.addf %402, %404 : vector<96x2xf32>
    %406 = vector.extract_strided_slice %374 {offsets = [16, 0], sizes = [96, 2], strides = [1, 1]} : vector<128x2xf32> to vector<96x2xf32>
    %407 = arith.mulf %395, %406 : vector<96x2xf32>
    %408 = arith.addf %405, %407 : vector<96x2xf32>
    %409 = vector.extract_strided_slice %374 {offsets = [24, 0], sizes = [96, 2], strides = [1, 1]} : vector<128x2xf32> to vector<96x2xf32>
    %410 = arith.mulf %397, %409 : vector<96x2xf32>
    %411 = arith.addf %408, %410 : vector<96x2xf32>
    %412 = tpu.reciprocal %400 : vector<96x2xf32> -> vector<96x2xf32>
    %413 = arith.mulf %411, %412 : vector<96x2xf32>
    %414 = vector.extract_strided_slice %375 {offsets = [32, 0], sizes = [96, 2], strides = [1, 1]} : vector<128x2xf32> to vector<96x2xf32>
    %415 = arith.addf %413, %414 : vector<96x2xf32>
    %416 = vector.extract_strided_slice %376 {offsets = [0, 0], sizes = [8, 2], strides = [1, 1]} : vector<128x2xf32> to vector<8x2xf32>
    %417 = tpu.concatenate %416, %416, %416, %416 in 0 : vector<8x2xf32>, vector<8x2xf32>, vector<8x2xf32>, vector<8x2xf32> -> vector<32x2xf32>
    %418 = tpu.concatenate %417, %415 in 0 : vector<32x2xf32>, vector<96x2xf32> -> vector<128x2xf32>
    %419 = vector.extract_strided_slice %418 {offsets = [0, 0], sizes = [128, 1], strides = [1, 1]} : vector<128x2xf32> to vector<128x1xf32>
    %420 = vector.extract_strided_slice %418 {offsets = [0, 1], sizes = [128, 1], strides = [1, 1]} : vector<128x2xf32> to vector<128x1xf32>
    %421 = vector.extract_strided_slice %420 {offsets = [16, 0], sizes = [112, 1], strides = [1, 1]} : vector<128x1xf32> to vector<112x1xf32>
    %422 = vector.extract_strided_slice %420 {offsets = [120, 0], sizes = [8, 1], strides = [1, 1]} : vector<128x1xf32> to vector<8x1xf32>
    %423 = tpu.concatenate %421, %422, %422 in 0 : vector<112x1xf32>, vector<8x1xf32>, vector<8x1xf32> -> vector<128x1xf32>
    %424 = arith.addf %419, %423 : vector<128x1xf32>
    %425 = arith.addf %424, %377 : vector<128x1xf32>
    %426 = arith.negf %425 : vector<128x1xf32>
    %427 = math.exp %426 : vector<128x1xf32>
    %cst_131 = arith.constant 1.000000e+00 : f32
    %428 = vector.broadcast %cst_131 : f32 to vector<128x1xf32>
    %429 = arith.addf %428, %427 : vector<128x1xf32>
    %430 = arith.divf %428, %429 : vector<128x1xf32>
    %c0_132 = arith.constant 0 : index
    %c0_133 = arith.constant 0 : index
    %431 = vector.load %arg6[%c0_132, %c0_133] : memref<128x1xf32, #tpu.memory_space<vmem>>, vector<128x1xf32>
    tpu.vector_store %arg6[%c0_132, %c0_133], %430 {strides = array<i32>} : memref<128x1xf32, #tpu.memory_space<vmem>>, vector<128x1xf32>,
    return
  }
}

</mosaic_0001>

<llo_original>
// kernel: tpu_custom_call.1
$region0: #{tpu_custom_call.1}
  #allocation0 [shape = 'u32[]', space=smem, size = 0x4, offset = 0x4, fixed_abs, tag = 'smem constant byte address 0x4 - core index']
  #allocation1 [shape = 'u32[72,128]{1,0:T(1,128)}', space=vmem, size = 0x9000, scoped, tag = 'internal scratch']
  #allocation2 [shape = 'f32[128,512]{1,0:T(8,128)}', space=vmem, size = 0x40000, scoped, tag = 'scratch operand']
  #allocation3 [shape = 'f32[128,128]{1,0:T(8,128)}', space=vmem, size = 0x10000, scoped, tag = 'scratch operand']
  %s0 = inlined_call_operand.vmem [shape: f32[128,2], index: 0, kind: input, shape index: {}]
  %s1 = inlined_call_operand.vmem [shape: f32[2,512], index: 1, kind: input, shape index: {}]
  %s2 = inlined_call_operand.vmem [shape: f32[1,512], index: 2, kind: input, shape index: {}]
  %s3 = inlined_call_operand.hbm [shape: f32[128,512], index: 3, kind: input, shape index: {}]
  %s4 = inlined_call_operand.vmem [shape: f32[128,16], index: 4, kind: input, shape index: {}]
  %s5 = inlined_call_operand.vmem [shape: f32[1,16], index: 5, kind: input, shape index: {}]
  %s6 = inlined_call_operand.vmem [shape: f32[128,1], index: 6, kind: output, shape index: {}]
  %s7 = sld [smem:[#allocation0]]
  $region38: #{tpu_custom_call.1} parent=0
    _
  %s9 = ssub.s32 1, %s7
  %s10 = scalar_select 0, %s9, %s7
  $region1: #{tpu_custom_call.1} parent=0
    #allocation4 [shape = 'u8[262144]{0}', space=vmem, size = 0x40000, scoped, tag = 'input window, operand 3, single buffered']
    #allocation5 [shape = 's32[1]{0}', space=sflag, size = 0x4, scoped, tag = 'scoped memory for tpu_custom_call.1']
    %11 = vsyncpa [#allocation5], 0
    // Predicated region
    $region2: #{tpu_custom_call.1} parent=1 // pred_check
      _
    $region3: #{tpu_custom_call.1} parent=1 // pred_check_branch
      %13 = sbr.rel (0) target = $region5
    $region4: #{tpu_custom_call.1} parent=1 // pred_region
      _
    $region5: #{tpu_custom_call.1} parent=1 // pred_fallthru
      _
    // Predicated region
    $region6: #{tpu_custom_call.1} parent=1 // pred_check
      _
    $region7: #{tpu_custom_call.1} parent=1 // pred_check_branch
      %15 = sbr.rel (0) target = $region9
    $region8: #{tpu_custom_call.1} parent=1 // pred_region
      _
    $region9: #{tpu_custom_call.1} parent=1 // pred_fallthru
      _
    // Predicated region
    $region10: #{tpu_custom_call.1} parent=1 // pred_check
      _
    $region11: #{tpu_custom_call.1} parent=1 // pred_check_branch
      %17 = sbr.rel (0) target = $region13
    $region12: #{tpu_custom_call.1} parent=1 // pred_region
      _
    $region13: #{tpu_custom_call.1} parent=1 // pred_fallthru
      _
    // Predicated region
    $region14: #{tpu_custom_call.1} parent=1 // pred_check
      _
    $region15: #{tpu_custom_call.1} parent=1 // pred_check_branch
      %19 = sbr.rel (0) target = $region17
    $region16: #{tpu_custom_call.1} parent=1 // pred_region
      %21 = vsyncadd [#allocation5], 0
      %s22 = sshll.u32 %s3, 4
      %s23 = int_to_ptr.hbm [resolvable:$true] %s22
      %s24 = sshll.u32 [#allocation4], 4
      %s25 = int_to_ptr.vmem [resolvable:$true] %s24
      %30 = dma.hbm_to_vmem [thread:$0]  %s23, 8192, %s25, [#allocation5], 512, 512, 32
    $region17: #{tpu_custom_call.1} parent=1 // pred_fallthru
      _
    // Predicated region
    $region18: #{tpu_custom_call.1} parent=1 // pred_check
      _
    $region19: #{tpu_custom_call.1} parent=1 // pred_check_branch
      %32 = sbr.rel (0) target = $region21
    $region20: #{tpu_custom_call.1} parent=1 // pred_region
      _
    $region21: #{tpu_custom_call.1} parent=1 // pred_fallthru
      _
    // Predicated region
    $region22: #{tpu_custom_call.1} parent=1 // pred_check
      _
    $region23: #{tpu_custom_call.1} parent=1 // pred_check_branch
      %34 = sbr.rel (0) target = $region25
    $region24: #{tpu_custom_call.1} parent=1 // pred_region
      _
    $region25: #{tpu_custom_call.1} parent=1 // pred_fallthru
      _
    // Predicated region
    $region26: #{tpu_custom_call.1} parent=1 // pred_check
      _
    $region27: #{tpu_custom_call.1} parent=1 // pred_check_branch
      %36 = sbr.rel (0) target = $region29
    $region28: #{tpu_custom_call.1} parent=1 // pred_region
      %38 = dma.done [#allocation5], 8192
    $region29: #{tpu_custom_call.1} parent=1 // pred_fallthru
      _
    %v39 = vld [vmem:[%s0] sm:$0xff]
    %v40 = vld [vmem:[%s0 + $0x8] sm:$0xff]
    %v41 = vld [vmem:[%s0 + $0x10] sm:$0xff]
    %v42 = vld [vmem:[%s0 + $0x18] sm:$0xff]
    %v43 = vld [vmem:[%s0 + $0x20] sm:$0xff]
    %v44 = vld [vmem:[%s0 + $0x28] sm:$0xff]
    %v45 = vld [vmem:[%s0 + $0x30] sm:$0xff]
    %v46 = vld [vmem:[%s0 + $0x38] sm:$0xff]
    %v47 = vld [vmem:[%s0 + $0x40] sm:$0xff]
    %v48 = vld [vmem:[%s0 + $0x48] sm:$0xff]
    %v49 = vld [vmem:[%s0 + $0x50] sm:$0xff]
    %v50 = vld [vmem:[%s0 + $0x58] sm:$0xff]
    %v51 = vld [vmem:[%s0 + $0x60] sm:$0xff]
    %v52 = vld [vmem:[%s0 + $0x68] sm:$0xff]
    %v53 = vld [vmem:[%s0 + $0x70] sm:$0xff]
    %v54 = vld [vmem:[%s0 + $0x78] sm:$0xff]
    %v55 = vld [vmem:[%s1] sm:$0xff]
    %v56 = vld [vmem:[%s2] sm:$0xf]
    %v58 = vperm.slane %v56, 0
    %v59 = vperm.slane %v56, 1
    %v60 = vperm.slane %v56, 2
    %v61 = vperm.slane %v56, 3
    %67 = vst [vmem:[#allocation1] ss:$4 sm:$0xff] %v55
    %v68 = vld.sshfl [vmem:[#allocation1] sm:$0xff pattern:$0x73625140]
    %v69 = vld.sshfl [vmem:[#allocation1 + $0x8] sm:$0xff pattern:$0x73625140]
    %v70 = vld.sshfl [vmem:[#allocation1 + $0x10] sm:$0xff pattern:$0x73625140]
    %v71 = vld.sshfl [vmem:[#allocation1 + $0x18] sm:$0xff pattern:$0x73625140]
    %vm72 = vcmask 15360
    %v74 = vsel %vm72, %v39, 0
    %v77 = vsel %vm72, %v40, 0
    %v80 = vsel %vm72, %v41, 0
    %v83 = vsel %vm72, %v42, 0
    %v86 = vsel %vm72, %v43, 0
    %v89 = vsel %vm72, %v44, 0
    %v92 = vsel %vm72, %v45, 0
    %v95 = vsel %vm72, %v46, 0
    %v98 = vsel %vm72, %v47, 0
    %v101 = vsel %vm72, %v48, 0
    %v104 = vsel %vm72, %v49, 0
    %v107 = vsel %vm72, %v50, 0
    %v110 = vsel %vm72, %v51, 0
    %v113 = vsel %vm72, %v52, 0
    %v116 = vsel %vm72, %v53, 0
    %v119 = vsel %vm72, %v54, 0
    %vm121 = vcmask 1041408
    %v122 = vsel %vm121, %v68, 0
    %v124 = vsel %vm121, %v69, 0
    %v126 = vsel %vm121, %v70, 0
    %v128 = vsel %vm121, %v71, 0
    %130 = vmatpush.msra.mxu0 0.0
    %131 = vmatpush.msra.mxu0 0.0
    %132 = vmatpush.msra.mxu0 0.0
    %133 = vmatpush.msra.mxu0 0.0
    %134 = vmatpush.msra.mxu0 0.0
    %135 = vmatpush.msra.mxu0 0.0
    %136 = vmatpush.msra.mxu0 0.0
    %137 = vmatpush.msra.mxu0 0.0
    %138 = vmatpush.msra.mxu0 0.0
    %139 = vmatpush.msra.mxu0 0.0
    %140 = vmatpush.msra.mxu0 0.0
    %141 = vmatpush.msra.mxu0 0.0
    %142 = vmatpush.msra.mxu0 0.0
    %143 = vmatpush.msra.mxu0 0.0
    %144 = vmatpush.msra.mxu0 0.0
    %145 = vmatpush.msra.mxu0 %v122
    %146 = vmatmul.f32.gmra.mxu0 %v74
    %v147 = vpop.f32.mrf.mxu0
    %v148 = vadd.f32 %v58, %v147
    %149 = vmatmul.f32.gmra.mxu0 %v77
    %v150 = vpop.f32.mrf.mxu0
    %v151 = vadd.f32 %v58, %v150
    %152 = vmatmul.f32.gmra.mxu0 %v80
    %v153 = vpop.f32.mrf.mxu0
    %v154 = vadd.f32 %v58, %v153
    %155 = vmatmul.f32.gmra.mxu0 %v83
    %v156 = vpop.f32.mrf.mxu0
    %v157 = vadd.f32 %v58, %v156
    %158 = vmatmul.f32.gmra.mxu0 %v86
    %v159 = vpop.f32.mrf.mxu0
    %v160 = vadd.f32 %v58, %v159
    %161 = vmatmul.f32.gmra.mxu0 %v89
    %v162 = vpop.f32.mrf.mxu0
    %v163 = vadd.f32 %v58, %v162
    %164 = vmatmul.f32.gmra.mxu0 %v92
    %v165 = vpop.f32.mrf.mxu0
    %v166 = vadd.f32 %v58, %v165
    %167 = vmatmul.f32.gmra.mxu0 %v95
    %v168 = vpop.f32.mrf.mxu0
    %v169 = vadd.f32 %v58, %v168
    %170 = vmatmul.f32.gmra.mxu0 %v98
    %v171 = vpop.f32.mrf.mxu0
    %v172 = vadd.f32 %v58, %v171
    %173 = vmatmul.f32.gmra.mxu0 %v101
    %v174 = vpop.f32.mrf.mxu0
    %v175 = vadd.f32 %v58, %v174
    %176 = vmatmul.f32.gmra.mxu0 %v104
    %v177 = vpop.f32.mrf.mxu0
    %v178 = vadd.f32 %v58, %v177
    %179 = vmatmul.f32.gmra.mxu0 %v107
    %v180 = vpop.f32.mrf.mxu0
    %v181 = vadd.f32 %v58, %v180
    %182 = vmatmul.f32.gmra.mxu0 %v110
    %v183 = vpop.f32.mrf.mxu0
    %v184 = vadd.f32 %v58, %v183
    %185 = vmatmul.f32.gmra.mxu0 %v113
    %v186 = vpop.f32.mrf.mxu0
    %v187 = vadd.f32 %v58, %v186
    %188 = vmatmul.f32.gmra.mxu0 %v116
    %v189 = vpop.f32.mrf.mxu0
    %v190 = vadd.f32 %v58, %v189
    %191 = vmatmul.f32.gmra.mxu0 %v119
    %v192 = vpop.f32.mrf.mxu0
    %v193 = vadd.f32 %v58, %v192
    %194 = vdwg.mxu0
    %195 = vmatpush.msra.mxu0 0.0
    %196 = vmatpush.msra.mxu0 0.0
    %197 = vmatpush.msra.mxu0 0.0
    %198 = vmatpush.msra.mxu0 0.0
    %199 = vmatpush.msra.mxu0 0.0
    %200 = vmatpush.msra.mxu0 0.0
    %201 = vmatpush.msra.mxu0 0.0
    %202 = vmatpush.msra.mxu0 0.0
    %203 = vmatpush.msra.mxu0 0.0
    %204 = vmatpush.msra.mxu0 0.0
    %205 = vmatpush.msra.mxu0 0.0
    %206 = vmatpush.msra.mxu0 0.0
    %207 = vmatpush.msra.mxu0 0.0
    %208 = vmatpush.msra.mxu0 0.0
    %209 = vmatpush.msra.mxu0 0.0
    %210 = vmatpush.msra.mxu0 %v124
    %211 = vmatmul.f32.gmra.mxu0 %v74
    %v212 = vpop.f32.mrf.mxu0
    %v213 = vadd.f32 %v59, %v212
    %214 = vmatmul.f32.gmra.mxu0 %v77
    %v215 = vpop.f32.mrf.mxu0
    %v216 = vadd.f32 %v59, %v215
    %217 = vmatmul.f32.gmra.mxu0 %v80
    %v218 = vpop.f32.mrf.mxu0
    %v219 = vadd.f32 %v59, %v218
    %220 = vmatmul.f32.gmra.mxu0 %v83
    %v221 = vpop.f32.mrf.mxu0
    %v222 = vadd.f32 %v59, %v221
    %223 = vmatmul.f32.gmra.mxu0 %v86
    %v224 = vpop.f32.mrf.mxu0
    %v225 = vadd.f32 %v59, %v224
    %226 = vmatmul.f32.gmra.mxu0 %v89
    %v227 = vpop.f32.mrf.mxu0
    %v228 = vadd.f32 %v59, %v227
    %229 = vmatmul.f32.gmra.mxu0 %v92
    %v230 = vpop.f32.mrf.mxu0
    %v231 = vadd.f32 %v59, %v230
    %232 = vmatmul.f32.gmra.mxu0 %v95
    %v233 = vpop.f32.mrf.mxu0
    %v234 = vadd.f32 %v59, %v233
    %235 = vmatmul.f32.gmra.mxu0 %v98
    %v236 = vpop.f32.mrf.mxu0
    %v237 = vadd.f32 %v59, %v236
    %238 = vmatmul.f32.gmra.mxu0 %v101
    %v239 = vpop.f32.mrf.mxu0
    %v240 = vadd.f32 %v59, %v239
    %241 = vmatmul.f32.gmra.mxu0 %v104
    %v242 = vpop.f32.mrf.mxu0
    %v243 = vadd.f32 %v59, %v242
    %244 = vmatmul.f32.gmra.mxu0 %v107
    %v245 = vpop.f32.mrf.mxu0
    %v246 = vadd.f32 %v59, %v245
    %247 = vmatmul.f32.gmra.mxu0 %v110
    %v248 = vpop.f32.mrf.mxu0
    %v249 = vadd.f32 %v59, %v248
    %250 = vmatmul.f32.gmra.mxu0 %v113
    %v251 = vpop.f32.mrf.mxu0
    %v252 = vadd.f32 %v59, %v251
    %253 = vmatmul.f32.gmra.mxu0 %v116
    %v254 = vpop.f32.mrf.mxu0
    %v255 = vadd.f32 %v59, %v254
    %256 = vmatmul.f32.gmra.mxu0 %v119
    %v257 = vpop.f32.mrf.mxu0
    %v258 = vadd.f32 %v59, %v257
    %259 = vdwg.mxu0
    %260 = vmatpush.msra.mxu0 0.0
    %261 = vmatpush.msra.mxu0 0.0
    %262 = vmatpush.msra.mxu0 0.0
    %263 = vmatpush.msra.mxu0 0.0
    %264 = vmatpush.msra.mxu0 0.0
    %265 = vmatpush.msra.mxu0 0.0
    %266 = vmatpush.msra.mxu0 0.0
    %267 = vmatpush.msra.mxu0 0.0
    %268 = vmatpush.msra.mxu0 0.0
    %269 = vmatpush.msra.mxu0 0.0
    %270 = vmatpush.msra.mxu0 0.0
    %271 = vmatpush.msra.mxu0 0.0
    %272 = vmatpush.msra.mxu0 0.0
    %273 = vmatpush.msra.mxu0 0.0
    %274 = vmatpush.msra.mxu0 0.0
    %275 = vmatpush.msra.mxu0 %v126
    %276 = vmatmul.f32.gmra.mxu0 %v74
    %v277 = vpop.f32.mrf.mxu0
    %v278 = vadd.f32 %v60, %v277
    %279 = vmatmul.f32.gmra.mxu0 %v77
    %v280 = vpop.f32.mrf.mxu0
    %v281 = vadd.f32 %v60, %v280
    %282 = vmatmul.f32.gmra.mxu0 %v80
    %v283 = vpop.f32.mrf.mxu0
    %v284 = vadd.f32 %v60, %v283
    %285 = vmatmul.f32.gmra.mxu0 %v83
    %v286 = vpop.f32.mrf.mxu0
    %v287 = vadd.f32 %v60, %v286
    %288 = vmatmul.f32.gmra.mxu0 %v86
    %v289 = vpop.f32.mrf.mxu0
    %v290 = vadd.f32 %v60, %v289
    %291 = vmatmul.f32.gmra.mxu0 %v89
    %v292 = vpop.f32.mrf.mxu0
    %v293 = vadd.f32 %v60, %v292
    %294 = vmatmul.f32.gmra.mxu0 %v92
    %v295 = vpop.f32.mrf.mxu0
    %v296 = vadd.f32 %v60, %v295
    %297 = vmatmul.f32.gmra.mxu0 %v95
    %v298 = vpop.f32.mrf.mxu0
    %v299 = vadd.f32 %v60, %v298
    %300 = vmatmul.f32.gmra.mxu0 %v98
    %v301 = vpop.f32.mrf.mxu0
    %v302 = vadd.f32 %v60, %v301
    %303 = vmatmul.f32.gmra.mxu0 %v101
    %v304 = vpop.f32.mrf.mxu0
    %v305 = vadd.f32 %v60, %v304
    %306 = vmatmul.f32.gmra.mxu0 %v104
    %v307 = vpop.f32.mrf.mxu0
    %v308 = vadd.f32 %v60, %v307
    %309 = vmatmul.f32.gmra.mxu0 %v107
    %v310 = vpop.f32.mrf.mxu0
    %v311 = vadd.f32 %v60, %v310
    %312 = vmatmul.f32.gmra.mxu0 %v110
    %v313 = vpop.f32.mrf.mxu0
    %v314 = vadd.f32 %v60, %v313
    %315 = vmatmul.f32.gmra.mxu0 %v113
    %v316 = vpop.f32.mrf.mxu0
    %v317 = vadd.f32 %v60, %v316
    %318 = vmatmul.f32.gmra.mxu0 %v116
    %v319 = vpop.f32.mrf.mxu0
    %v320 = vadd.f32 %v60, %v319
    %321 = vmatmul.f32.gmra.mxu0 %v119
    %v322 = vpop.f32.mrf.mxu0
    %v323 = vadd.f32 %v60, %v322
    %324 = vdwg.mxu0
    %325 = vmatpush.msra.mxu0 0.0
    %326 = vmatpush.msra.mxu0 0.0
    %327 = vmatpush.msra.mxu0 0.0
    %328 = vmatpush.msra.mxu0 0.0
    %329 = vmatpush.msra.mxu0 0.0
    %330 = vmatpush.msra.mxu0 0.0
    %331 = vmatpush.msra.mxu0 0.0
    %332 = vmatpush.msra.mxu0 0.0
    %333 = vmatpush.msra.mxu0 0.0
    %334 = vmatpush.msra.mxu0 0.0
    %335 = vmatpush.msra.mxu0 0.0
    %336 = vmatpush.msra.mxu0 0.0
    %337 = vmatpush.msra.mxu0 0.0
    %338 = vmatpush.msra.mxu0 0.0
    %339 = vmatpush.msra.mxu0 0.0
    %340 = vmatpush.msra.mxu0 %v128
    %341 = vmatmul.f32.gmra.mxu0 %v74
    %v342 = vpop.f32.mrf.mxu0
    %v343 = vadd.f32 %v61, %v342
    %344 = vmatmul.f32.gmra.mxu0 %v77
    %v345 = vpop.f32.mrf.mxu0
    %v346 = vadd.f32 %v61, %v345
    %347 = vmatmul.f32.gmra.mxu0 %v80
    %v348 = vpop.f32.mrf.mxu0
    %v349 = vadd.f32 %v61, %v348
    %350 = vmatmul.f32.gmra.mxu0 %v83
    %v351 = vpop.f32.mrf.mxu0
    %v352 = vadd.f32 %v61, %v351
    %353 = vmatmul.f32.gmra.mxu0 %v86
    %v354 = vpop.f32.mrf.mxu0
    %v355 = vadd.f32 %v61, %v354
    %356 = vmatmul.f32.gmra.mxu0 %v89
    %v357 = vpop.f32.mrf.mxu0
    %v358 = vadd.f32 %v61, %v357
    %359 = vmatmul.f32.gmra.mxu0 %v92
    %v360 = vpop.f32.mrf.mxu0
    %v361 = vadd.f32 %v61, %v360
    %362 = vmatmul.f32.gmra.mxu0 %v95
    %v363 = vpop.f32.mrf.mxu0
    %v364 = vadd.f32 %v61, %v363
    %365 = vmatmul.f32.gmra.mxu0 %v98
    %v366 = vpop.f32.mrf.mxu0
    %v367 = vadd.f32 %v61, %v366
    %368 = vmatmul.f32.gmra.mxu0 %v101
    %v369 = vpop.f32.mrf.mxu0
    %v370 = vadd.f32 %v61, %v369
    %371 = vmatmul.f32.gmra.mxu0 %v104
    %v372 = vpop.f32.mrf.mxu0
    %v373 = vadd.f32 %v61, %v372
    %374 = vmatmul.f32.gmra.mxu0 %v107
    %v375 = vpop.f32.mrf.mxu0
    %v376 = vadd.f32 %v61, %v375
    %377 = vmatmul.f32.gmra.mxu0 %v110
    %v378 = vpop.f32.mrf.mxu0
    %v379 = vadd.f32 %v61, %v378
    %380 = vmatmul.f32.gmra.mxu0 %v113
    %v381 = vpop.f32.mrf.mxu0
    %v382 = vadd.f32 %v61, %v381
    %383 = vmatmul.f32.gmra.mxu0 %v116
    %v384 = vpop.f32.mrf.mxu0
    %v385 = vadd.f32 %v61, %v384
    %386 = vmatmul.f32.gmra.mxu0 %v119
    %v387 = vpop.f32.mrf.mxu0
    %v388 = vadd.f32 %v61, %v387
    %389 = vdwg.mxu0
    %390 = vst [vmem:[#allocation2] sm:$0xff] %v148
    %391 = vst [vmem:[#allocation2 + $0x8] sm:$0xff] %v213
    %392 = vst [vmem:[#allocation2 + $0x10] sm:$0xff] %v278
    %393 = vst [vmem:[#allocation2 + $0x18] sm:$0xff] %v343
    %394 = vst [vmem:[#allocation2 + $0x20] sm:$0xff] %v151
    %395 = vst [vmem:[#allocation2 + $0x28] sm:$0xff] %v216
    %396 = vst [vmem:[#allocation2 + $0x30] sm:$0xff] %v281
    %397 = vst [vmem:[#allocation2 + $0x38] sm:$0xff] %v346
    %398 = vst [vmem:[#allocation2 + $0x40] sm:$0xff] %v154
    %399 = vst [vmem:[#allocation2 + $0x48] sm:$0xff] %v219
    %400 = vst [vmem:[#allocation2 + $0x50] sm:$0xff] %v284
    %401 = vst [vmem:[#allocation2 + $0x58] sm:$0xff] %v349
    %402 = vst [vmem:[#allocation2 + $0x60] sm:$0xff] %v157
    %403 = vst [vmem:[#allocation2 + $0x68] sm:$0xff] %v222
    %404 = vst [vmem:[#allocation2 + $0x70] sm:$0xff] %v287
    %405 = vst [vmem:[#allocation2 + $0x78] sm:$0xff] %v352
    %406 = vst [vmem:[#allocation2 + $0x80] sm:$0xff] %v160
    %407 = vst [vmem:[#allocation2 + $0x88] sm:$0xff] %v225
    %408 = vst [vmem:[#allocation2 + $0x90] sm:$0xff] %v290
    %409 = vst [vmem:[#allocation2 + $0x98] sm:$0xff] %v355
    %410 = vst [vmem:[#allocation2 + $0xa0] sm:$0xff] %v163
    %411 = vst [vmem:[#allocation2 + $0xa8] sm:$0xff] %v228
    %412 = vst [vmem:[#allocation2 + $0xb0] sm:$0xff] %v293
    %413 = vst [vmem:[#allocation2 + $0xb8] sm:$0xff] %v358
    %414 = vst [vmem:[#allocation2 + $0xc0] sm:$0xff] %v166
    %415 = vst [vmem:[#allocation2 + $0xc8] sm:$0xff] %v231
    %416 = vst [vmem:[#allocation2 + $0xd0] sm:$0xff] %v296
    %417 = vst [vmem:[#allocation2 + $0xd8] sm:$0xff] %v361
    %418 = vst [vmem:[#allocation2 + $0xe0] sm:$0xff] %v169
    %419 = vst [vmem:[#allocation2 + $0xe8] sm:$0xff] %v234
    %420 = vst [vmem:[#allocation2 + $0xf0] sm:$0xff] %v299
    %421 = vst [vmem:[#allocation2 + $0xf8] sm:$0xff] %v364
    %422 = vst [vmem:[#allocation2 + $0x100] sm:$0xff] %v172
    %423 = vst [vmem:[#allocation2 + $0x108] sm:$0xff] %v237
    %424 = vst [vmem:[#allocation2 + $0x110] sm:$0xff] %v302
    %425 = vst [vmem:[#allocation2 + $0x118] sm:$0xff] %v367
    %426 = vst [vmem:[#allocation2 + $0x120] sm:$0xff] %v175
    %427 = vst [vmem:[#allocation2 + $0x128] sm:$0xff] %v240
    %428 = vst [vmem:[#allocation2 + $0x130] sm:$0xff] %v305
    %429 = vst [vmem:[#allocation2 + $0x138] sm:$0xff] %v370
    %430 = vst [vmem:[#allocation2 + $0x140] sm:$0xff] %v178
    %431 = vst [vmem:[#allocation2 + $0x148] sm:$0xff] %v243
    %432 = vst [vmem:[#allocation2 + $0x150] sm:$0xff] %v308
    %433 = vst [vmem:[#allocation2 + $0x158] sm:$0xff] %v373
    %434 = vst [vmem:[#allocation2 + $0x160] sm:$0xff] %v181
    %435 = vst [vmem:[#allocation2 + $0x168] sm:$0xff] %v246
    %436 = vst [vmem:[#allocation2 + $0x170] sm:$0xff] %v311
    %437 = vst [vmem:[#allocation2 + $0x178] sm:$0xff] %v376
    %438 = vst [vmem:[#allocation2 + $0x180] sm:$0xff] %v184
    %439 = vst [vmem:[#allocation2 + $0x188] sm:$0xff] %v249
    %440 = vst [vmem:[#allocation2 + $0x190] sm:$0xff] %v314
    %441 = vst [vmem:[#allocation2 + $0x198] sm:$0xff] %v379
    %442 = vst [vmem:[#allocation2 + $0x1a0] sm:$0xff] %v187
    %443 = vst [vmem:[#allocation2 + $0x1a8] sm:$0xff] %v252
    %444 = vst [vmem:[#allocation2 + $0x1b0] sm:$0xff] %v317
    %445 = vst [vmem:[#allocation2 + $0x1b8] sm:$0xff] %v382
    %446 = vst [vmem:[#allocation2 + $0x1c0] sm:$0xff] %v190
    %447 = vst [vmem:[#allocation2 + $0x1c8] sm:$0xff] %v255
    %448 = vst [vmem:[#allocation2 + $0x1d0] sm:$0xff] %v320
    %449 = vst [vmem:[#allocation2 + $0x1d8] sm:$0xff] %v385
    %450 = vst [vmem:[#allocation2 + $0x1e0] sm:$0xff] %v193
    %451 = vst [vmem:[#allocation2 + $0x1e8] sm:$0xff] %v258
    %452 = vst [vmem:[#allocation2 + $0x1f0] sm:$0xff] %v323
    %453 = vst [vmem:[#allocation2 + $0x1f8] sm:$0xff] %v388
    %v454 = vlaneseq
    %v455 = vand.u32 %v454, 127
    %vm456 = vcmp.lt.s32.totalorder %v455, 64
    %v457 = vld [vmem:[#allocation2] sm:$0xff]
    %v458 = vld [vmem:[#allocation2 + $0x8] sm:$0xff]
    %v459 = vld [vmem:[#allocation2 + $0x10] sm:$0xff]
    %v460 = vld [vmem:[#allocation2 + $0x18] sm:$0xff]
    %v461 = vxor.u32 %v457, 2147483648
    %v462 = vxor.u32 %v458, 2147483648
    %v463 = vmul.f32 %v461, 1.442695
    %v464 = vpow.pop %v463
    %v465 = vmul.f32 %v462, 1.442695
    %v466 = vpow.pop %v465
    %v467 = vadd.f32 %v464, 1.0
    %v468 = vadd.f32 %v466, 1.0
    %v469 = vrcp.pop %v467
    %v470 = vmul.f32 %v467, %v469
    %v471 = vsub.f32 1.0, %v470
    %v472 = vmul.f32 %v469, %v471
    %v473 = vadd.f32 %v469, %v472
    %vm474 = vweird.f32 %v467
    %vm475 = vweird.f32 %v469
    %vm476 = vmor %vm474, %vm475
    %v477 = vsel %vm476, %v469, %v473
    %v478 = vand.u32 2147483647, %v467
    %vm479 = vcmp.eq.f32.partialorder %v478, 8.507059e+37
    %v480 = vand.u32 %v467, 2147483648
    %v481 = vor.u32 1.1754944e-38, %v480
    %v482 = vsel %vm479, %v481, %v477
    %v483 = vmul.f32 1.0, %v482
    %v484 = vrcp.pop %v468
    %v485 = vmul.f32 %v468, %v484
    %v486 = vsub.f32 1.0, %v485
    %v487 = vmul.f32 %v484, %v486
    %v488 = vadd.f32 %v484, %v487
    %vm489 = vweird.f32 %v468
    %vm490 = vweird.f32 %v484
    %vm491 = vmor %vm489, %vm490
    %v492 = vsel %vm491, %v484, %v488
    %v493 = vand.u32 2147483647, %v468
    %vm494 = vcmp.eq.f32.partialorder %v493, 8.507059e+37
    %v495 = vand.u32 %v468, 2147483648
    %v496 = vor.u32 1.1754944e-38, %v495
    %v497 = vsel %vm494, %v496, %v492
    %v498 = vmul.f32 1.0, %v497
    %v499 = vmul.f32 %v483, %v459
    %v500 = vadd.f32 %v460, %v499
    %v501 = vtanh.pop %v500
    %v502 = vsub.f32 0.0, %v501
    %v503 = vmul.f32 %v498, %v502
    %v504 = vadd.f32 %v501, %v503
    %v505 = vsel %vm456, %v504, 0.0
    %v506 = vld [vmem:[#allocation4] sm:$0xff]
    %v507 = vld [vmem:[#allocation4 + $0x8] sm:$0xff]
    %v508 = vld [vmem:[#allocation4 + $0x10] sm:$0xff]
    %v509 = vld [vmem:[#allocation4 + $0x18] sm:$0xff]
    %v510 = vld [vmem:[#allocation4 + $0x20] sm:$0xff]
    %v511 = vld [vmem:[#allocation4 + $0x28] sm:$0xff]
    %v512 = vld [vmem:[#allocation4 + $0x30] sm:$0xff]
    %v513 = vld [vmem:[#allocation4 + $0x38] sm:$0xff]
    %v514 = vld [vmem:[#allocation4 + $0x40] sm:$0xff]
    %v515 = vld [vmem:[#allocation4 + $0x48] sm:$0xff]
    %v516 = vld [vmem:[#allocation4 + $0x50] sm:$0xff]
    %v517 = vld [vmem:[#allocation4 + $0x58] sm:$0xff]
    %v518 = vld [vmem:[#allocation4 + $0x60] sm:$0xff]
    %v519 = vld [vmem:[#allocation4 + $0x68] sm:$0xff]
    %v520 = vld [vmem:[#allocation4 + $0x70] sm:$0xff]
    %v521 = vld [vmem:[#allocation4 + $0x78] sm:$0xff]
    %v522 = vld [vmem:[#allocation4 + $0x80] sm:$0xff]
    %v523 = vld [vmem:[#allocation4 + $0x88] sm:$0xff]
    %v524 = vld [vmem:[#allocation4 + $0x90] sm:$0xff]
    %v525 = vld [vmem:[#allocation4 + $0x98] sm:$0xff]
    %v526 = vld [vmem:[#allocation4 + $0xa0] sm:$0xff]
    %v527 = vld [vmem:[#allocation4 + $0xa8] sm:$0xff]
    %v528 = vld [vmem:[#allocation4 + $0xb0] sm:$0xff]
    %v529 = vld [vmem:[#allocation4 + $0xb8] sm:$0xff]
    %v530 = vld [vmem:[#allocation4 + $0xc0] sm:$0xff]
    %v531 = vld [vmem:[#allocation4 + $0xc8] sm:$0xff]
    %v532 = vld [vmem:[#allocation4 + $0xd0] sm:$0xff]
    %v533 = vld [vmem:[#allocation4 + $0xd8] sm:$0xff]
    %v534 = vld [vmem:[#allocation4 + $0xe0] sm:$0xff]
    %v535 = vld [vmem:[#allocation4 + $0xe8] sm:$0xff]
    %v536 = vld [vmem:[#allocation4 + $0xf0] sm:$0xff]
    %v537 = vld [vmem:[#allocation4 + $0xf8] sm:$0xff]
    %v538 = vld [vmem:[#allocation4 + $0x100] sm:$0xff]
    %v539 = vld [vmem:[#allocation4 + $0x108] sm:$0xff]
    %v540 = vld [vmem:[#allocation4 + $0x110] sm:$0xff]
    %v541 = vld [vmem:[#allocation4 + $0x118] sm:$0xff]
    %v542 = vld [vmem:[#allocation4 + $0x120] sm:$0xff]
    %v543 = vld [vmem:[#allocation4 + $0x128] sm:$0xff]
    %v544 = vld [vmem:[#allocation4 + $0x130] sm:$0xff]
    %v545 = vld [vmem:[#allocation4 + $0x138] sm:$0xff]
    %v546 = vld [vmem:[#allocation4 + $0x140] sm:$0xff]
    %v547 = vld [vmem:[#allocation4 + $0x148] sm:$0xff]
    %v548 = vld [vmem:[#allocation4 + $0x150] sm:$0xff]
    %v549 = vld [vmem:[#allocation4 + $0x158] sm:$0xff]
    %v550 = vld [vmem:[#allocation4 + $0x160] sm:$0xff]
    %v551 = vld [vmem:[#allocation4 + $0x168] sm:$0xff]
    %v552 = vld [vmem:[#allocation4 + $0x170] sm:$0xff]
    %v553 = vld [vmem:[#allocation4 + $0x178] sm:$0xff]
    %v554 = vld [vmem:[#allocation4 + $0x180] sm:$0xff]
    %v555 = vld [vmem:[#allocation4 + $0x188] sm:$0xff]
    %v556 = vld [vmem:[#allocation4 + $0x190] sm:$0xff]
    %v557 = vld [vmem:[#allocation4 + $0x198] sm:$0xff]
    %v558 = vld [vmem:[#allocation4 + $0x1a0] sm:$0xff]
    %v559 = vld [vmem:[#allocation4 + $0x1a8] sm:$0xff]
    %v560 = vld [vmem:[#allocation4 + $0x1b0] sm:$0xff]
    %v561 = vld [vmem:[#allocation4 + $0x1b8] sm:$0xff]
    %v562 = vld [vmem:[#allocation4 + $0x1c0] sm:$0xff]
    %v563 = vld [vmem:[#allocation4 + $0x1c8] sm:$0xff]
    %v564 = vld [vmem:[#allocation4 + $0x1d0] sm:$0xff]
    %v565 = vld [vmem:[#allocation4 + $0x1d8] sm:$0xff]
    %v566 = vld [vmem:[#allocation4 + $0x1e0] sm:$0xff]
    %v567 = vld [vmem:[#allocation4 + $0x1e8] sm:$0xff]
    %v568 = vld [vmem:[#allocation4 + $0x1f0] sm:$0xff]
    %v569 = vld [vmem:[#allocation4 + $0x1f8] sm:$0xff]
    %v570 = vld [vmem:[#allocation2 + $0x20] sm:$0xff]
    %v571 = vld [vmem:[#allocation2 + $0x28] sm:$0xff]
    %v572 = vld [vmem:[#allocation2 + $0x30] sm:$0xff]
    %v573 = vld [vmem:[#allocation2 + $0x38] sm:$0xff]
    %574 = vmatpush.msra.mxu0 %v566
    %575 = vmatpush.msra.mxu0 %v562
    %576 = vmatpush.msra.mxu0 %v558
    %577 = vmatpush.msra.mxu0 %v554
    %578 = vmatpush.msra.mxu0 %v550
    %579 = vmatpush.msra.mxu0 %v546
    %580 = vmatpush.msra.mxu0 %v542
    %581 = vmatpush.msra.mxu0 %v538
    %582 = vmatpush.msra.mxu0 %v534
    %583 = vmatpush.msra.mxu0 %v530
    %584 = vmatpush.msra.mxu0 %v526
    %585 = vmatpush.msra.mxu0 %v522
    %586 = vmatpush.msra.mxu0 %v518
    %587 = vmatpush.msra.mxu0 %v514
    %588 = vmatpush.msra.mxu0 %v510
    %589 = vmatpush.msra.mxu0 %v506
    %590 = vmatmul.f32.gmra.mxu0 %v505
    %v591 = vpop.f32.mrf.mxu0
    %v592 = vadd.f32 %v570, %v591
    %593 = vdwg.mxu0
    %594 = vmatpush.msra.mxu0 %v567
    %595 = vmatpush.msra.mxu0 %v563
    %596 = vmatpush.msra.mxu0 %v559
    %597 = vmatpush.msra.mxu0 %v555
    %598 = vmatpush.msra.mxu0 %v551
    %599 = vmatpush.msra.mxu0 %v547
    %600 = vmatpush.msra.mxu0 %v543
    %601 = vmatpush.msra.mxu0 %v539
    %602 = vmatpush.msra.mxu0 %v535
    %603 = vmatpush.msra.mxu0 %v531
    %604 = vmatpush.msra.mxu0 %v527
    %605 = vmatpush.msra.mxu0 %v523
    %606 = vmatpush.msra.mxu0 %v519
    %607 = vmatpush.msra.mxu0 %v515
    %608 = vmatpush.msra.mxu0 %v511
    %609 = vmatpush.msra.mxu0 %v507
    %610 = vmatmul.f32.gmra.mxu0 %v505
    %v611 = vpop.f32.mrf.mxu0
    %v612 = vadd.f32 %v571, %v611
    %613 = vdwg.mxu0
    %614 = vmatpush.msra.mxu0 %v568
    %615 = vmatpush.msra.mxu0 %v564
    %616 = vmatpush.msra.mxu0 %v560
    %617 = vmatpush.msra.mxu0 %v556
    %618 = vmatpush.msra.mxu0 %v552
    %619 = vmatpush.msra.mxu0 %v548
    %620 = vmatpush.msra.mxu0 %v544
    %621 = vmatpush.msra.mxu0 %v540
    %622 = vmatpush.msra.mxu0 %v536
    %623 = vmatpush.msra.mxu0 %v532
    %624 = vmatpush.msra.mxu0 %v528
    %625 = vmatpush.msra.mxu0 %v524
    %626 = vmatpush.msra.mxu0 %v520
    %627 = vmatpush.msra.mxu0 %v516
    %628 = vmatpush.msra.mxu0 %v512
    %629 = vmatpush.msra.mxu0 %v508
    %630 = vmatmul.f32.gmra.mxu0 %v505
    %v631 = vpop.f32.mrf.mxu0
    %v632 = vadd.f32 %v572, %v631
    %633 = vdwg.mxu0
    %634 = vmatpush.msra.mxu0 %v569
    %635 = vmatpush.msra.mxu0 %v565
    %636 = vmatpush.msra.mxu0 %v561
    %637 = vmatpush.msra.mxu0 %v557
    %638 = vmatpush.msra.mxu0 %v553
    %639 = vmatpush.msra.mxu0 %v549
    %640 = vmatpush.msra.mxu0 %v545
    %641 = vmatpush.msra.mxu0 %v541
    %642 = vmatpush.msra.mxu0 %v537
    %643 = vmatpush.msra.mxu0 %v533
    %644 = vmatpush.msra.mxu0 %v529
    %645 = vmatpush.msra.mxu0 %v525
    %646 = vmatpush.msra.mxu0 %v521
    %647 = vmatpush.msra.mxu0 %v517
    %648 = vmatpush.msra.mxu0 %v513
    %649 = vmatpush.msra.mxu0 %v509
    %650 = vmatmul.f32.gmra.mxu0 %v505
    %v651 = vpop.f32.mrf.mxu0
    %v652 = vadd.f32 %v573, %v651
    %653 = vdwg.mxu0
    %v654 = vxor.u32 %v592, 2147483648
    %v655 = vxor.u32 %v612, 2147483648
    %v656 = vmul.f32 %v654, 1.442695
    %v657 = vpow.pop %v656
    %v658 = vmul.f32 %v655, 1.442695
    %v659 = vpow.pop %v658
    %v660 = vadd.f32 %v657, 1.0
    %v661 = vadd.f32 %v659, 1.0
    %v662 = vrcp.pop %v660
    %v663 = vmul.f32 %v660, %v662
    %v664 = vsub.f32 1.0, %v663
    %v665 = vmul.f32 %v662, %v664
    %v666 = vadd.f32 %v662, %v665
    %vm667 = vweird.f32 %v660
    %vm668 = vweird.f32 %v662
    %vm669 = vmor %vm667, %vm668
    %v670 = vsel %vm669, %v662, %v666
    %v671 = vand.u32 2147483647, %v660
    %vm672 = vcmp.eq.f32.partialorder %v671, 8.507059e+37
    %v673 = vand.u32 %v660, 2147483648
    %v674 = vor.u32 1.1754944e-38, %v673
    %v675 = vsel %vm672, %v674, %v670
    %v676 = vmul.f32 1.0, %v675
    %v677 = vrcp.pop %v661
    %v678 = vmul.f32 %v661, %v677
    %v679 = vsub.f32 1.0, %v678
    %v680 = vmul.f32 %v677, %v679
    %v681 = vadd.f32 %v677, %v680
    %vm682 = vweird.f32 %v661
    %vm683 = vweird.f32 %v677
    %vm684 = vmor %vm682, %vm683
    %v685 = vsel %vm684, %v677, %v681
    %v686 = vand.u32 2147483647, %v661
    %vm687 = vcmp.eq.f32.partialorder %v686, 8.507059e+37
    %v688 = vand.u32 %v661, 2147483648
    %v689 = vor.u32 1.1754944e-38, %v688
    %v690 = vsel %vm687, %v689, %v685
    %v691 = vmul.f32 1.0, %v690
    %v692 = vmul.f32 %v676, %v632
    %v693 = vadd.f32 %v652, %v692
    %v694 = vtanh.pop %v693
    %v695 = vsub.f32 %v505, %v694
    %v696 = vmul.f32 %v691, %v695
    %v697 = vadd.f32 %v694, %v696
    %698 = vst [vmem:[#allocation3] sm:$0xff] %v697
    %v699 = vld [vmem:[#allocation4] sm:$0xff]
    %v700 = vld [vmem:[#allocation4 + $0x8] sm:$0xff]
    %v701 = vld [vmem:[#allocation4 + $0x10] sm:$0xff]
    %v702 = vld [vmem:[#allocation4 + $0x18] sm:$0xff]
    %v703 = vld [vmem:[#allocation4 + $0x20] sm:$0xff]
    %v704 = vld [vmem:[#allocation4 + $0x28] sm:$0xff]
    %v705 = vld [vmem:[#allocation4 + $0x30] sm:$0xff]
    %v706 = vld [vmem:[#allocation4 + $0x38] sm:$0xff]
    %v707 = vld [vmem:[#allocation4 + $0x40] sm:$0xff]
    %v708 = vld [vmem:[#allocation4 + $0x48] sm:$0xff]
    %v709 = vld [vmem:[#allocation4 + $0x50] sm:$0xff]
    %v710 = vld [vmem:[#allocation4 + $0x58] sm:$0xff]
    %v711 = vld [vmem:[#allocation4 + $0x60] sm:$0xff]
    %v712 = vld [vmem:[#allocation4 + $0x68] sm:$0xff]
    %v713 = vld [vmem:[#allocation4 + $0x70] sm:$0xff]
    %v714 = vld [vmem:[#allocation4 + $0x78] sm:$0xff]
    %v715 = vld [vmem:[#allocation4 + $0x80] sm:$0xff]
    %v716 = vld [vmem:[#allocation4 + $0x88] sm:$0xff]
    %v717 = vld [vmem:[#allocation4 + $0x90] sm:$0xff]
    %v718 = vld [vmem:[#allocation4 + $0x98] sm:$0xff]
    %v719 = vld [vmem:[#allocation4 + $0xa0] sm:$0xff]
    %v720 = vld [vmem:[#allocation4 + $0xa8] sm:$0xff]
    %v721 = vld [vmem:[#allocation4 + $0xb0] sm:$0xff]
    %v722 = vld [vmem:[#allocation4 + $0xb8] sm:$0xff]
    %v723 = vld [vmem:[#allocation4 + $0xc0] sm:$0xff]
    %v724 = vld [vmem:[#allocation4 + $0xc8] sm:$0xff]
    %v725 = vld [vmem:[#allocation4 + $0xd0] sm:$0xff]
    %v726 = vld [vmem:[#allocation4 + $0xd8] sm:$0xff]
    %v727 = vld [vmem:[#allocation4 + $0xe0] sm:$0xff]
    %v728 = vld [vmem:[#allocation4 + $0xe8] sm:$0xff]
    %v729 = vld [vmem:[#allocation4 + $0xf0] sm:$0xff]
    %v730 = vld [vmem:[#allocation4 + $0xf8] sm:$0xff]
    %v731 = vld [vmem:[#allocation4 + $0x100] sm:$0xff]
    %v732 = vld [vmem:[#allocation4 + $0x108] sm:$0xff]
    %v733 = vld [vmem:[#allocation4 + $0x110] sm:$0xff]
    %v734 = vld [vmem:[#allocation4 + $0x118] sm:$0xff]
    %v735 = vld [vmem:[#allocation4 + $0x120] sm:$0xff]
    %v736 = vld [vmem:[#allocation4 + $0x128] sm:$0xff]
    %v737 = vld [vmem:[#allocation4 + $0x130] sm:$0xff]
    %v738 = vld [vmem:[#allocation4 + $0x138] sm:$0xff]
    %v739 = vld [vmem:[#allocation4 + $0x140] sm:$0xff]
    %v740 = vld [vmem:[#allocation4 + $0x148] sm:$0xff]
    %v741 = vld [vmem:[#allocation4 + $0x150] sm:$0xff]
    %v742 = vld [vmem:[#allocation4 + $0x158] sm:$0xff]
    %v743 = vld [vmem:[#allocation4 + $0x160] sm:$0xff]
    %v744 = vld [vmem:[#allocation4 + $0x168] sm:$0xff]
    %v745 = vld [vmem:[#allocation4 + $0x170] sm:$0xff]
    %v746 = vld [vmem:[#allocation4 + $0x178] sm:$0xff]
    %v747 = vld [vmem:[#allocation4 + $0x180] sm:$0xff]
    %v748 = vld [vmem:[#allocation4 + $0x188] sm:$0xff]
    %v749 = vld [vmem:[#allocation4 + $0x190] sm:$0xff]
    %v750 = vld [vmem:[#allocation4 + $0x198] sm:$0xff]
    %v751 = vld [vmem:[#allocation4 + $0x1a0] sm:$0xff]
    %v752 = vld [vmem:[#allocation4 + $0x1a8] sm:$0xff]
    %v753 = vld [vmem:[#allocation4 + $0x1b0] sm:$0xff]
    %v754 = vld [vmem:[#allocation4 + $0x1b8] sm:$0xff]
    %v755 = vld [vmem:[#allocation4 + $0x1c0] sm:$0xff]
    %v756 = vld [vmem:[#allocation4 + $0x1c8] sm:$0xff]
    %v757 = vld [vmem:[#allocation4 + $0x1d0] sm:$0xff]
    %v758 = vld [vmem:[#allocation4 + $0x1d8] sm:$0xff]
    %v759 = vld [vmem:[#allocation4 + $0x1e0] sm:$0xff]
    %v760 = vld [vmem:[#allocation4 + $0x1e8] sm:$0xff]
    %v761 = vld [vmem:[#allocation4 + $0x1f0] sm:$0xff]
    %v762 = vld [vmem:[#allocation4 + $0x1f8] sm:$0xff]
    %v763 = vld [vmem:[#allocation2 + $0x40] sm:$0xff]
    %v764 = vld [vmem:[#allocation2 + $0x48] sm:$0xff]
    %v765 = vld [vmem:[#allocation2 + $0x50] sm:$0xff]
    %v766 = vld [vmem:[#allocation2 + $0x58] sm:$0xff]
    %767 = vmatpush.msra.mxu0 %v759
    %768 = vmatpush.msra.mxu0 %v755
    %769 = vmatpush.msra.mxu0 %v751
    %770 = vmatpush.msra.mxu0 %v747
    %771 = vmatpush.msra.mxu0 %v743
    %772 = vmatpush.msra.mxu0 %v739
    %773 = vmatpush.msra.mxu0 %v735
    %774 = vmatpush.msra.mxu0 %v731
    %775 = vmatpush.msra.mxu0 %v727
    %776 = vmatpush.msra.mxu0 %v723
    %777 = vmatpush.msra.mxu0 %v719
    %778 = vmatpush.msra.mxu0 %v715
    %779 = vmatpush.msra.mxu0 %v711
    %780 = vmatpush.msra.mxu0 %v707
    %781 = vmatpush.msra.mxu0 %v703
    %782 = vmatpush.msra.mxu0 %v699
    %783 = vmatmul.f32.gmra.mxu0 %v697
    %v784 = vpop.f32.mrf.mxu0
    %v785 = vadd.f32 %v763, %v784
    %786 = vdwg.mxu0
    %787 = vmatpush.msra.mxu0 %v760
    %788 = vmatpush.msra.mxu0 %v756
    %789 = vmatpush.msra.mxu0 %v752
    %790 = vmatpush.msra.mxu0 %v748
    %791 = vmatpush.msra.mxu0 %v744
    %792 = vmatpush.msra.mxu0 %v740
    %793 = vmatpush.msra.mxu0 %v736
    %794 = vmatpush.msra.mxu0 %v732
    %795 = vmatpush.msra.mxu0 %v728
    %796 = vmatpush.msra.mxu0 %v724
    %797 = vmatpush.msra.mxu0 %v720
    %798 = vmatpush.msra.mxu0 %v716
    %799 = vmatpush.msra.mxu0 %v712
    %800 = vmatpush.msra.mxu0 %v708
    %801 = vmatpush.msra.mxu0 %v704
    %802 = vmatpush.msra.mxu0 %v700
    %803 = vmatmul.f32.gmra.mxu0 %v697
    %v804 = vpop.f32.mrf.mxu0
    %v805 = vadd.f32 %v764, %v804
    %806 = vdwg.mxu0
    %807 = vmatpush.msra.mxu0 %v761
    %808 = vmatpush.msra.mxu0 %v757
    %809 = vmatpush.msra.mxu0 %v753
    %810 = vmatpush.msra.mxu0 %v749
    %811 = vmatpush.msra.mxu0 %v745
    %812 = vmatpush.msra.mxu0 %v741
    %813 = vmatpush.msra.mxu0 %v737
    %814 = vmatpush.msra.mxu0 %v733
    %815 = vmatpush.msra.mxu0 %v729
    %816 = vmatpush.msra.mxu0 %v725
    %817 = vmatpush.msra.mxu0 %v721
    %818 = vmatpush.msra.mxu0 %v717
    %819 = vmatpush.msra.mxu0 %v713
    %820 = vmatpush.msra.mxu0 %v709
    %821 = vmatpush.msra.mxu0 %v705
    %822 = vmatpush.msra.mxu0 %v701
    %823 = vmatmul.f32.gmra.mxu0 %v697
    %v824 = vpop.f32.mrf.mxu0
    %v825 = vadd.f32 %v765, %v824
    %826 = vdwg.mxu0
    %827 = vmatpush.msra.mxu0 %v762
    %828 = vmatpush.msra.mxu0 %v758
    %829 = vmatpush.msra.mxu0 %v754
    %830 = vmatpush.msra.mxu0 %v750
    %831 = vmatpush.msra.mxu0 %v746
    %832 = vmatpush.msra.mxu0 %v742
    %833 = vmatpush.msra.mxu0 %v738
    %834 = vmatpush.msra.mxu0 %v734
    %835 = vmatpush.msra.mxu0 %v730
    %836 = vmatpush.msra.mxu0 %v726
    %837 = vmatpush.msra.mxu0 %v722
    %838 = vmatpush.msra.mxu0 %v718
    %839 = vmatpush.msra.mxu0 %v714
    %840 = vmatpush.msra.mxu0 %v710
    %841 = vmatpush.msra.mxu0 %v706
    %842 = vmatpush.msra.mxu0 %v702
    %843 = vmatmul.f32.gmra.mxu0 %v697
    %v844 = vpop.f32.mrf.mxu0
    %v845 = vadd.f32 %v766, %v844
    %846 = vdwg.mxu0
    %v847 = vxor.u32 %v785, 2147483648
    %v848 = vxor.u32 %v805, 2147483648
    %v849 = vmul.f32 %v847, 1.442695
    %v850 = vpow.pop %v849
    %v851 = vmul.f32 %v848, 1.442695
    %v852 = vpow.pop %v851
    %v853 = vadd.f32 %v850, 1.0
    %v854 = vadd.f32 %v852, 1.0
    %v855 = vrcp.pop %v853
    %v856 = vmul.f32 %v853, %v855
    %v857 = vsub.f32 1.0, %v856
    %v858 = vmul.f32 %v855, %v857
    %v859 = vadd.f32 %v855, %v858
    %vm860 = vweird.f32 %v853
    %vm861 = vweird.f32 %v855
    %vm862 = vmor %vm860, %vm861
    %v863 = vsel %vm862, %v855, %v859
    %v864 = vand.u32 2147483647, %v853
    %vm865 = vcmp.eq.f32.partialorder %v864, 8.507059e+37
    %v866 = vand.u32 %v853, 2147483648
    %v867 = vor.u32 1.1754944e-38, %v866
    %v868 = vsel %vm865, %v867, %v863
    %v869 = vmul.f32 1.0, %v868
    %v870 = vrcp.pop %v854
    %v871 = vmul.f32 %v854, %v870
    %v872 = vsub.f32 1.0, %v871
    %v873 = vmul.f32 %v870, %v872
    %v874 = vadd.f32 %v870, %v873
    %vm875 = vweird.f32 %v854
    %vm876 = vweird.f32 %v870
    %vm877 = vmor %vm875, %vm876
    %v878 = vsel %vm877, %v870, %v874
    %v879 = vand.u32 2147483647, %v854
    %vm880 = vcmp.eq.f32.partialorder %v879, 8.507059e+37
    %v881 = vand.u32 %v854, 2147483648
    %v882 = vor.u32 1.1754944e-38, %v881
    %v883 = vsel %vm880, %v882, %v878
    %v884 = vmul.f32 1.0, %v883
    %v885 = vmul.f32 %v869, %v825
    %v886 = vadd.f32 %v845, %v885
    %v887 = vtanh.pop %v886
    %v888 = vsub.f32 %v697, %v887
    %v889 = vmul.f32 %v884, %v888
    %v890 = vadd.f32 %v887, %v889
    %891 = vst [vmem:[#allocation3 + $0x8] sm:$0xff] %v890
    %v892 = vld [vmem:[#allocation4] sm:$0xff]
    %v893 = vld [vmem:[#allocation4 + $0x8] sm:$0xff]
    %v894 = vld [vmem:[#allocation4 + $0x10] sm:$0xff]
    %v895 = vld [vmem:[#allocation4 + $0x18] sm:$0xff]
    %v896 = vld [vmem:[#allocation4 + $0x20] sm:$0xff]
    %v897 = vld [vmem:[#allocation4 + $0x28] sm:$0xff]
    %v898 = vld [vmem:[#allocation4 + $0x30] sm:$0xff]
    %v899 = vld [vmem:[#allocation4 + $0x38] sm:$0xff]
    %v900 = vld [vmem:[#allocation4 + $0x40] sm:$0xff]
    %v901 = vld [vmem:[#allocation4 + $0x48] sm:$0xff]
    %v902 = vld [vmem:[#allocation4 + $0x50] sm:$0xff]
    %v903 = vld [vmem:[#allocation4 + $0x58] sm:$0xff]
    %v904 = vld [vmem:[#allocation4 + $0x60] sm:$0xff]
    %v905 = vld [vmem:[#allocation4 + $0x68] sm:$0xff]
    %v906 = vld [vmem:[#allocation4 + $0x70] sm:$0xff]
    %v907 = vld [vmem:[#allocation4 + $0x78] sm:$0xff]
    %v908 = vld [vmem:[#allocation4 + $0x80] sm:$0xff]
    %v909 = vld [vmem:[#allocation4 + $0x88] sm:$0xff]
    %v910 = vld [vmem:[#allocation4 + $0x90] sm:$0xff]
    %v911 = vld [vmem:[#allocation4 + $0x98] sm:$0xff]
    %v912 = vld [vmem:[#allocation4 + $0xa0] sm:$0xff]
    %v913 = vld [vmem:[#allocation4 + $0xa8] sm:$0xff]
    %v914 = vld [vmem:[#allocation4 + $0xb0] sm:$0xff]
    %v915 = vld [vmem:[#allocation4 + $0xb8] sm:$0xff]
    %v916 = vld [vmem:[#allocation4 + $0xc0] sm:$0xff]
    %v917 = vld [vmem:[#allocation4 + $0xc8] sm:$0xff]
    %v918 = vld [vmem:[#allocation4 + $0xd0] sm:$0xff]
    %v919 = vld [vmem:[#allocation4 + $0xd8] sm:$0xff]
    %v920 = vld [vmem:[#allocation4 + $0xe0] sm:$0xff]
    %v921 = vld [vmem:[#allocation4 + $0xe8] sm:$0xff]
    %v922 = vld [vmem:[#allocation4 + $0xf0] sm:$0xff]
    %v923 = vld [vmem:[#allocation4 + $0xf8] sm:$0xff]
    %v924 = vld [vmem:[#allocation4 + $0x100] sm:$0xff]
    %v925 = vld [vmem:[#allocation4 + $0x108] sm:$0xff]
    %v926 = vld [vmem:[#allocation4 + $0x110] sm:$0xff]
    %v927 = vld [vmem:[#allocation4 + $0x118] sm:$0xff]
    %v928 = vld [vmem:[#allocation4 + $0x120] sm:$0xff]
    %v929 = vld [vmem:[#allocation4 + $0x128] sm:$0xff]
    %v930 = vld [vmem:[#allocation4 + $0x130] sm:$0xff]
    %v931 = vld [vmem:[#allocation4 + $0x138] sm:$0xff]
    %v932 = vld [vmem:[#allocation4 + $0x140] sm:$0xff]
    %v933 = vld [vmem:[#allocation4 + $0x148] sm:$0xff]
    %v934 = vld [vmem:[#allocation4 + $0x150] sm:$0xff]
    %v935 = vld [vmem:[#allocation4 + $0x158] sm:$0xff]
    %v936 = vld [vmem:[#allocation4 + $0x160] sm:$0xff]
    %v937 = vld [vmem:[#allocation4 + $0x168] sm:$0xff]
    %v938 = vld [vmem:[#allocation4 + $0x170] sm:$0xff]
    %v939 = vld [vmem:[#allocation4 + $0x178] sm:$0xff]
    %v940 = vld [vmem:[#allocation4 + $0x180] sm:$0xff]
    %v941 = vld [vmem:[#allocation4 + $0x188] sm:$0xff]
    %v942 = vld [vmem:[#allocation4 + $0x190] sm:$0xff]
    %v943 = vld [vmem:[#allocation4 + $0x198] sm:$0xff]
    %v944 = vld [vmem:[#allocation4 + $0x1a0] sm:$0xff]
    %v945 = vld [vmem:[#allocation4 + $0x1a8] sm:$0xff]
    %v946 = vld [vmem:[#allocation4 + $0x1b0] sm:$0xff]
    %v947 = vld [vmem:[#allocation4 + $0x1b8] sm:$0xff]
    %v948 = vld [vmem:[#allocation4 + $0x1c0] sm:$0xff]
    %v949 = vld [vmem:[#allocation4 + $0x1c8] sm:$0xff]
    %v950 = vld [vmem:[#allocation4 + $0x1d0] sm:$0xff]
    %v951 = vld [vmem:[#allocation4 + $0x1d8] sm:$0xff]
    %v952 = vld [vmem:[#allocation4 + $0x1e0] sm:$0xff]
    %v953 = vld [vmem:[#allocation4 + $0x1e8] sm:$0xff]
    %v954 = vld [vmem:[#allocation4 + $0x1f0] sm:$0xff]
    %v955 = vld [vmem:[#allocation4 + $0x1f8] sm:$0xff]
    %v956 = vld [vmem:[#allocation2 + $0x60] sm:$0xff]
    %v957 = vld [vmem:[#allocation2 + $0x68] sm:$0xff]
    %v958 = vld [vmem:[#allocation2 + $0x70] sm:$0xff]
    %v959 = vld [vmem:[#allocation2 + $0x78] sm:$0xff]
    %960 = vmatpush.msra.mxu0 %v952
    %961 = vmatpush.msra.mxu0 %v948
    %962 = vmatpush.msra.mxu0 %v944
    %963 = vmatpush.msra.mxu0 %v940
    %964 = vmatpush.msra.mxu0 %v936
    %965 = vmatpush.msra.mxu0 %v932
    %966 = vmatpush.msra.mxu0 %v928
    %967 = vmatpush.msra.mxu0 %v924
    %968 = vmatpush.msra.mxu0 %v920
    %969 = vmatpush.msra.mxu0 %v916
    %970 = vmatpush.msra.mxu0 %v912
    %971 = vmatpush.msra.mxu0 %v908
    %972 = vmatpush.msra.mxu0 %v904
    %973 = vmatpush.msra.mxu0 %v900
    %974 = vmatpush.msra.mxu0 %v896
    %975 = vmatpush.msra.mxu0 %v892
    %976 = vmatmul.f32.gmra.mxu0 %v890
    %v977 = vpop.f32.mrf.mxu0
    %v978 = vadd.f32 %v956, %v977
    %979 = vdwg.mxu0
    %980 = vmatpush.msra.mxu0 %v953
    %981 = vmatpush.msra.mxu0 %v949
    %982 = vmatpush.msra.mxu0 %v945
    %983 = vmatpush.msra.mxu0 %v941
    %984 = vmatpush.msra.mxu0 %v937
    %985 = vmatpush.msra.mxu0 %v933
    %986 = vmatpush.msra.mxu0 %v929
    %987 = vmatpush.msra.mxu0 %v925
    %988 = vmatpush.msra.mxu0 %v921
    %989 = vmatpush.msra.mxu0 %v917
    %990 = vmatpush.msra.mxu0 %v913
    %991 = vmatpush.msra.mxu0 %v909
    %992 = vmatpush.msra.mxu0 %v905
    %993 = vmatpush.msra.mxu0 %v901
    %994 = vmatpush.msra.mxu0 %v897
    %995 = vmatpush.msra.mxu0 %v893
    %996 = vmatmul.f32.gmra.mxu0 %v890
    %v997 = vpop.f32.mrf.mxu0
    %v998 = vadd.f32 %v957, %v997
    %999 = vdwg.mxu0
    %1000 = vmatpush.msra.mxu0 %v954
    %1001 = vmatpush.msra.mxu0 %v950
    %1002 = vmatpush.msra.mxu0 %v946
    %1003 = vmatpush.msra.mxu0 %v942
    %1004 = vmatpush.msra.mxu0 %v938
    %1005 = vmatpush.msra.mxu0 %v934
    %1006 = vmatpush.msra.mxu0 %v930
    %1007 = vmatpush.msra.mxu0 %v926
    %1008 = vmatpush.msra.mxu0 %v922
    %1009 = vmatpush.msra.mxu0 %v918
    %1010 = vmatpush.msra.mxu0 %v914
    %1011 = vmatpush.msra.mxu0 %v910
    %1012 = vmatpush.msra.mxu0 %v906
    %1013 = vmatpush.msra.mxu0 %v902
    %1014 = vmatpush.msra.mxu0 %v898
    %1015 = vmatpush.msra.mxu0 %v894
    %1016 = vmatmul.f32.gmra.mxu0 %v890
    %v1017 = vpop.f32.mrf.mxu0
    %v1018 = vadd.f32 %v958, %v1017
    %1019 = vdwg.mxu0
    %1020 = vmatpush.msra.mxu0 %v955
    %1021 = vmatpush.msra.mxu0 %v951
    %1022 = vmatpush.msra.mxu0 %v947
    %1023 = vmatpush.msra.mxu0 %v943
    %1024 = vmatpush.msra.mxu0 %v939
    %1025 = vmatpush.msra.mxu0 %v935
    %1026 = vmatpush.msra.mxu0 %v931
    %1027 = vmatpush.msra.mxu0 %v927
    %1028 = vmatpush.msra.mxu0 %v923
    %1029 = vmatpush.msra.mxu0 %v919
    %1030 = vmatpush.msra.mxu0 %v915
    %1031 = vmatpush.msra.mxu0 %v911
    %1032 = vmatpush.msra.mxu0 %v907
    %1033 = vmatpush.msra.mxu0 %v903
    %1034 = vmatpush.msra.mxu0 %v899
    %1035 = vmatpush.msra.mxu0 %v895
    %1036 = vmatmul.f32.gmra.mxu0 %v890
    %v1037 = vpop.f32.mrf.mxu0
    %v1038 = vadd.f32 %v959, %v1037
    %1039 = vdwg.mxu0
    %v1040 = vxor.u32 %v978, 2147483648
    %v1041 = vxor.u32 %v998, 2147483648
    %v1042 = vmul.f32 %v1040, 1.442695
    %v1043 = vpow.pop %v1042
    %v1044 = vmul.f32 %v1041, 1.442695
    %v1045 = vpow.pop %v1044
    %v1046 = vadd.f32 %v1043, 1.0
    %v1047 = vadd.f32 %v1045, 1.0
    %v1048 = vrcp.pop %v1046
    %v1049 = vmul.f32 %v1046, %v1048
    %v1050 = vsub.f32 1.0, %v1049
    %v1051 = vmul.f32 %v1048, %v1050
    %v1052 = vadd.f32 %v1048, %v1051
    %vm1053 = vweird.f32 %v1046
    %vm1054 = vweird.f32 %v1048
    %vm1055 = vmor %vm1053, %vm1054
    %v1056 = vsel %vm1055, %v1048, %v1052
    %v1057 = vand.u32 2147483647, %v1046
    %vm1058 = vcmp.eq.f32.partialorder %v1057, 8.507059e+37
    %v1059 = vand.u32 %v1046, 2147483648
    %v1060 = vor.u32 1.1754944e-38, %v1059
    %v1061 = vsel %vm1058, %v1060, %v1056
    %v1062 = vmul.f32 1.0, %v1061
    %v1063 = vrcp.pop %v1047
    %v1064 = vmul.f32 %v1047, %v1063
    %v1065 = vsub.f32 1.0, %v1064
    %v1066 = vmul.f32 %v1063, %v1065
    %v1067 = vadd.f32 %v1063, %v1066
    %vm1068 = vweird.f32 %v1047
    %vm1069 = vweird.f32 %v1063
    %vm1070 = vmor %vm1068, %vm1069
    %v1071 = vsel %vm1070, %v1063, %v1067
    %v1072 = vand.u32 2147483647, %v1047
    %vm1073 = vcmp.eq.f32.partialorder %v1072, 8.507059e+37
    %v1074 = vand.u32 %v1047, 2147483648
    %v1075 = vor.u32 1.1754944e-38, %v1074
    %v1076 = vsel %vm1073, %v1075, %v1071
    %v1077 = vmul.f32 1.0, %v1076
    %v1078 = vmul.f32 %v1062, %v1018
    %v1079 = vadd.f32 %v1038, %v1078
    %v1080 = vtanh.pop %v1079
    %v1081 = vsub.f32 %v890, %v1080
    %v1082 = vmul.f32 %v1077, %v1081
    %v1083 = vadd.f32 %v1080, %v1082
    %1084 = vst [vmem:[#allocation3 + $0x10] sm:$0xff] %v1083
    %v1085 = vld [vmem:[#allocation4] sm:$0xff]
    %v1086 = vld [vmem:[#allocation4 + $0x8] sm:$0xff]
    %v1087 = vld [vmem:[#allocation4 + $0x10] sm:$0xff]
    %v1088 = vld [vmem:[#allocation4 + $0x18] sm:$0xff]
    %v1089 = vld [vmem:[#allocation4 + $0x20] sm:$0xff]
    %v1090 = vld [vmem:[#allocation4 + $0x28] sm:$0xff]
    %v1091 = vld [vmem:[#allocation4 + $0x30] sm:$0xff]
    %v1092 = vld [vmem:[#allocation4 + $0x38] sm:$0xff]
    %v1093 = vld [vmem:[#allocation4 + $0x40] sm:$0xff]
    %v1094 = vld [vmem:[#allocation4 + $0x48] sm:$0xff]
    %v1095 = vld [vmem:[#allocation4 + $0x50] sm:$0xff]
    %v1096 = vld [vmem:[#allocation4 + $0x58] sm:$0xff]
    %v1097 = vld [vmem:[#allocation4 + $0x60] sm:$0xff]
    %v1098 = vld [vmem:[#allocation4 + $0x68] sm:$0xff]
    %v1099 = vld [vmem:[#allocation4 + $0x70] sm:$0xff]
    %v1100 = vld [vmem:[#allocation4 + $0x78] sm:$0xff]
    %v1101 = vld [vmem:[#allocation4 + $0x80] sm:$0xff]
    %v1102 = vld [vmem:[#allocation4 + $0x88] sm:$0xff]
    %v1103 = vld [vmem:[#allocation4 + $0x90] sm:$0xff]
    %v1104 = vld [vmem:[#allocation4 + $0x98] sm:$0xff]
    %v1105 = vld [vmem:[#allocation4 + $0xa0] sm:$0xff]
    %v1106 = vld [vmem:[#allocation4 + $0xa8] sm:$0xff]
    %v1107 = vld [vmem:[#allocation4 + $0xb0] sm:$0xff]
    %v1108 = vld [vmem:[#allocation4 + $0xb8] sm:$0xff]
    %v1109 = vld [vmem:[#allocation4 + $0xc0] sm:$0xff]
    %v1110 = vld [vmem:[#allocation4 + $0xc8] sm:$0xff]
    %v1111 = vld [vmem:[#allocation4 + $0xd0] sm:$0xff]
    %v1112 = vld [vmem:[#allocation4 + $0xd8] sm:$0xff]
    %v1113 = vld [vmem:[#allocation4 + $0xe0] sm:$0xff]
    %v1114 = vld [vmem:[#allocation4 + $0xe8] sm:$0xff]
    %v1115 = vld [vmem:[#allocation4 + $0xf0] sm:$0xff]
    %v1116 = vld [vmem:[#allocation4 + $0xf8] sm:$0xff]
    %v1117 = vld [vmem:[#allocation4 + $0x100] sm:$0xff]
    %v1118 = vld [vmem:[#allocation4 + $0x108] sm:$0xff]
    %v1119 = vld [vmem:[#allocation4 + $0x110] sm:$0xff]
    %v1120 = vld [vmem:[#allocation4 + $0x118] sm:$0xff]
    %v1121 = vld [vmem:[#allocation4 + $0x120] sm:$0xff]
    %v1122 = vld [vmem:[#allocation4 + $0x128] sm:$0xff]
    %v1123 = vld [vmem:[#allocation4 + $0x130] sm:$0xff]
    %v1124 = vld [vmem:[#allocation4 + $0x138] sm:$0xff]
    %v1125 = vld [vmem:[#allocation4 + $0x140] sm:$0xff]
    %v1126 = vld [vmem:[#allocation4 + $0x148] sm:$0xff]
    %v1127 = vld [vmem:[#allocation4 + $0x150] sm:$0xff]
    %v1128 = vld [vmem:[#allocation4 + $0x158] sm:$0xff]
    %v1129 = vld [vmem:[#allocation4 + $0x160] sm:$0xff]
    %v1130 = vld [vmem:[#allocation4 + $0x168] sm:$0xff]
    %v1131 = vld [vmem:[#allocation4 + $0x170] sm:$0xff]
    %v1132 = vld [vmem:[#allocation4 + $0x178] sm:$0xff]
    %v1133 = vld [vmem:[#allocation4 + $0x180] sm:$0xff]
    %v1134 = vld [vmem:[#allocation4 + $0x188] sm:$0xff]
    %v1135 = vld [vmem:[#allocation4 + $0x190] sm:$0xff]
    %v1136 = vld [vmem:[#allocation4 + $0x198] sm:$0xff]
    %v1137 = vld [vmem:[#allocation4 + $0x1a0] sm:$0xff]
    %v1138 = vld [vmem:[#allocation4 + $0x1a8] sm:$0xff]
    %v1139 = vld [vmem:[#allocation4 + $0x1b0] sm:$0xff]
    %v1140 = vld [vmem:[#allocation4 + $0x1b8] sm:$0xff]
    %v1141 = vld [vmem:[#allocation4 + $0x1c0] sm:$0xff]
    %v1142 = vld [vmem:[#allocation4 + $0x1c8] sm:$0xff]
    %v1143 = vld [vmem:[#allocation4 + $0x1d0] sm:$0xff]
    %v1144 = vld [vmem:[#allocation4 + $0x1d8] sm:$0xff]
    %v1145 = vld [vmem:[#allocation4 + $0x1e0] sm:$0xff]
    %v1146 = vld [vmem:[#allocation4 + $0x1e8] sm:$0xff]
    %v1147 = vld [vmem:[#allocation4 + $0x1f0] sm:$0xff]
    %v1148 = vld [vmem:[#allocation4 + $0x1f8] sm:$0xff]
    %v1149 = vld [vmem:[#allocation2 + $0x80] sm:$0xff]
    %v1150 = vld [vmem:[#allocation2 + $0x88] sm:$0xff]
    %v1151 = vld [vmem:[#allocation2 + $0x90] sm:$0xff]
    %v1152 = vld [vmem:[#allocation2 + $0x98] sm:$0xff]
    %1153 = vmatpush.msra.mxu0 %v1145
    %1154 = vmatpush.msra.mxu0 %v1141
    %1155 = vmatpush.msra.mxu0 %v1137
    %1156 = vmatpush.msra.mxu0 %v1133
    %1157 = vmatpush.msra.mxu0 %v1129
    %1158 = vmatpush.msra.mxu0 %v1125
    %1159 = vmatpush.msra.mxu0 %v1121
    %1160 = vmatpush.msra.mxu0 %v1117
    %1161 = vmatpush.msra.mxu0 %v1113
    %1162 = vmatpush.msra.mxu0 %v1109
    %1163 = vmatpush.msra.mxu0 %v1105
    %1164 = vmatpush.msra.mxu0 %v1101
    %1165 = vmatpush.msra.mxu0 %v1097
    %1166 = vmatpush.msra.mxu0 %v1093
    %1167 = vmatpush.msra.mxu0 %v1089
    %1168 = vmatpush.msra.mxu0 %v1085
    %1169 = vmatmul.f32.gmra.mxu0 %v1083
    %v1170 = vpop.f32.mrf.mxu0
    %v1171 = vadd.f32 %v1149, %v1170
    %1172 = vdwg.mxu0
    %1173 = vmatpush.msra.mxu0 %v1146
    %1174 = vmatpush.msra.mxu0 %v1142
    %1175 = vmatpush.msra.mxu0 %v1138
    %1176 = vmatpush.msra.mxu0 %v1134
    %1177 = vmatpush.msra.mxu0 %v1130
    %1178 = vmatpush.msra.mxu0 %v1126
    %1179 = vmatpush.msra.mxu0 %v1122
    %1180 = vmatpush.msra.mxu0 %v1118
    %1181 = vmatpush.msra.mxu0 %v1114
    %1182 = vmatpush.msra.mxu0 %v1110
    %1183 = vmatpush.msra.mxu0 %v1106
    %1184 = vmatpush.msra.mxu0 %v1102
    %1185 = vmatpush.msra.mxu0 %v1098
    %1186 = vmatpush.msra.mxu0 %v1094
    %1187 = vmatpush.msra.mxu0 %v1090
    %1188 = vmatpush.msra.mxu0 %v1086
    %1189 = vmatmul.f32.gmra.mxu0 %v1083
    %v1190 = vpop.f32.mrf.mxu0
    %v1191 = vadd.f32 %v1150, %v1190
    %1192 = vdwg.mxu0
    %1193 = vmatpush.msra.mxu0 %v1147
    %1194 = vmatpush.msra.mxu0 %v1143
    %1195 = vmatpush.msra.mxu0 %v1139
    %1196 = vmatpush.msra.mxu0 %v1135
    %1197 = vmatpush.msra.mxu0 %v1131
    %1198 = vmatpush.msra.mxu0 %v1127
    %1199 = vmatpush.msra.mxu0 %v1123
    %1200 = vmatpush.msra.mxu0 %v1119
    %1201 = vmatpush.msra.mxu0 %v1115
    %1202 = vmatpush.msra.mxu0 %v1111
    %1203 = vmatpush.msra.mxu0 %v1107
    %1204 = vmatpush.msra.mxu0 %v1103
    %1205 = vmatpush.msra.mxu0 %v1099
    %1206 = vmatpush.msra.mxu0 %v1095
    %1207 = vmatpush.msra.mxu0 %v1091
    %1208 = vmatpush.msra.mxu0 %v1087
    %1209 = vmatmul.f32.gmra.mxu0 %v1083
    %v1210 = vpop.f32.mrf.mxu0
    %v1211 = vadd.f32 %v1151, %v1210
    %1212 = vdwg.mxu0
    %1213 = vmatpush.msra.mxu0 %v1148
    %1214 = vmatpush.msra.mxu0 %v1144
    %1215 = vmatpush.msra.mxu0 %v1140
    %1216 = vmatpush.msra.mxu0 %v1136
    %1217 = vmatpush.msra.mxu0 %v1132
    %1218 = vmatpush.msra.mxu0 %v1128
    %1219 = vmatpush.msra.mxu0 %v1124
    %1220 = vmatpush.msra.mxu0 %v1120
    %1221 = vmatpush.msra.mxu0 %v1116
    %1222 = vmatpush.msra.mxu0 %v1112
    %1223 = vmatpush.msra.mxu0 %v1108
    %1224 = vmatpush.msra.mxu0 %v1104
    %1225 = vmatpush.msra.mxu0 %v1100
    %1226 = vmatpush.msra.mxu0 %v1096
    %1227 = vmatpush.msra.mxu0 %v1092
    %1228 = vmatpush.msra.mxu0 %v1088
    %1229 = vmatmul.f32.gmra.mxu0 %v1083
    %v1230 = vpop.f32.mrf.mxu0
    %v1231 = vadd.f32 %v1152, %v1230
    %1232 = vdwg.mxu0
    %v1233 = vxor.u32 %v1171, 2147483648
    %v1234 = vxor.u32 %v1191, 2147483648
    %v1235 = vmul.f32 %v1233, 1.442695
    %v1236 = vpow.pop %v1235
    %v1237 = vmul.f32 %v1234, 1.442695
    %v1238 = vpow.pop %v1237
    %v1239 = vadd.f32 %v1236, 1.0
    %v1240 = vadd.f32 %v1238, 1.0
    %v1241 = vrcp.pop %v1239
    %v1242 = vmul.f32 %v1239, %v1241
    %v1243 = vsub.f32 1.0, %v1242
    %v1244 = vmul.f32 %v1241, %v1243
    %v1245 = vadd.f32 %v1241, %v1244
    %vm1246 = vweird.f32 %v1239
    %vm1247 = vweird.f32 %v1241
    %vm1248 = vmor %vm1246, %vm1247
    %v1249 = vsel %vm1248, %v1241, %v1245
    %v1250 = vand.u32 2147483647, %v1239
    %vm1251 = vcmp.eq.f32.partialorder %v1250, 8.507059e+37
    %v1252 = vand.u32 %v1239, 2147483648
    %v1253 = vor.u32 1.1754944e-38, %v1252
    %v1254 = vsel %vm1251, %v1253, %v1249
    %v1255 = vmul.f32 1.0, %v1254
    %v1256 = vrcp.pop %v1240
    %v1257 = vmul.f32 %v1240, %v1256
    %v1258 = vsub.f32 1.0, %v1257
    %v1259 = vmul.f32 %v1256, %v1258
    %v1260 = vadd.f32 %v1256, %v1259
    %vm1261 = vweird.f32 %v1240
    %vm1262 = vweird.f32 %v1256
    %vm1263 = vmor %vm1261, %vm1262
    %v1264 = vsel %vm1263, %v1256, %v1260
    %v1265 = vand.u32 2147483647, %v1240
    %vm1266 = vcmp.eq.f32.partialorder %v1265, 8.507059e+37
    %v1267 = vand.u32 %v1240, 2147483648
    %v1268 = vor.u32 1.1754944e-38, %v1267
    %v1269 = vsel %vm1266, %v1268, %v1264
    %v1270 = vmul.f32 1.0, %v1269
    %v1271 = vmul.f32 %v1255, %v1211
    %v1272 = vadd.f32 %v1231, %v1271
    %v1273 = vtanh.pop %v1272
    %v1274 = vsub.f32 %v1083, %v1273
    %v1275 = vmul.f32 %v1270, %v1274
    %v1276 = vadd.f32 %v1273, %v1275
    %1277 = vst [vmem:[#allocation3 + $0x18] sm:$0xff] %v1276
    %v1278 = vld [vmem:[#allocation4] sm:$0xff]
    %v1279 = vld [vmem:[#allocation4 + $0x8] sm:$0xff]
    %v1280 = vld [vmem:[#allocation4 + $0x10] sm:$0xff]
    %v1281 = vld [vmem:[#allocation4 + $0x18] sm:$0xff]
    %v1282 = vld [vmem:[#allocation4 + $0x20] sm:$0xff]
    %v1283 = vld [vmem:[#allocation4 + $0x28] sm:$0xff]
    %v1284 = vld [vmem:[#allocation4 + $0x30] sm:$0xff]
    %v1285 = vld [vmem:[#allocation4 + $0x38] sm:$0xff]
    %v1286 = vld [vmem:[#allocation4 + $0x40] sm:$0xff]
    %v1287 = vld [vmem:[#allocation4 + $0x48] sm:$0xff]
    %v1288 = vld [vmem:[#allocation4 + $0x50] sm:$0xff]
    %v1289 = vld [vmem:[#allocation4 + $0x58] sm:$0xff]
    %v1290 = vld [vmem:[#allocation4 + $0x60] sm:$0xff]
    %v1291 = vld [vmem:[#allocation4 + $0x68] sm:$0xff]
    %v1292 = vld [vmem:[#allocation4 + $0x70] sm:$0xff]
    %v1293 = vld [vmem:[#allocation4 + $0x78] sm:$0xff]
    %v1294 = vld [vmem:[#allocation4 + $0x80] sm:$0xff]
    %v1295 = vld [vmem:[#allocation4 + $0x88] sm:$0xff]
    %v1296 = vld [vmem:[#allocation4 + $0x90] sm:$0xff]
    %v1297 = vld [vmem:[#allocation4 + $0x98] sm:$0xff]
    %v1298 = vld [vmem:[#allocation4 + $0xa0] sm:$0xff]
    %v1299 = vld [vmem:[#allocation4 + $0xa8] sm:$0xff]
    %v1300 = vld [vmem:[#allocation4 + $0xb0] sm:$0xff]
    %v1301 = vld [vmem:[#allocation4 + $0xb8] sm:$0xff]
    %v1302 = vld [vmem:[#allocation4 + $0xc0] sm:$0xff]
    %v1303 = vld [vmem:[#allocation4 + $0xc8] sm:$0xff]
    %v1304 = vld [vmem:[#allocation4 + $0xd0] sm:$0xff]
    %v1305 = vld [vmem:[#allocation4 + $0xd8] sm:$0xff]
    %v1306 = vld [vmem:[#allocation4 + $0xe0] sm:$0xff]
    %v1307 = vld [vmem:[#allocation4 + $0xe8] sm:$0xff]
    %v1308 = vld [vmem:[#allocation4 + $0xf0] sm:$0xff]
    %v1309 = vld [vmem:[#allocation4 + $0xf8] sm:$0xff]
    %v1310 = vld [vmem:[#allocation4 + $0x100] sm:$0xff]
    %v1311 = vld [vmem:[#allocation4 + $0x108] sm:$0xff]
    %v1312 = vld [vmem:[#allocation4 + $0x110] sm:$0xff]
    %v1313 = vld [vmem:[#allocation4 + $0x118] sm:$0xff]
    %v1314 = vld [vmem:[#allocation4 + $0x120] sm:$0xff]
    %v1315 = vld [vmem:[#allocation4 + $0x128] sm:$0xff]
    %v1316 = vld [vmem:[#allocation4 + $0x130] sm:$0xff]
    %v1317 = vld [vmem:[#allocation4 + $0x138] sm:$0xff]
    %v1318 = vld [vmem:[#allocation4 + $0x140] sm:$0xff]
    %v1319 = vld [vmem:[#allocation4 + $0x148] sm:$0xff]
    %v1320 = vld [vmem:[#allocation4 + $0x150] sm:$0xff]
    %v1321 = vld [vmem:[#allocation4 + $0x158] sm:$0xff]
    %v1322 = vld [vmem:[#allocation4 + $0x160] sm:$0xff]
    %v1323 = vld [vmem:[#allocation4 + $0x168] sm:$0xff]
    %v1324 = vld [vmem:[#allocation4 + $0x170] sm:$0xff]
    %v1325 = vld [vmem:[#allocation4 + $0x178] sm:$0xff]
    %v1326 = vld [vmem:[#allocation4 + $0x180] sm:$0xff]
    %v1327 = vld [vmem:[#allocation4 + $0x188] sm:$0xff]
    %v1328 = vld [vmem:[#allocation4 + $0x190] sm:$0xff]
    %v1329 = vld [vmem:[#allocation4 + $0x198] sm:$0xff]
    %v1330 = vld [vmem:[#allocation4 + $0x1a0] sm:$0xff]
    %v1331 = vld [vmem:[#allocation4 + $0x1a8] sm:$0xff]
    %v1332 = vld [vmem:[#allocation4 + $0x1b0] sm:$0xff]
    %v1333 = vld [vmem:[#allocation4 + $0x1b8] sm:$0xff]
    %v1334 = vld [vmem:[#allocation4 + $0x1c0] sm:$0xff]
    %v1335 = vld [vmem:[#allocation4 + $0x1c8] sm:$0xff]
    %v1336 = vld [vmem:[#allocation4 + $0x1d0] sm:$0xff]
    %v1337 = vld [vmem:[#allocation4 + $0x1d8] sm:$0xff]
    %v1338 = vld [vmem:[#allocation4 + $0x1e0] sm:$0xff]
    %v1339 = vld [vmem:[#allocation4 + $0x1e8] sm:$0xff]
    %v1340 = vld [vmem:[#allocation4 + $0x1f0] sm:$0xff]
    %v1341 = vld [vmem:[#allocation4 + $0x1f8] sm:$0xff]
    %v1342 = vld [vmem:[#allocation2 + $0xa0] sm:$0xff]
    %v1343 = vld [vmem:[#allocation2 + $0xa8] sm:$0xff]
    %v1344 = vld [vmem:[#allocation2 + $0xb0] sm:$0xff]
    %v1345 = vld [vmem:[#allocation2 + $0xb8] sm:$0xff]
    %1346 = vmatpush.msra.mxu0 %v1338
    %1347 = vmatpush.msra.mxu0 %v1334
    %1348 = vmatpush.msra.mxu0 %v1330
    %1349 = vmatpush.msra.mxu0 %v1326
    %1350 = vmatpush.msra.mxu0 %v1322
    %1351 = vmatpush.msra.mxu0 %v1318
    %1352 = vmatpush.msra.mxu0 %v1314
    %1353 = vmatpush.msra.mxu0 %v1310
    %1354 = vmatpush.msra.mxu0 %v1306
    %1355 = vmatpush.msra.mxu0 %v1302
    %1356 = vmatpush.msra.mxu0 %v1298
    %1357 = vmatpush.msra.mxu0 %v1294
    %1358 = vmatpush.msra.mxu0 %v1290
    %1359 = vmatpush.msra.mxu0 %v1286
    %1360 = vmatpush.msra.mxu0 %v1282
    %1361 = vmatpush.msra.mxu0 %v1278
    %1362 = vmatmul.f32.gmra.mxu0 %v1276
    %v1363 = vpop.f32.mrf.mxu0
    %v1364 = vadd.f32 %v1342, %v1363
    %1365 = vdwg.mxu0
    %1366 = vmatpush.msra.mxu0 %v1339
    %1367 = vmatpush.msra.mxu0 %v1335
    %1368 = vmatpush.msra.mxu0 %v1331
    %1369 = vmatpush.msra.mxu0 %v1327
    %1370 = vmatpush.msra.mxu0 %v1323
    %1371 = vmatpush.msra.mxu0 %v1319
    %1372 = vmatpush.msra.mxu0 %v1315
    %1373 = vmatpush.msra.mxu0 %v1311
    %1374 = vmatpush.msra.mxu0 %v1307
    %1375 = vmatpush.msra.mxu0 %v1303
    %1376 = vmatpush.msra.mxu0 %v1299
    %1377 = vmatpush.msra.mxu0 %v1295
    %1378 = vmatpush.msra.mxu0 %v1291
    %1379 = vmatpush.msra.mxu0 %v1287
    %1380 = vmatpush.msra.mxu0 %v1283
    %1381 = vmatpush.msra.mxu0 %v1279
    %1382 = vmatmul.f32.gmra.mxu0 %v1276
    %v1383 = vpop.f32.mrf.mxu0
    %v1384 = vadd.f32 %v1343, %v1383
    %1385 = vdwg.mxu0
    %1386 = vmatpush.msra.mxu0 %v1340
    %1387 = vmatpush.msra.mxu0 %v1336
    %1388 = vmatpush.msra.mxu0 %v1332
    %1389 = vmatpush.msra.mxu0 %v1328
    %1390 = vmatpush.msra.mxu0 %v1324
    %1391 = vmatpush.msra.mxu0 %v1320
    %1392 = vmatpush.msra.mxu0 %v1316
    %1393 = vmatpush.msra.mxu0 %v1312
    %1394 = vmatpush.msra.mxu0 %v1308
    %1395 = vmatpush.msra.mxu0 %v1304
    %1396 = vmatpush.msra.mxu0 %v1300
    %1397 = vmatpush.msra.mxu0 %v1296
    %1398 = vmatpush.msra.mxu0 %v1292
    %1399 = vmatpush.msra.mxu0 %v1288
    %1400 = vmatpush.msra.mxu0 %v1284
    %1401 = vmatpush.msra.mxu0 %v1280
    %1402 = vmatmul.f32.gmra.mxu0 %v1276
    %v1403 = vpop.f32.mrf.mxu0
    %v1404 = vadd.f32 %v1344, %v1403
    %1405 = vdwg.mxu0
    %1406 = vmatpush.msra.mxu0 %v1341
    %1407 = vmatpush.msra.mxu0 %v1337
    %1408 = vmatpush.msra.mxu0 %v1333
    %1409 = vmatpush.msra.mxu0 %v1329
    %1410 = vmatpush.msra.mxu0 %v1325
    %1411 = vmatpush.msra.mxu0 %v1321
    %1412 = vmatpush.msra.mxu0 %v1317
    %1413 = vmatpush.msra.mxu0 %v1313
    %1414 = vmatpush.msra.mxu0 %v1309
    %1415 = vmatpush.msra.mxu0 %v1305
    %1416 = vmatpush.msra.mxu0 %v1301
    %1417 = vmatpush.msra.mxu0 %v1297
    %1418 = vmatpush.msra.mxu0 %v1293
    %1419 = vmatpush.msra.mxu0 %v1289
    %1420 = vmatpush.msra.mxu0 %v1285
    %1421 = vmatpush.msra.mxu0 %v1281
    %1422 = vmatmul.f32.gmra.mxu0 %v1276
    %v1423 = vpop.f32.mrf.mxu0
    %v1424 = vadd.f32 %v1345, %v1423
    %1425 = vdwg.mxu0
    %v1426 = vxor.u32 %v1364, 2147483648
    %v1427 = vxor.u32 %v1384, 2147483648
    %v1428 = vmul.f32 %v1426, 1.442695
    %v1429 = vpow.pop %v1428
    %v1430 = vmul.f32 %v1427, 1.442695
    %v1431 = vpow.pop %v1430
    %v1432 = vadd.f32 %v1429, 1.0
    %v1433 = vadd.f32 %v1431, 1.0
    %v1434 = vrcp.pop %v1432
    %v1435 = vmul.f32 %v1432, %v1434
    %v1436 = vsub.f32 1.0, %v1435
    %v1437 = vmul.f32 %v1434, %v1436
    %v1438 = vadd.f32 %v1434, %v1437
    %vm1439 = vweird.f32 %v1432
    %vm1440 = vweird.f32 %v1434
    %vm1441 = vmor %vm1439, %vm1440
    %v1442 = vsel %vm1441, %v1434, %v1438
    %v1443 = vand.u32 2147483647, %v1432
    %vm1444 = vcmp.eq.f32.partialorder %v1443, 8.507059e+37
    %v1445 = vand.u32 %v1432, 2147483648
    %v1446 = vor.u32 1.1754944e-38, %v1445
    %v1447 = vsel %vm1444, %v1446, %v1442
    %v1448 = vmul.f32 1.0, %v1447
    %v1449 = vrcp.pop %v1433
    %v1450 = vmul.f32 %v1433, %v1449
    %v1451 = vsub.f32 1.0, %v1450
    %v1452 = vmul.f32 %v1449, %v1451
    %v1453 = vadd.f32 %v1449, %v1452
    %vm1454 = vweird.f32 %v1433
    %vm1455 = vweird.f32 %v1449
    %vm1456 = vmor %vm1454, %vm1455
    %v1457 = vsel %vm1456, %v1449, %v1453
    %v1458 = vand.u32 2147483647, %v1433
    %vm1459 = vcmp.eq.f32.partialorder %v1458, 8.507059e+37
    %v1460 = vand.u32 %v1433, 2147483648
    %v1461 = vor.u32 1.1754944e-38, %v1460
    %v1462 = vsel %vm1459, %v1461, %v1457
    %v1463 = vmul.f32 1.0, %v1462
    %v1464 = vmul.f32 %v1448, %v1404
    %v1465 = vadd.f32 %v1424, %v1464
    %v1466 = vtanh.pop %v1465
    %v1467 = vsub.f32 %v1276, %v1466
    %v1468 = vmul.f32 %v1463, %v1467
    %v1469 = vadd.f32 %v1466, %v1468
    %1470 = vst [vmem:[#allocation3 + $0x20] sm:$0xff] %v1469
    %v1471 = vld [vmem:[#allocation4] sm:$0xff]
    %v1472 = vld [vmem:[#allocation4 + $0x8] sm:$0xff]
    %v1473 = vld [vmem:[#allocation4 + $0x10] sm:$0xff]
    %v1474 = vld [vmem:[#allocation4 + $0x18] sm:$0xff]
    %v1475 = vld [vmem:[#allocation4 + $0x20] sm:$0xff]
    %v1476 = vld [vmem:[#allocation4 + $0x28] sm:$0xff]
    %v1477 = vld [vmem:[#allocation4 + $0x30] sm:$0xff]
    %v1478 = vld [vmem:[#allocation4 + $0x38] sm:$0xff]
    %v1479 = vld [vmem:[#allocation4 + $0x40] sm:$0xff]
    %v1480 = vld [vmem:[#allocation4 + $0x48] sm:$0xff]
    %v1481 = vld [vmem:[#allocation4 + $0x50] sm:$0xff]
    %v1482 = vld [vmem:[#allocation4 + $0x58] sm:$0xff]
    %v1483 = vld [vmem:[#allocation4 + $0x60] sm:$0xff]
    %v1484 = vld [vmem:[#allocation4 + $0x68] sm:$0xff]
    %v1485 = vld [vmem:[#allocation4 + $0x70] sm:$0xff]
    %v1486 = vld [vmem:[#allocation4 + $0x78] sm:$0xff]
    %v1487 = vld [vmem:[#allocation4 + $0x80] sm:$0xff]
    %v1488 = vld [vmem:[#allocation4 + $0x88] sm:$0xff]
    %v1489 = vld [vmem:[#allocation4 + $0x90] sm:$0xff]
    %v1490 = vld [vmem:[#allocation4 + $0x98] sm:$0xff]
    %v1491 = vld [vmem:[#allocation4 + $0xa0] sm:$0xff]
    %v1492 = vld [vmem:[#allocation4 + $0xa8] sm:$0xff]
    %v1493 = vld [vmem:[#allocation4 + $0xb0] sm:$0xff]
    %v1494 = vld [vmem:[#allocation4 + $0xb8] sm:$0xff]
    %v1495 = vld [vmem:[#allocation4 + $0xc0] sm:$0xff]
    %v1496 = vld [vmem:[#allocation4 + $0xc8] sm:$0xff]
    %v1497 = vld [vmem:[#allocation4 + $0xd0] sm:$0xff]
    %v1498 = vld [vmem:[#allocation4 + $0xd8] sm:$0xff]
    %v1499 = vld [vmem:[#allocation4 + $0xe0] sm:$0xff]
    %v1500 = vld [vmem:[#allocation4 + $0xe8] sm:$0xff]
    %v1501 = vld [vmem:[#allocation4 + $0xf0] sm:$0xff]
    %v1502 = vld [vmem:[#allocation4 + $0xf8] sm:$0xff]
    %v1503 = vld [vmem:[#allocation4 + $0x100] sm:$0xff]
    %v1504 = vld [vmem:[#allocation4 + $0x108] sm:$0xff]
    %v1505 = vld [vmem:[#allocation4 + $0x110] sm:$0xff]
    %v1506 = vld [vmem:[#allocation4 + $0x118] sm:$0xff]
    %v1507 = vld [vmem:[#allocation4 + $0x120] sm:$0xff]
    %v1508 = vld [vmem:[#allocation4 + $0x128] sm:$0xff]
    %v1509 = vld [vmem:[#allocation4 + $0x130] sm:$0xff]
    %v1510 = vld [vmem:[#allocation4 + $0x138] sm:$0xff]
    %v1511 = vld [vmem:[#allocation4 + $0x140] sm:$0xff]
    %v1512 = vld [vmem:[#allocation4 + $0x148] sm:$0xff]
    %v1513 = vld [vmem:[#allocation4 + $0x150] sm:$0xff]
    %v1514 = vld [vmem:[#allocation4 + $0x158] sm:$0xff]
    %v1515 = vld [vmem:[#allocation4 + $0x160] sm:$0xff]
    %v1516 = vld [vmem:[#allocation4 + $0x168] sm:$0xff]
    %v1517 = vld [vmem:[#allocation4 + $0x170] sm:$0xff]
    %v1518 = vld [vmem:[#allocation4 + $0x178] sm:$0xff]
    %v1519 = vld [vmem:[#allocation4 + $0x180] sm:$0xff]
    %v1520 = vld [vmem:[#allocation4 + $0x188] sm:$0xff]
    %v1521 = vld [vmem:[#allocation4 + $0x190] sm:$0xff]
    %v1522 = vld [vmem:[#allocation4 + $0x198] sm:$0xff]
    %v1523 = vld [vmem:[#allocation4 + $0x1a0] sm:$0xff]
    %v1524 = vld [vmem:[#allocation4 + $0x1a8] sm:$0xff]
    %v1525 = vld [vmem:[#allocation4 + $0x1b0] sm:$0xff]
    %v1526 = vld [vmem:[#allocation4 + $0x1b8] sm:$0xff]
    %v1527 = vld [vmem:[#allocation4 + $0x1c0] sm:$0xff]
    %v1528 = vld [vmem:[#allocation4 + $0x1c8] sm:$0xff]
    %v1529 = vld [vmem:[#allocation4 + $0x1d0] sm:$0xff]
    %v1530 = vld [vmem:[#allocation4 + $0x1d8] sm:$0xff]
    %v1531 = vld [vmem:[#allocation4 + $0x1e0] sm:$0xff]
    %v1532 = vld [vmem:[#allocation4 + $0x1e8] sm:$0xff]
    %v1533 = vld [vmem:[#allocation4 + $0x1f0] sm:$0xff]
    %v1534 = vld [vmem:[#allocation4 + $0x1f8] sm:$0xff]
    %v1535 = vld [vmem:[#allocation2 + $0xc0] sm:$0xff]
    %v1536 = vld [vmem:[#allocation2 + $0xc8] sm:$0xff]
    %v1537 = vld [vmem:[#allocation2 + $0xd0] sm:$0xff]
    %v1538 = vld [vmem:[#allocation2 + $0xd8] sm:$0xff]
    %1539 = vmatpush.msra.mxu0 %v1531
    %1540 = vmatpush.msra.mxu0 %v1527
    %1541 = vmatpush.msra.mxu0 %v1523
    %1542 = vmatpush.msra.mxu0 %v1519
    %1543 = vmatpush.msra.mxu0 %v1515
    %1544 = vmatpush.msra.mxu0 %v1511
    %1545 = vmatpush.msra.mxu0 %v1507
    %1546 = vmatpush.msra.mxu0 %v1503
    %1547 = vmatpush.msra.mxu0 %v1499
    %1548 = vmatpush.msra.mxu0 %v1495
    %1549 = vmatpush.msra.mxu0 %v1491
    %1550 = vmatpush.msra.mxu0 %v1487
    %1551 = vmatpush.msra.mxu0 %v1483
    %1552 = vmatpush.msra.mxu0 %v1479
    %1553 = vmatpush.msra.mxu0 %v1475
    %1554 = vmatpush.msra.mxu0 %v1471
    %1555 = vmatmul.f32.gmra.mxu0 %v1469
    %v1556 = vpop.f32.mrf.mxu0
    %v1557 = vadd.f32 %v1535, %v1556
    %1558 = vdwg.mxu0
    %1559 = vmatpush.msra.mxu0 %v1532
    %1560 = vmatpush.msra.mxu0 %v1528
    %1561 = vmatpush.msra.mxu0 %v1524
    %1562 = vmatpush.msra.mxu0 %v1520
    %1563 = vmatpush.msra.mxu0 %v1516
    %1564 = vmatpush.msra.mxu0 %v1512
    %1565 = vmatpush.msra.mxu0 %v1508
    %1566 = vmatpush.msra.mxu0 %v1504
    %1567 = vmatpush.msra.mxu0 %v1500
    %1568 = vmatpush.msra.mxu0 %v1496
    %1569 = vmatpush.msra.mxu0 %v1492
    %1570 = vmatpush.msra.mxu0 %v1488
    %1571 = vmatpush.msra.mxu0 %v1484
    %1572 = vmatpush.msra.mxu0 %v1480
    %1573 = vmatpush.msra.mxu0 %v1476
    %1574 = vmatpush.msra.mxu0 %v1472
    %1575 = vmatmul.f32.gmra.mxu0 %v1469
    %v1576 = vpop.f32.mrf.mxu0
    %v1577 = vadd.f32 %v1536, %v1576
    %1578 = vdwg.mxu0
    %1579 = vmatpush.msra.mxu0 %v1533
    %1580 = vmatpush.msra.mxu0 %v1529
    %1581 = vmatpush.msra.mxu0 %v1525
    %1582 = vmatpush.msra.mxu0 %v1521
    %1583 = vmatpush.msra.mxu0 %v1517
    %1584 = vmatpush.msra.mxu0 %v1513
    %1585 = vmatpush.msra.mxu0 %v1509
    %1586 = vmatpush.msra.mxu0 %v1505
    %1587 = vmatpush.msra.mxu0 %v1501
    %1588 = vmatpush.msra.mxu0 %v1497
    %1589 = vmatpush.msra.mxu0 %v1493
    %1590 = vmatpush.msra.mxu0 %v1489
    %1591 = vmatpush.msra.mxu0 %v1485
    %1592 = vmatpush.msra.mxu0 %v1481
    %1593 = vmatpush.msra.mxu0 %v1477
    %1594 = vmatpush.msra.mxu0 %v1473
    %1595 = vmatmul.f32.gmra.mxu0 %v1469
    %v1596 = vpop.f32.mrf.mxu0
    %v1597 = vadd.f32 %v1537, %v1596
    %1598 = vdwg.mxu0
    %1599 = vmatpush.msra.mxu0 %v1534
    %1600 = vmatpush.msra.mxu0 %v1530
    %1601 = vmatpush.msra.mxu0 %v1526
    %1602 = vmatpush.msra.mxu0 %v1522
    %1603 = vmatpush.msra.mxu0 %v1518
    %1604 = vmatpush.msra.mxu0 %v1514
    %1605 = vmatpush.msra.mxu0 %v1510
    %1606 = vmatpush.msra.mxu0 %v1506
    %1607 = vmatpush.msra.mxu0 %v1502
    %1608 = vmatpush.msra.mxu0 %v1498
    %1609 = vmatpush.msra.mxu0 %v1494
    %1610 = vmatpush.msra.mxu0 %v1490
    %1611 = vmatpush.msra.mxu0 %v1486
    %1612 = vmatpush.msra.mxu0 %v1482
    %1613 = vmatpush.msra.mxu0 %v1478
    %1614 = vmatpush.msra.mxu0 %v1474
    %1615 = vmatmul.f32.gmra.mxu0 %v1469
    %v1616 = vpop.f32.mrf.mxu0
    %v1617 = vadd.f32 %v1538, %v1616
    %1618 = vdwg.mxu0
    %v1619 = vxor.u32 %v1557, 2147483648
    %v1620 = vxor.u32 %v1577, 2147483648
    %v1621 = vmul.f32 %v1619, 1.442695
    %v1622 = vpow.pop %v1621
    %v1623 = vmul.f32 %v1620, 1.442695
    %v1624 = vpow.pop %v1623
    %v1625 = vadd.f32 %v1622, 1.0
    %v1626 = vadd.f32 %v1624, 1.0
    %v1627 = vrcp.pop %v1625
    %v1628 = vmul.f32 %v1625, %v1627
    %v1629 = vsub.f32 1.0, %v1628
    %v1630 = vmul.f32 %v1627, %v1629
    %v1631 = vadd.f32 %v1627, %v1630
    %vm1632 = vweird.f32 %v1625
    %vm1633 = vweird.f32 %v1627
    %vm1634 = vmor %vm1632, %vm1633
    %v1635 = vsel %vm1634, %v1627, %v1631
    %v1636 = vand.u32 2147483647, %v1625
    %vm1637 = vcmp.eq.f32.partialorder %v1636, 8.507059e+37
    %v1638 = vand.u32 %v1625, 2147483648
    %v1639 = vor.u32 1.1754944e-38, %v1638
    %v1640 = vsel %vm1637, %v1639, %v1635
    %v1641 = vmul.f32 1.0, %v1640
    %v1642 = vrcp.pop %v1626
    %v1643 = vmul.f32 %v1626, %v1642
    %v1644 = vsub.f32 1.0, %v1643
    %v1645 = vmul.f32 %v1642, %v1644
    %v1646 = vadd.f32 %v1642, %v1645
    %vm1647 = vweird.f32 %v1626
    %vm1648 = vweird.f32 %v1642
    %vm1649 = vmor %vm1647, %vm1648
    %v1650 = vsel %vm1649, %v1642, %v1646
    %v1651 = vand.u32 2147483647, %v1626
    %vm1652 = vcmp.eq.f32.partialorder %v1651, 8.507059e+37
    %v1653 = vand.u32 %v1626, 2147483648
    %v1654 = vor.u32 1.1754944e-38, %v1653
    %v1655 = vsel %vm1652, %v1654, %v1650
    %v1656 = vmul.f32 1.0, %v1655
    %v1657 = vmul.f32 %v1641, %v1597
    %v1658 = vadd.f32 %v1617, %v1657
    %v1659 = vtanh.pop %v1658
    %v1660 = vsub.f32 %v1469, %v1659
    %v1661 = vmul.f32 %v1656, %v1660
    %v1662 = vadd.f32 %v1659, %v1661
    %1663 = vst [vmem:[#allocation3 + $0x28] sm:$0xff] %v1662
    %v1664 = vld [vmem:[#allocation4] sm:$0xff]
    %v1665 = vld [vmem:[#allocation4 + $0x8] sm:$0xff]
    %v1666 = vld [vmem:[#allocation4 + $0x10] sm:$0xff]
    %v1667 = vld [vmem:[#allocation4 + $0x18] sm:$0xff]
    %v1668 = vld [vmem:[#allocation4 + $0x20] sm:$0xff]
    %v1669 = vld [vmem:[#allocation4 + $0x28] sm:$0xff]
    %v1670 = vld [vmem:[#allocation4 + $0x30] sm:$0xff]
    %v1671 = vld [vmem:[#allocation4 + $0x38] sm:$0xff]
    %v1672 = vld [vmem:[#allocation4 + $0x40] sm:$0xff]
    %v1673 = vld [vmem:[#allocation4 + $0x48] sm:$0xff]
    %v1674 = vld [vmem:[#allocation4 + $0x50] sm:$0xff]
    %v1675 = vld [vmem:[#allocation4 + $0x58] sm:$0xff]
    %v1676 = vld [vmem:[#allocation4 + $0x60] sm:$0xff]
    %v1677 = vld [vmem:[#allocation4 + $0x68] sm:$0xff]
    %v1678 = vld [vmem:[#allocation4 + $0x70] sm:$0xff]
    %v1679 = vld [vmem:[#allocation4 + $0x78] sm:$0xff]
    %v1680 = vld [vmem:[#allocation4 + $0x80] sm:$0xff]
    %v1681 = vld [vmem:[#allocation4 + $0x88] sm:$0xff]
    %v1682 = vld [vmem:[#allocation4 + $0x90] sm:$0xff]
    %v1683 = vld [vmem:[#allocation4 + $0x98] sm:$0xff]
    %v1684 = vld [vmem:[#allocation4 + $0xa0] sm:$0xff]
    %v1685 = vld [vmem:[#allocation4 + $0xa8] sm:$0xff]
    %v1686 = vld [vmem:[#allocation4 + $0xb0] sm:$0xff]
    %v1687 = vld [vmem:[#allocation4 + $0xb8] sm:$0xff]
    %v1688 = vld [vmem:[#allocation4 + $0xc0] sm:$0xff]
    %v1689 = vld [vmem:[#allocation4 + $0xc8] sm:$0xff]
    %v1690 = vld [vmem:[#allocation4 + $0xd0] sm:$0xff]
    %v1691 = vld [vmem:[#allocation4 + $0xd8] sm:$0xff]
    %v1692 = vld [vmem:[#allocation4 + $0xe0] sm:$0xff]
    %v1693 = vld [vmem:[#allocation4 + $0xe8] sm:$0xff]
    %v1694 = vld [vmem:[#allocation4 + $0xf0] sm:$0xff]
    %v1695 = vld [vmem:[#allocation4 + $0xf8] sm:$0xff]
    %v1696 = vld [vmem:[#allocation4 + $0x100] sm:$0xff]
    %v1697 = vld [vmem:[#allocation4 + $0x108] sm:$0xff]
    %v1698 = vld [vmem:[#allocation4 + $0x110] sm:$0xff]
    %v1699 = vld [vmem:[#allocation4 + $0x118] sm:$0xff]
    %v1700 = vld [vmem:[#allocation4 + $0x120] sm:$0xff]
    %v1701 = vld [vmem:[#allocation4 + $0x128] sm:$0xff]
    %v1702 = vld [vmem:[#allocation4 + $0x130] sm:$0xff]
    %v1703 = vld [vmem:[#allocation4 + $0x138] sm:$0xff]
    %v1704 = vld [vmem:[#allocation4 + $0x140] sm:$0xff]
    %v1705 = vld [vmem:[#allocation4 + $0x148] sm:$0xff]
    %v1706 = vld [vmem:[#allocation4 + $0x150] sm:$0xff]
    %v1707 = vld [vmem:[#allocation4 + $0x158] sm:$0xff]
    %v1708 = vld [vmem:[#allocation4 + $0x160] sm:$0xff]
    %v1709 = vld [vmem:[#allocation4 + $0x168] sm:$0xff]
    %v1710 = vld [vmem:[#allocation4 + $0x170] sm:$0xff]
    %v1711 = vld [vmem:[#allocation4 + $0x178] sm:$0xff]
    %v1712 = vld [vmem:[#allocation4 + $0x180] sm:$0xff]
    %v1713 = vld [vmem:[#allocation4 + $0x188] sm:$0xff]
    %v1714 = vld [vmem:[#allocation4 + $0x190] sm:$0xff]
    %v1715 = vld [vmem:[#allocation4 + $0x198] sm:$0xff]
    %v1716 = vld [vmem:[#allocation4 + $0x1a0] sm:$0xff]
    %v1717 = vld [vmem:[#allocation4 + $0x1a8] sm:$0xff]
    %v1718 = vld [vmem:[#allocation4 + $0x1b0] sm:$0xff]
    %v1719 = vld [vmem:[#allocation4 + $0x1b8] sm:$0xff]
    %v1720 = vld [vmem:[#allocation4 + $0x1c0] sm:$0xff]
    %v1721 = vld [vmem:[#allocation4 + $0x1c8] sm:$0xff]
    %v1722 = vld [vmem:[#allocation4 + $0x1d0] sm:$0xff]
    %v1723 = vld [vmem:[#allocation4 + $0x1d8] sm:$0xff]
    %v1724 = vld [vmem:[#allocation4 + $0x1e0] sm:$0xff]
    %v1725 = vld [vmem:[#allocation4 + $0x1e8] sm:$0xff]
    %v1726 = vld [vmem:[#allocation4 + $0x1f0] sm:$0xff]
    %v1727 = vld [vmem:[#allocation4 + $0x1f8] sm:$0xff]
    %v1728 = vld [vmem:[#allocation2 + $0xe0] sm:$0xff]
    %v1729 = vld [vmem:[#allocation2 + $0xe8] sm:$0xff]
    %v1730 = vld [vmem:[#allocation2 + $0xf0] sm:$0xff]
    %v1731 = vld [vmem:[#allocation2 + $0xf8] sm:$0xff]
    %1732 = vmatpush.msra.mxu0 %v1724
    %1733 = vmatpush.msra.mxu0 %v1720
    %1734 = vmatpush.msra.mxu0 %v1716
    %1735 = vmatpush.msra.mxu0 %v1712
    %1736 = vmatpush.msra.mxu0 %v1708
    %1737 = vmatpush.msra.mxu0 %v1704
    %1738 = vmatpush.msra.mxu0 %v1700
    %1739 = vmatpush.msra.mxu0 %v1696
    %1740 = vmatpush.msra.mxu0 %v1692
    %1741 = vmatpush.msra.mxu0 %v1688
    %1742 = vmatpush.msra.mxu0 %v1684
    %1743 = vmatpush.msra.mxu0 %v1680
    %1744 = vmatpush.msra.mxu0 %v1676
    %1745 = vmatpush.msra.mxu0 %v1672
    %1746 = vmatpush.msra.mxu0 %v1668
    %1747 = vmatpush.msra.mxu0 %v1664
    %1748 = vmatmul.f32.gmra.mxu0 %v1662
    %v1749 = vpop.f32.mrf.mxu0
    %v1750 = vadd.f32 %v1728, %v1749
    %1751 = vdwg.mxu0
    %1752 = vmatpush.msra.mxu0 %v1725
    %1753 = vmatpush.msra.mxu0 %v1721
    %1754 = vmatpush.msra.mxu0 %v1717
    %1755 = vmatpush.msra.mxu0 %v1713
    %1756 = vmatpush.msra.mxu0 %v1709
    %1757 = vmatpush.msra.mxu0 %v1705
    %1758 = vmatpush.msra.mxu0 %v1701
    %1759 = vmatpush.msra.mxu0 %v1697
    %1760 = vmatpush.msra.mxu0 %v1693
    %1761 = vmatpush.msra.mxu0 %v1689
    %1762 = vmatpush.msra.mxu0 %v1685
    %1763 = vmatpush.msra.mxu0 %v1681
    %1764 = vmatpush.msra.mxu0 %v1677
    %1765 = vmatpush.msra.mxu0 %v1673
    %1766 = vmatpush.msra.mxu0 %v1669
    %1767 = vmatpush.msra.mxu0 %v1665
    %1768 = vmatmul.f32.gmra.mxu0 %v1662
    %v1769 = vpop.f32.mrf.mxu0
    %v1770 = vadd.f32 %v1729, %v1769
    %1771 = vdwg.mxu0
    %1772 = vmatpush.msra.mxu0 %v1726
    %1773 = vmatpush.msra.mxu0 %v1722
    %1774 = vmatpush.msra.mxu0 %v1718
    %1775 = vmatpush.msra.mxu0 %v1714
    %1776 = vmatpush.msra.mxu0 %v1710
    %1777 = vmatpush.msra.mxu0 %v1706
    %1778 = vmatpush.msra.mxu0 %v1702
    %1779 = vmatpush.msra.mxu0 %v1698
    %1780 = vmatpush.msra.mxu0 %v1694
    %1781 = vmatpush.msra.mxu0 %v1690
    %1782 = vmatpush.msra.mxu0 %v1686
    %1783 = vmatpush.msra.mxu0 %v1682
    %1784 = vmatpush.msra.mxu0 %v1678
    %1785 = vmatpush.msra.mxu0 %v1674
    %1786 = vmatpush.msra.mxu0 %v1670
    %1787 = vmatpush.msra.mxu0 %v1666
    %1788 = vmatmul.f32.gmra.mxu0 %v1662
    %v1789 = vpop.f32.mrf.mxu0
    %v1790 = vadd.f32 %v1730, %v1789
    %1791 = vdwg.mxu0
    %1792 = vmatpush.msra.mxu0 %v1727
    %1793 = vmatpush.msra.mxu0 %v1723
    %1794 = vmatpush.msra.mxu0 %v1719
    %1795 = vmatpush.msra.mxu0 %v1715
    %1796 = vmatpush.msra.mxu0 %v1711
    %1797 = vmatpush.msra.mxu0 %v1707
    %1798 = vmatpush.msra.mxu0 %v1703
    %1799 = vmatpush.msra.mxu0 %v1699
    %1800 = vmatpush.msra.mxu0 %v1695
    %1801 = vmatpush.msra.mxu0 %v1691
    %1802 = vmatpush.msra.mxu0 %v1687
    %1803 = vmatpush.msra.mxu0 %v1683
    %1804 = vmatpush.msra.mxu0 %v1679
    %1805 = vmatpush.msra.mxu0 %v1675
    %1806 = vmatpush.msra.mxu0 %v1671
    %1807 = vmatpush.msra.mxu0 %v1667
    %1808 = vmatmul.f32.gmra.mxu0 %v1662
    %v1809 = vpop.f32.mrf.mxu0
    %v1810 = vadd.f32 %v1731, %v1809
    %1811 = vdwg.mxu0
    %v1812 = vxor.u32 %v1750, 2147483648
    %v1813 = vxor.u32 %v1770, 2147483648
    %v1814 = vmul.f32 %v1812, 1.442695
    %v1815 = vpow.pop %v1814
    %v1816 = vmul.f32 %v1813, 1.442695
    %v1817 = vpow.pop %v1816
    %v1818 = vadd.f32 %v1815, 1.0
    %v1819 = vadd.f32 %v1817, 1.0
    %v1820 = vrcp.pop %v1818
    %v1821 = vmul.f32 %v1818, %v1820
    %v1822 = vsub.f32 1.0, %v1821
    %v1823 = vmul.f32 %v1820, %v1822
    %v1824 = vadd.f32 %v1820, %v1823
    %vm1825 = vweird.f32 %v1818
    %vm1826 = vweird.f32 %v1820
    %vm1827 = vmor %vm1825, %vm1826
    %v1828 = vsel %vm1827, %v1820, %v1824
    %v1829 = vand.u32 2147483647, %v1818
    %vm1830 = vcmp.eq.f32.partialorder %v1829, 8.507059e+37
    %v1831 = vand.u32 %v1818, 2147483648
    %v1832 = vor.u32 1.1754944e-38, %v1831
    %v1833 = vsel %vm1830, %v1832, %v1828
    %v1834 = vmul.f32 1.0, %v1833
    %v1835 = vrcp.pop %v1819
    %v1836 = vmul.f32 %v1819, %v1835
    %v1837 = vsub.f32 1.0, %v1836
    %v1838 = vmul.f32 %v1835, %v1837
    %v1839 = vadd.f32 %v1835, %v1838
    %vm1840 = vweird.f32 %v1819
    %vm1841 = vweird.f32 %v1835
    %vm1842 = vmor %vm1840, %vm1841
    %v1843 = vsel %vm1842, %v1835, %v1839
    %v1844 = vand.u32 2147483647, %v1819
    %vm1845 = vcmp.eq.f32.partialorder %v1844, 8.507059e+37
    %v1846 = vand.u32 %v1819, 2147483648
    %v1847 = vor.u32 1.1754944e-38, %v1846
    %v1848 = vsel %vm1845, %v1847, %v1843
    %v1849 = vmul.f32 1.0, %v1848
    %v1850 = vmul.f32 %v1834, %v1790
    %v1851 = vadd.f32 %v1810, %v1850
    %v1852 = vtanh.pop %v1851
    %v1853 = vsub.f32 %v1662, %v1852
    %v1854 = vmul.f32 %v1849, %v1853
    %v1855 = vadd.f32 %v1852, %v1854
    %1856 = vst [vmem:[#allocation3 + $0x30] sm:$0xff] %v1855
    %v1857 = vld [vmem:[#allocation4] sm:$0xff]
    %v1858 = vld [vmem:[#allocation4 + $0x8] sm:$0xff]
    %v1859 = vld [vmem:[#allocation4 + $0x10] sm:$0xff]
    %v1860 = vld [vmem:[#allocation4 + $0x18] sm:$0xff]
    %v1861 = vld [vmem:[#allocation4 + $0x20] sm:$0xff]
    %v1862 = vld [vmem:[#allocation4 + $0x28] sm:$0xff]
    %v1863 = vld [vmem:[#allocation4 + $0x30] sm:$0xff]
    %v1864 = vld [vmem:[#allocation4 + $0x38] sm:$0xff]
    %v1865 = vld [vmem:[#allocation4 + $0x40] sm:$0xff]
    %v1866 = vld [vmem:[#allocation4 + $0x48] sm:$0xff]
    %v1867 = vld [vmem:[#allocation4 + $0x50] sm:$0xff]
    %v1868 = vld [vmem:[#allocation4 + $0x58] sm:$0xff]
    %v1869 = vld [vmem:[#allocation4 + $0x60] sm:$0xff]
    %v1870 = vld [vmem:[#allocation4 + $0x68] sm:$0xff]
    %v1871 = vld [vmem:[#allocation4 + $0x70] sm:$0xff]
    %v1872 = vld [vmem:[#allocation4 + $0x78] sm:$0xff]
    %v1873 = vld [vmem:[#allocation4 + $0x80] sm:$0xff]
    %v1874 = vld [vmem:[#allocation4 + $0x88] sm:$0xff]
    %v1875 = vld [vmem:[#allocation4 + $0x90] sm:$0xff]
    %v1876 = vld [vmem:[#allocation4 + $0x98] sm:$0xff]
    %v1877 = vld [vmem:[#allocation4 + $0xa0] sm:$0xff]
    %v1878 = vld [vmem:[#allocation4 + $0xa8] sm:$0xff]
    %v1879 = vld [vmem:[#allocation4 + $0xb0] sm:$0xff]
    %v1880 = vld [vmem:[#allocation4 + $0xb8] sm:$0xff]
    %v1881 = vld [vmem:[#allocation4 + $0xc0] sm:$0xff]
    %v1882 = vld [vmem:[#allocation4 + $0xc8] sm:$0xff]
    %v1883 = vld [vmem:[#allocation4 + $0xd0] sm:$0xff]
    %v1884 = vld [vmem:[#allocation4 + $0xd8] sm:$0xff]
    %v1885 = vld [vmem:[#allocation4 + $0xe0] sm:$0xff]
    %v1886 = vld [vmem:[#allocation4 + $0xe8] sm:$0xff]
    %v1887 = vld [vmem:[#allocation4 + $0xf0] sm:$0xff]
    %v1888 = vld [vmem:[#allocation4 + $0xf8] sm:$0xff]
    %v1889 = vld [vmem:[#allocation4 + $0x100] sm:$0xff]
    %v1890 = vld [vmem:[#allocation4 + $0x108] sm:$0xff]
    %v1891 = vld [vmem:[#allocation4 + $0x110] sm:$0xff]
    %v1892 = vld [vmem:[#allocation4 + $0x118] sm:$0xff]
    %v1893 = vld [vmem:[#allocation4 + $0x120] sm:$0xff]
    %v1894 = vld [vmem:[#allocation4 + $0x128] sm:$0xff]
    %v1895 = vld [vmem:[#allocation4 + $0x130] sm:$0xff]
    %v1896 = vld [vmem:[#allocation4 + $0x138] sm:$0xff]
    %v1897 = vld [vmem:[#allocation4 + $0x140] sm:$0xff]
    %v1898 = vld [vmem:[#allocation4 + $0x148] sm:$0xff]
    %v1899 = vld [vmem:[#allocation4 + $0x150] sm:$0xff]
    %v1900 = vld [vmem:[#allocation4 + $0x158] sm:$0xff]
    %v1901 = vld [vmem:[#allocation4 + $0x160] sm:$0xff]
    %v1902 = vld [vmem:[#allocation4 + $0x168] sm:$0xff]
    %v1903 = vld [vmem:[#allocation4 + $0x170] sm:$0xff]
    %v1904 = vld [vmem:[#allocation4 + $0x178] sm:$0xff]
    %v1905 = vld [vmem:[#allocation4 + $0x180] sm:$0xff]
    %v1906 = vld [vmem:[#allocation4 + $0x188] sm:$0xff]
    %v1907 = vld [vmem:[#allocation4 + $0x190] sm:$0xff]
    %v1908 = vld [vmem:[#allocation4 + $0x198] sm:$0xff]
    %v1909 = vld [vmem:[#allocation4 + $0x1a0] sm:$0xff]
    %v1910 = vld [vmem:[#allocation4 + $0x1a8] sm:$0xff]
    %v1911 = vld [vmem:[#allocation4 + $0x1b0] sm:$0xff]
    %v1912 = vld [vmem:[#allocation4 + $0x1b8] sm:$0xff]
    %v1913 = vld [vmem:[#allocation4 + $0x1c0] sm:$0xff]
    %v1914 = vld [vmem:[#allocation4 + $0x1c8] sm:$0xff]
    %v1915 = vld [vmem:[#allocation4 + $0x1d0] sm:$0xff]
    %v1916 = vld [vmem:[#allocation4 + $0x1d8] sm:$0xff]
    %v1917 = vld [vmem:[#allocation4 + $0x1e0] sm:$0xff]
    %v1918 = vld [vmem:[#allocation4 + $0x1e8] sm:$0xff]
    %v1919 = vld [vmem:[#allocation4 + $0x1f0] sm:$0xff]
    %v1920 = vld [vmem:[#allocation4 + $0x1f8] sm:$0xff]
    %v1921 = vld [vmem:[#allocation2 + $0x100] sm:$0xff]
    %v1922 = vld [vmem:[#allocation2 + $0x108] sm:$0xff]
    %v1923 = vld [vmem:[#allocation2 + $0x110] sm:$0xff]
    %v1924 = vld [vmem:[#allocation2 + $0x118] sm:$0xff]
    %1925 = vmatpush.msra.mxu0 %v1917
    %1926 = vmatpush.msra.mxu0 %v1913
    %1927 = vmatpush.msra.mxu0 %v1909
    %1928 = vmatpush.msra.mxu0 %v1905
    %1929 = vmatpush.msra.mxu0 %v1901
    %1930 = vmatpush.msra.mxu0 %v1897
    %1931 = vmatpush.msra.mxu0 %v1893
    %1932 = vmatpush.msra.mxu0 %v1889
    %1933 = vmatpush.msra.mxu0 %v1885
    %1934 = vmatpush.msra.mxu0 %v1881
    %1935 = vmatpush.msra.mxu0 %v1877
    %1936 = vmatpush.msra.mxu0 %v1873
    %1937 = vmatpush.msra.mxu0 %v1869
    %1938 = vmatpush.msra.mxu0 %v1865
    %1939 = vmatpush.msra.mxu0 %v1861
    %1940 = vmatpush.msra.mxu0 %v1857
    %1941 = vmatmul.f32.gmra.mxu0 %v1855
    %v1942 = vpop.f32.mrf.mxu0
    %v1943 = vadd.f32 %v1921, %v1942
    %1944 = vdwg.mxu0
    %1945 = vmatpush.msra.mxu0 %v1918
    %1946 = vmatpush.msra.mxu0 %v1914
    %1947 = vmatpush.msra.mxu0 %v1910
    %1948 = vmatpush.msra.mxu0 %v1906
    %1949 = vmatpush.msra.mxu0 %v1902
    %1950 = vmatpush.msra.mxu0 %v1898
    %1951 = vmatpush.msra.mxu0 %v1894
    %1952 = vmatpush.msra.mxu0 %v1890
    %1953 = vmatpush.msra.mxu0 %v1886
    %1954 = vmatpush.msra.mxu0 %v1882
    %1955 = vmatpush.msra.mxu0 %v1878
    %1956 = vmatpush.msra.mxu0 %v1874
    %1957 = vmatpush.msra.mxu0 %v1870
    %1958 = vmatpush.msra.mxu0 %v1866
    %1959 = vmatpush.msra.mxu0 %v1862
    %1960 = vmatpush.msra.mxu0 %v1858
    %1961 = vmatmul.f32.gmra.mxu0 %v1855
    %v1962 = vpop.f32.mrf.mxu0
    %v1963 = vadd.f32 %v1922, %v1962
    %1964 = vdwg.mxu0
    %1965 = vmatpush.msra.mxu0 %v1919
    %1966 = vmatpush.msra.mxu0 %v1915
    %1967 = vmatpush.msra.mxu0 %v1911
    %1968 = vmatpush.msra.mxu0 %v1907
    %1969 = vmatpush.msra.mxu0 %v1903
    %1970 = vmatpush.msra.mxu0 %v1899
    %1971 = vmatpush.msra.mxu0 %v1895
    %1972 = vmatpush.msra.mxu0 %v1891
    %1973 = vmatpush.msra.mxu0 %v1887
    %1974 = vmatpush.msra.mxu0 %v1883
    %1975 = vmatpush.msra.mxu0 %v1879
    %1976 = vmatpush.msra.mxu0 %v1875
    %1977 = vmatpush.msra.mxu0 %v1871
    %1978 = vmatpush.msra.mxu0 %v1867
    %1979 = vmatpush.msra.mxu0 %v1863
    %1980 = vmatpush.msra.mxu0 %v1859
    %1981 = vmatmul.f32.gmra.mxu0 %v1855
    %v1982 = vpop.f32.mrf.mxu0
    %v1983 = vadd.f32 %v1923, %v1982
    %1984 = vdwg.mxu0
    %1985 = vmatpush.msra.mxu0 %v1920
    %1986 = vmatpush.msra.mxu0 %v1916
    %1987 = vmatpush.msra.mxu0 %v1912
    %1988 = vmatpush.msra.mxu0 %v1908
    %1989 = vmatpush.msra.mxu0 %v1904
    %1990 = vmatpush.msra.mxu0 %v1900
    %1991 = vmatpush.msra.mxu0 %v1896
    %1992 = vmatpush.msra.mxu0 %v1892
    %1993 = vmatpush.msra.mxu0 %v1888
    %1994 = vmatpush.msra.mxu0 %v1884
    %1995 = vmatpush.msra.mxu0 %v1880
    %1996 = vmatpush.msra.mxu0 %v1876
    %1997 = vmatpush.msra.mxu0 %v1872
    %1998 = vmatpush.msra.mxu0 %v1868
    %1999 = vmatpush.msra.mxu0 %v1864
    %2000 = vmatpush.msra.mxu0 %v1860
    %2001 = vmatmul.f32.gmra.mxu0 %v1855
    %v2002 = vpop.f32.mrf.mxu0
    %v2003 = vadd.f32 %v1924, %v2002
    %2004 = vdwg.mxu0
    %v2005 = vxor.u32 %v1943, 2147483648
    %v2006 = vxor.u32 %v1963, 2147483648
    %v2007 = vmul.f32 %v2005, 1.442695
    %v2008 = vpow.pop %v2007
    %v2009 = vmul.f32 %v2006, 1.442695
    %v2010 = vpow.pop %v2009
    %v2011 = vadd.f32 %v2008, 1.0
    %v2012 = vadd.f32 %v2010, 1.0
    %v2013 = vrcp.pop %v2011
    %v2014 = vmul.f32 %v2011, %v2013
    %v2015 = vsub.f32 1.0, %v2014
    %v2016 = vmul.f32 %v2013, %v2015
    %v2017 = vadd.f32 %v2013, %v2016
    %vm2018 = vweird.f32 %v2011
    %vm2019 = vweird.f32 %v2013
    %vm2020 = vmor %vm2018, %vm2019
    %v2021 = vsel %vm2020, %v2013, %v2017
    %v2022 = vand.u32 2147483647, %v2011
    %vm2023 = vcmp.eq.f32.partialorder %v2022, 8.507059e+37
    %v2024 = vand.u32 %v2011, 2147483648
    %v2025 = vor.u32 1.1754944e-38, %v2024
    %v2026 = vsel %vm2023, %v2025, %v2021
    %v2027 = vmul.f32 1.0, %v2026
    %v2028 = vrcp.pop %v2012
    %v2029 = vmul.f32 %v2012, %v2028
    %v2030 = vsub.f32 1.0, %v2029
    %v2031 = vmul.f32 %v2028, %v2030
    %v2032 = vadd.f32 %v2028, %v2031
    %vm2033 = vweird.f32 %v2012
    %vm2034 = vweird.f32 %v2028
    %vm2035 = vmor %vm2033, %vm2034
    %v2036 = vsel %vm2035, %v2028, %v2032
    %v2037 = vand.u32 2147483647, %v2012
    %vm2038 = vcmp.eq.f32.partialorder %v2037, 8.507059e+37
    %v2039 = vand.u32 %v2012, 2147483648
    %v2040 = vor.u32 1.1754944e-38, %v2039
    %v2041 = vsel %vm2038, %v2040, %v2036
    %v2042 = vmul.f32 1.0, %v2041
    %v2043 = vmul.f32 %v2027, %v1983
    %v2044 = vadd.f32 %v2003, %v2043
    %v2045 = vtanh.pop %v2044
    %v2046 = vsub.f32 %v1855, %v2045
    %v2047 = vmul.f32 %v2042, %v2046
    %v2048 = vadd.f32 %v2045, %v2047
    %2049 = vst [vmem:[#allocation3 + $0x38] sm:$0xff] %v2048
    %v2050 = vld [vmem:[#allocation4] sm:$0xff]
    %v2051 = vld [vmem:[#allocation4 + $0x8] sm:$0xff]
    %v2052 = vld [vmem:[#allocation4 + $0x10] sm:$0xff]
    %v2053 = vld [vmem:[#allocation4 + $0x18] sm:$0xff]
    %v2054 = vld [vmem:[#allocation4 + $0x20] sm:$0xff]
    %v2055 = vld [vmem:[#allocation4 + $0x28] sm:$0xff]
    %v2056 = vld [vmem:[#allocation4 + $0x30] sm:$0xff]
    %v2057 = vld [vmem:[#allocation4 + $0x38] sm:$0xff]
    %v2058 = vld [vmem:[#allocation4 + $0x40] sm:$0xff]
    %v2059 = vld [vmem:[#allocation4 + $0x48] sm:$0xff]
    %v2060 = vld [vmem:[#allocation4 + $0x50] sm:$0xff]
    %v2061 = vld [vmem:[#allocation4 + $0x58] sm:$0xff]
    %v2062 = vld [vmem:[#allocation4 + $0x60] sm:$0xff]
    %v2063 = vld [vmem:[#allocation4 + $0x68] sm:$0xff]
    %v2064 = vld [vmem:[#allocation4 + $0x70] sm:$0xff]
    %v2065 = vld [vmem:[#allocation4 + $0x78] sm:$0xff]
    %v2066 = vld [vmem:[#allocation4 + $0x80] sm:$0xff]
    %v2067 = vld [vmem:[#allocation4 + $0x88] sm:$0xff]
    %v2068 = vld [vmem:[#allocation4 + $0x90] sm:$0xff]
    %v2069 = vld [vmem:[#allocation4 + $0x98] sm:$0xff]
    %v2070 = vld [vmem:[#allocation4 + $0xa0] sm:$0xff]
    %v2071 = vld [vmem:[#allocation4 + $0xa8] sm:$0xff]
    %v2072 = vld [vmem:[#allocation4 + $0xb0] sm:$0xff]
    %v2073 = vld [vmem:[#allocation4 + $0xb8] sm:$0xff]
    %v2074 = vld [vmem:[#allocation4 + $0xc0] sm:$0xff]
    %v2075 = vld [vmem:[#allocation4 + $0xc8] sm:$0xff]
    %v2076 = vld [vmem:[#allocation4 + $0xd0] sm:$0xff]
    %v2077 = vld [vmem:[#allocation4 + $0xd8] sm:$0xff]
    %v2078 = vld [vmem:[#allocation4 + $0xe0] sm:$0xff]
    %v2079 = vld [vmem:[#allocation4 + $0xe8] sm:$0xff]
    %v2080 = vld [vmem:[#allocation4 + $0xf0] sm:$0xff]
    %v2081 = vld [vmem:[#allocation4 + $0xf8] sm:$0xff]
    %v2082 = vld [vmem:[#allocation4 + $0x100] sm:$0xff]
    %v2083 = vld [vmem:[#allocation4 + $0x108] sm:$0xff]
    %v2084 = vld [vmem:[#allocation4 + $0x110] sm:$0xff]
    %v2085 = vld [vmem:[#allocation4 + $0x118] sm:$0xff]
    %v2086 = vld [vmem:[#allocation4 + $0x120] sm:$0xff]
    %v2087 = vld [vmem:[#allocation4 + $0x128] sm:$0xff]
    %v2088 = vld [vmem:[#allocation4 + $0x130] sm:$0xff]
    %v2089 = vld [vmem:[#allocation4 + $0x138] sm:$0xff]
    %v2090 = vld [vmem:[#allocation4 + $0x140] sm:$0xff]
    %v2091 = vld [vmem:[#allocation4 + $0x148] sm:$0xff]
    %v2092 = vld [vmem:[#allocation4 + $0x150] sm:$0xff]
    %v2093 = vld [vmem:[#allocation4 + $0x158] sm:$0xff]
    %v2094 = vld [vmem:[#allocation4 + $0x160] sm:$0xff]
    %v2095 = vld [vmem:[#allocation4 + $0x168] sm:$0xff]
    %v2096 = vld [vmem:[#allocation4 + $0x170] sm:$0xff]
    %v2097 = vld [vmem:[#allocation4 + $0x178] sm:$0xff]
    %v2098 = vld [vmem:[#allocation4 + $0x180] sm:$0xff]
    %v2099 = vld [vmem:[#allocation4 + $0x188] sm:$0xff]
    %v2100 = vld [vmem:[#allocation4 + $0x190] sm:$0xff]
    %v2101 = vld [vmem:[#allocation4 + $0x198] sm:$0xff]
    %v2102 = vld [vmem:[#allocation4 + $0x1a0] sm:$0xff]
    %v2103 = vld [vmem:[#allocation4 + $0x1a8] sm:$0xff]
    %v2104 = vld [vmem:[#allocation4 + $0x1b0] sm:$0xff]
    %v2105 = vld [vmem:[#allocation4 + $0x1b8] sm:$0xff]
    %v2106 = vld [vmem:[#allocation4 + $0x1c0] sm:$0xff]
    %v2107 = vld [vmem:[#allocation4 + $0x1c8] sm:$0xff]
    %v2108 = vld [vmem:[#allocation4 + $0x1d0] sm:$0xff]
    %v2109 = vld [vmem:[#allocation4 + $0x1d8] sm:$0xff]
    %v2110 = vld [vmem:[#allocation4 + $0x1e0] sm:$0xff]
    %v2111 = vld [vmem:[#allocation4 + $0x1e8] sm:$0xff]
    %v2112 = vld [vmem:[#allocation4 + $0x1f0] sm:$0xff]
    %v2113 = vld [vmem:[#allocation4 + $0x1f8] sm:$0xff]
    %v2114 = vld [vmem:[#allocation2 + $0x120] sm:$0xff]
    %v2115 = vld [vmem:[#allocation2 + $0x128] sm:$0xff]
    %v2116 = vld [vmem:[#allocation2 + $0x130] sm:$0xff]
    %v2117 = vld [vmem:[#allocation2 + $0x138] sm:$0xff]
    %2118 = vmatpush.msra.mxu0 %v2110
    %2119 = vmatpush.msra.mxu0 %v2106
    %2120 = vmatpush.msra.mxu0 %v2102
    %2121 = vmatpush.msra.mxu0 %v2098
    %2122 = vmatpush.msra.mxu0 %v2094
    %2123 = vmatpush.msra.mxu0 %v2090
    %2124 = vmatpush.msra.mxu0 %v2086
    %2125 = vmatpush.msra.mxu0 %v2082
    %2126 = vmatpush.msra.mxu0 %v2078
    %2127 = vmatpush.msra.mxu0 %v2074
    %2128 = vmatpush.msra.mxu0 %v2070
    %2129 = vmatpush.msra.mxu0 %v2066
    %2130 = vmatpush.msra.mxu0 %v2062
    %2131 = vmatpush.msra.mxu0 %v2058
    %2132 = vmatpush.msra.mxu0 %v2054
    %2133 = vmatpush.msra.mxu0 %v2050
    %2134 = vmatmul.f32.gmra.mxu0 %v2048
    %v2135 = vpop.f32.mrf.mxu0
    %v2136 = vadd.f32 %v2114, %v2135
    %2137 = vdwg.mxu0
    %2138 = vmatpush.msra.mxu0 %v2111
    %2139 = vmatpush.msra.mxu0 %v2107
    %2140 = vmatpush.msra.mxu0 %v2103
    %2141 = vmatpush.msra.mxu0 %v2099
    %2142 = vmatpush.msra.mxu0 %v2095
    %2143 = vmatpush.msra.mxu0 %v2091
    %2144 = vmatpush.msra.mxu0 %v2087
    %2145 = vmatpush.msra.mxu0 %v2083
    %2146 = vmatpush.msra.mxu0 %v2079
    %2147 = vmatpush.msra.mxu0 %v2075
    %2148 = vmatpush.msra.mxu0 %v2071
    %2149 = vmatpush.msra.mxu0 %v2067
    %2150 = vmatpush.msra.mxu0 %v2063
    %2151 = vmatpush.msra.mxu0 %v2059
    %2152 = vmatpush.msra.mxu0 %v2055
    %2153 = vmatpush.msra.mxu0 %v2051
    %2154 = vmatmul.f32.gmra.mxu0 %v2048
    %v2155 = vpop.f32.mrf.mxu0
    %v2156 = vadd.f32 %v2115, %v2155
    %2157 = vdwg.mxu0
    %2158 = vmatpush.msra.mxu0 %v2112
    %2159 = vmatpush.msra.mxu0 %v2108
    %2160 = vmatpush.msra.mxu0 %v2104
    %2161 = vmatpush.msra.mxu0 %v2100
    %2162 = vmatpush.msra.mxu0 %v2096
    %2163 = vmatpush.msra.mxu0 %v2092
    %2164 = vmatpush.msra.mxu0 %v2088
    %2165 = vmatpush.msra.mxu0 %v2084
    %2166 = vmatpush.msra.mxu0 %v2080
    %2167 = vmatpush.msra.mxu0 %v2076
    %2168 = vmatpush.msra.mxu0 %v2072
    %2169 = vmatpush.msra.mxu0 %v2068
    %2170 = vmatpush.msra.mxu0 %v2064
    %2171 = vmatpush.msra.mxu0 %v2060
    %2172 = vmatpush.msra.mxu0 %v2056
    %2173 = vmatpush.msra.mxu0 %v2052
    %2174 = vmatmul.f32.gmra.mxu0 %v2048
    %v2175 = vpop.f32.mrf.mxu0
    %v2176 = vadd.f32 %v2116, %v2175
    %2177 = vdwg.mxu0
    %2178 = vmatpush.msra.mxu0 %v2113
    %2179 = vmatpush.msra.mxu0 %v2109
    %2180 = vmatpush.msra.mxu0 %v2105
    %2181 = vmatpush.msra.mxu0 %v2101
    %2182 = vmatpush.msra.mxu0 %v2097
    %2183 = vmatpush.msra.mxu0 %v2093
    %2184 = vmatpush.msra.mxu0 %v2089
    %2185 = vmatpush.msra.mxu0 %v2085
    %2186 = vmatpush.msra.mxu0 %v2081
    %2187 = vmatpush.msra.mxu0 %v2077
    %2188 = vmatpush.msra.mxu0 %v2073
    %2189 = vmatpush.msra.mxu0 %v2069
    %2190 = vmatpush.msra.mxu0 %v2065
    %2191 = vmatpush.msra.mxu0 %v2061
    %2192 = vmatpush.msra.mxu0 %v2057
    %2193 = vmatpush.msra.mxu0 %v2053
    %2194 = vmatmul.f32.gmra.mxu0 %v2048
    %v2195 = vpop.f32.mrf.mxu0
    %v2196 = vadd.f32 %v2117, %v2195
    %2197 = vdwg.mxu0
    %v2198 = vxor.u32 %v2136, 2147483648
    %v2199 = vxor.u32 %v2156, 2147483648
    %v2200 = vmul.f32 %v2198, 1.442695
    %v2201 = vpow.pop %v2200
    %v2202 = vmul.f32 %v2199, 1.442695
    %v2203 = vpow.pop %v2202
    %v2204 = vadd.f32 %v2201, 1.0
    %v2205 = vadd.f32 %v2203, 1.0
    %v2206 = vrcp.pop %v2204
    %v2207 = vmul.f32 %v2204, %v2206
    %v2208 = vsub.f32 1.0, %v2207
    %v2209 = vmul.f32 %v2206, %v2208
    %v2210 = vadd.f32 %v2206, %v2209
    %vm2211 = vweird.f32 %v2204
    %vm2212 = vweird.f32 %v2206
    %vm2213 = vmor %vm2211, %vm2212
    %v2214 = vsel %vm2213, %v2206, %v2210
    %v2215 = vand.u32 2147483647, %v2204
    %vm2216 = vcmp.eq.f32.partialorder %v2215, 8.507059e+37
    %v2217 = vand.u32 %v2204, 2147483648
    %v2218 = vor.u32 1.1754944e-38, %v2217
    %v2219 = vsel %vm2216, %v2218, %v2214
    %v2220 = vmul.f32 1.0, %v2219
    %v2221 = vrcp.pop %v2205
    %v2222 = vmul.f32 %v2205, %v2221
    %v2223 = vsub.f32 1.0, %v2222
    %v2224 = vmul.f32 %v2221, %v2223
    %v2225 = vadd.f32 %v2221, %v2224
    %vm2226 = vweird.f32 %v2205
    %vm2227 = vweird.f32 %v2221
    %vm2228 = vmor %vm2226, %vm2227
    %v2229 = vsel %vm2228, %v2221, %v2225
    %v2230 = vand.u32 2147483647, %v2205
    %vm2231 = vcmp.eq.f32.partialorder %v2230, 8.507059e+37
    %v2232 = vand.u32 %v2205, 2147483648
    %v2233 = vor.u32 1.1754944e-38, %v2232
    %v2234 = vsel %vm2231, %v2233, %v2229
    %v2235 = vmul.f32 1.0, %v2234
    %v2236 = vmul.f32 %v2220, %v2176
    %v2237 = vadd.f32 %v2196, %v2236
    %v2238 = vtanh.pop %v2237
    %v2239 = vsub.f32 %v2048, %v2238
    %v2240 = vmul.f32 %v2235, %v2239
    %v2241 = vadd.f32 %v2238, %v2240
    %2242 = vst [vmem:[#allocation3 + $0x40] sm:$0xff] %v2241
    %v2243 = vld [vmem:[#allocation4] sm:$0xff]
    %v2244 = vld [vmem:[#allocation4 + $0x8] sm:$0xff]
    %v2245 = vld [vmem:[#allocation4 + $0x10] sm:$0xff]
    %v2246 = vld [vmem:[#allocation4 + $0x18] sm:$0xff]
    %v2247 = vld [vmem:[#allocation4 + $0x20] sm:$0xff]
    %v2248 = vld [vmem:[#allocation4 + $0x28] sm:$0xff]
    %v2249 = vld [vmem:[#allocation4 + $0x30] sm:$0xff]
    %v2250 = vld [vmem:[#allocation4 + $0x38] sm:$0xff]
    %v2251 = vld [vmem:[#allocation4 + $0x40] sm:$0xff]
    %v2252 = vld [vmem:[#allocation4 + $0x48] sm:$0xff]
    %v2253 = vld [vmem:[#allocation4 + $0x50] sm:$0xff]
    %v2254 = vld [vmem:[#allocation4 + $0x58] sm:$0xff]
    %v2255 = vld [vmem:[#allocation4 + $0x60] sm:$0xff]
    %v2256 = vld [vmem:[#allocation4 + $0x68] sm:$0xff]
    %v2257 = vld [vmem:[#allocation4 + $0x70] sm:$0xff]
    %v2258 = vld [vmem:[#allocation4 + $0x78] sm:$0xff]
    %v2259 = vld [vmem:[#allocation4 + $0x80] sm:$0xff]
    %v2260 = vld [vmem:[#allocation4 + $0x88] sm:$0xff]
    %v2261 = vld [vmem:[#allocation4 + $0x90] sm:$0xff]
    %v2262 = vld [vmem:[#allocation4 + $0x98] sm:$0xff]
    %v2263 = vld [vmem:[#allocation4 + $0xa0] sm:$0xff]
    %v2264 = vld [vmem:[#allocation4 + $0xa8] sm:$0xff]
    %v2265 = vld [vmem:[#allocation4 + $0xb0] sm:$0xff]
    %v2266 = vld [vmem:[#allocation4 + $0xb8] sm:$0xff]
    %v2267 = vld [vmem:[#allocation4 + $0xc0] sm:$0xff]
    %v2268 = vld [vmem:[#allocation4 + $0xc8] sm:$0xff]
    %v2269 = vld [vmem:[#allocation4 + $0xd0] sm:$0xff]
    %v2270 = vld [vmem:[#allocation4 + $0xd8] sm:$0xff]
    %v2271 = vld [vmem:[#allocation4 + $0xe0] sm:$0xff]
    %v2272 = vld [vmem:[#allocation4 + $0xe8] sm:$0xff]
    %v2273 = vld [vmem:[#allocation4 + $0xf0] sm:$0xff]
    %v2274 = vld [vmem:[#allocation4 + $0xf8] sm:$0xff]
    %v2275 = vld [vmem:[#allocation4 + $0x100] sm:$0xff]
    %v2276 = vld [vmem:[#allocation4 + $0x108] sm:$0xff]
    %v2277 = vld [vmem:[#allocation4 + $0x110] sm:$0xff]
    %v2278 = vld [vmem:[#allocation4 + $0x118] sm:$0xff]
    %v2279 = vld [vmem:[#allocation4 + $0x120] sm:$0xff]
    %v2280 = vld [vmem:[#allocation4 + $0x128] sm:$0xff]
    %v2281 = vld [vmem:[#allocation4 + $0x130] sm:$0xff]
    %v2282 = vld [vmem:[#allocation4 + $0x138] sm:$0xff]
    %v2283 = vld [vmem:[#allocation4 + $0x140] sm:$0xff]
    %v2284 = vld [vmem:[#allocation4 + $0x148] sm:$0xff]
    %v2285 = vld [vmem:[#allocation4 + $0x150] sm:$0xff]
    %v2286 = vld [vmem:[#allocation4 + $0x158] sm:$0xff]
    %v2287 = vld [vmem:[#allocation4 + $0x160] sm:$0xff]
    %v2288 = vld [vmem:[#allocation4 + $0x168] sm:$0xff]
    %v2289 = vld [vmem:[#allocation4 + $0x170] sm:$0xff]
    %v2290 = vld [vmem:[#allocation4 + $0x178] sm:$0xff]
    %v2291 = vld [vmem:[#allocation4 + $0x180] sm:$0xff]
    %v2292 = vld [vmem:[#allocation4 + $0x188] sm:$0xff]
    %v2293 = vld [vmem:[#allocation4 + $0x190] sm:$0xff]
    %v2294 = vld [vmem:[#allocation4 + $0x198] sm:$0xff]
    %v2295 = vld [vmem:[#allocation4 + $0x1a0] sm:$0xff]
    %v2296 = vld [vmem:[#allocation4 + $0x1a8] sm:$0xff]
    %v2297 = vld [vmem:[#allocation4 + $0x1b0] sm:$0xff]
    %v2298 = vld [vmem:[#allocation4 + $0x1b8] sm:$0xff]
    %v2299 = vld [vmem:[#allocation4 + $0x1c0] sm:$0xff]
    %v2300 = vld [vmem:[#allocation4 + $0x1c8] sm:$0xff]
    %v2301 = vld [vmem:[#allocation4 + $0x1d0] sm:$0xff]
    %v2302 = vld [vmem:[#allocation4 + $0x1d8] sm:$0xff]
    %v2303 = vld [vmem:[#allocation4 + $0x1e0] sm:$0xff]
    %v2304 = vld [vmem:[#allocation4 + $0x1e8] sm:$0xff]
    %v2305 = vld [vmem:[#allocation4 + $0x1f0] sm:$0xff]
    %v2306 = vld [vmem:[#allocation4 + $0x1f8] sm:$0xff]
    %v2307 = vld [vmem:[#allocation2 + $0x140] sm:$0xff]
    %v2308 = vld [vmem:[#allocation2 + $0x148] sm:$0xff]
    %v2309 = vld [vmem:[#allocation2 + $0x150] sm:$0xff]
    %v2310 = vld [vmem:[#allocation2 + $0x158] sm:$0xff]
    %2311 = vmatpush.msra.mxu0 %v2303
    %2312 = vmatpush.msra.mxu0 %v2299
    %2313 = vmatpush.msra.mxu0 %v2295
    %2314 = vmatpush.msra.mxu0 %v2291
    %2315 = vmatpush.msra.mxu0 %v2287
    %2316 = vmatpush.msra.mxu0 %v2283
    %2317 = vmatpush.msra.mxu0 %v2279
    %2318 = vmatpush.msra.mxu0 %v2275
    %2319 = vmatpush.msra.mxu0 %v2271
    %2320 = vmatpush.msra.mxu0 %v2267
    %2321 = vmatpush.msra.mxu0 %v2263
    %2322 = vmatpush.msra.mxu0 %v2259
    %2323 = vmatpush.msra.mxu0 %v2255
    %2324 = vmatpush.msra.mxu0 %v2251
    %2325 = vmatpush.msra.mxu0 %v2247
    %2326 = vmatpush.msra.mxu0 %v2243
    %2327 = vmatmul.f32.gmra.mxu0 %v2241
    %v2328 = vpop.f32.mrf.mxu0
    %v2329 = vadd.f32 %v2307, %v2328
    %2330 = vdwg.mxu0
    %2331 = vmatpush.msra.mxu0 %v2304
    %2332 = vmatpush.msra.mxu0 %v2300
    %2333 = vmatpush.msra.mxu0 %v2296
    %2334 = vmatpush.msra.mxu0 %v2292
    %2335 = vmatpush.msra.mxu0 %v2288
    %2336 = vmatpush.msra.mxu0 %v2284
    %2337 = vmatpush.msra.mxu0 %v2280
    %2338 = vmatpush.msra.mxu0 %v2276
    %2339 = vmatpush.msra.mxu0 %v2272
    %2340 = vmatpush.msra.mxu0 %v2268
    %2341 = vmatpush.msra.mxu0 %v2264
    %2342 = vmatpush.msra.mxu0 %v2260
    %2343 = vmatpush.msra.mxu0 %v2256
    %2344 = vmatpush.msra.mxu0 %v2252
    %2345 = vmatpush.msra.mxu0 %v2248
    %2346 = vmatpush.msra.mxu0 %v2244
    %2347 = vmatmul.f32.gmra.mxu0 %v2241
    %v2348 = vpop.f32.mrf.mxu0
    %v2349 = vadd.f32 %v2308, %v2348
    %2350 = vdwg.mxu0
    %2351 = vmatpush.msra.mxu0 %v2305
    %2352 = vmatpush.msra.mxu0 %v2301
    %2353 = vmatpush.msra.mxu0 %v2297
    %2354 = vmatpush.msra.mxu0 %v2293
    %2355 = vmatpush.msra.mxu0 %v2289
    %2356 = vmatpush.msra.mxu0 %v2285
    %2357 = vmatpush.msra.mxu0 %v2281
    %2358 = vmatpush.msra.mxu0 %v2277
    %2359 = vmatpush.msra.mxu0 %v2273
    %2360 = vmatpush.msra.mxu0 %v2269
    %2361 = vmatpush.msra.mxu0 %v2265
    %2362 = vmatpush.msra.mxu0 %v2261
    %2363 = vmatpush.msra.mxu0 %v2257
    %2364 = vmatpush.msra.mxu0 %v2253
    %2365 = vmatpush.msra.mxu0 %v2249
    %2366 = vmatpush.msra.mxu0 %v2245
    %2367 = vmatmul.f32.gmra.mxu0 %v2241
    %v2368 = vpop.f32.mrf.mxu0
    %v2369 = vadd.f32 %v2309, %v2368
    %2370 = vdwg.mxu0
    %2371 = vmatpush.msra.mxu0 %v2306
    %2372 = vmatpush.msra.mxu0 %v2302
    %2373 = vmatpush.msra.mxu0 %v2298
    %2374 = vmatpush.msra.mxu0 %v2294
    %2375 = vmatpush.msra.mxu0 %v2290
    %2376 = vmatpush.msra.mxu0 %v2286
    %2377 = vmatpush.msra.mxu0 %v2282
    %2378 = vmatpush.msra.mxu0 %v2278
    %2379 = vmatpush.msra.mxu0 %v2274
    %2380 = vmatpush.msra.mxu0 %v2270
    %2381 = vmatpush.msra.mxu0 %v2266
    %2382 = vmatpush.msra.mxu0 %v2262
    %2383 = vmatpush.msra.mxu0 %v2258
    %2384 = vmatpush.msra.mxu0 %v2254
    %2385 = vmatpush.msra.mxu0 %v2250
    %2386 = vmatpush.msra.mxu0 %v2246
    %2387 = vmatmul.f32.gmra.mxu0 %v2241
    %v2388 = vpop.f32.mrf.mxu0
    %v2389 = vadd.f32 %v2310, %v2388
    %2390 = vdwg.mxu0
    %v2391 = vxor.u32 %v2329, 2147483648
    %v2392 = vxor.u32 %v2349, 2147483648
    %v2393 = vmul.f32 %v2391, 1.442695
    %v2394 = vpow.pop %v2393
    %v2395 = vmul.f32 %v2392, 1.442695
    %v2396 = vpow.pop %v2395
    %v2397 = vadd.f32 %v2394, 1.0
    %v2398 = vadd.f32 %v2396, 1.0
    %v2399 = vrcp.pop %v2397
    %v2400 = vmul.f32 %v2397, %v2399
    %v2401 = vsub.f32 1.0, %v2400
    %v2402 = vmul.f32 %v2399, %v2401
    %v2403 = vadd.f32 %v2399, %v2402
    %vm2404 = vweird.f32 %v2397
    %vm2405 = vweird.f32 %v2399
    %vm2406 = vmor %vm2404, %vm2405
    %v2407 = vsel %vm2406, %v2399, %v2403
    %v2408 = vand.u32 2147483647, %v2397
    %vm2409 = vcmp.eq.f32.partialorder %v2408, 8.507059e+37
    %v2410 = vand.u32 %v2397, 2147483648
    %v2411 = vor.u32 1.1754944e-38, %v2410
    %v2412 = vsel %vm2409, %v2411, %v2407
    %v2413 = vmul.f32 1.0, %v2412
    %v2414 = vrcp.pop %v2398
    %v2415 = vmul.f32 %v2398, %v2414
    %v2416 = vsub.f32 1.0, %v2415
    %v2417 = vmul.f32 %v2414, %v2416
    %v2418 = vadd.f32 %v2414, %v2417
    %vm2419 = vweird.f32 %v2398
    %vm2420 = vweird.f32 %v2414
    %vm2421 = vmor %vm2419, %vm2420
    %v2422 = vsel %vm2421, %v2414, %v2418
    %v2423 = vand.u32 2147483647, %v2398
    %vm2424 = vcmp.eq.f32.partialorder %v2423, 8.507059e+37
    %v2425 = vand.u32 %v2398, 2147483648
    %v2426 = vor.u32 1.1754944e-38, %v2425
    %v2427 = vsel %vm2424, %v2426, %v2422
    %v2428 = vmul.f32 1.0, %v2427
    %v2429 = vmul.f32 %v2413, %v2369
    %v2430 = vadd.f32 %v2389, %v2429
    %v2431 = vtanh.pop %v2430
    %v2432 = vsub.f32 %v2241, %v2431
    %v2433 = vmul.f32 %v2428, %v2432
    %v2434 = vadd.f32 %v2431, %v2433
    %2435 = vst [vmem:[#allocation3 + $0x48] sm:$0xff] %v2434
    %v2436 = vld [vmem:[#allocation4] sm:$0xff]
    %v2437 = vld [vmem:[#allocation4 + $0x8] sm:$0xff]
    %v2438 = vld [vmem:[#allocation4 + $0x10] sm:$0xff]
    %v2439 = vld [vmem:[#allocation4 + $0x18] sm:$0xff]
    %v2440 = vld [vmem:[#allocation4 + $0x20] sm:$0xff]
    %v2441 = vld [vmem:[#allocation4 + $0x28] sm:$0xff]
    %v2442 = vld [vmem:[#allocation4 + $0x30] sm:$0xff]
    %v2443 = vld [vmem:[#allocation4 + $0x38] sm:$0xff]
    %v2444 = vld [vmem:[#allocation4 + $0x40] sm:$0xff]
    %v2445 = vld [vmem:[#allocation4 + $0x48] sm:$0xff]
    %v2446 = vld [vmem:[#allocation4 + $0x50] sm:$0xff]
    %v2447 = vld [vmem:[#allocation4 + $0x58] sm:$0xff]
    %v2448 = vld [vmem:[#allocation4 + $0x60] sm:$0xff]
    %v2449 = vld [vmem:[#allocation4 + $0x68] sm:$0xff]
    %v2450 = vld [vmem:[#allocation4 + $0x70] sm:$0xff]
    %v2451 = vld [vmem:[#allocation4 + $0x78] sm:$0xff]
    %v2452 = vld [vmem:[#allocation4 + $0x80] sm:$0xff]
    %v2453 = vld [vmem:[#allocation4 + $0x88] sm:$0xff]
    %v2454 = vld [vmem:[#allocation4 + $0x90] sm:$0xff]
    %v2455 = vld [vmem:[#allocation4 + $0x98] sm:$0xff]
    %v2456 = vld [vmem:[#allocation4 + $0xa0] sm:$0xff]
    %v2457 = vld [vmem:[#allocation4 + $0xa8] sm:$0xff]
    %v2458 = vld [vmem:[#allocation4 + $0xb0] sm:$0xff]
    %v2459 = vld [vmem:[#allocation4 + $0xb8] sm:$0xff]
    %v2460 = vld [vmem:[#allocation4 + $0xc0] sm:$0xff]
    %v2461 = vld [vmem:[#allocation4 + $0xc8] sm:$0xff]
    %v2462 = vld [vmem:[#allocation4 + $0xd0] sm:$0xff]
    %v2463 = vld [vmem:[#allocation4 + $0xd8] sm:$0xff]
    %v2464 = vld [vmem:[#allocation4 + $0xe0] sm:$0xff]
    %v2465 = vld [vmem:[#allocation4 + $0xe8] sm:$0xff]
    %v2466 = vld [vmem:[#allocation4 + $0xf0] sm:$0xff]
    %v2467 = vld [vmem:[#allocation4 + $0xf8] sm:$0xff]
    %v2468 = vld [vmem:[#allocation4 + $0x100] sm:$0xff]
    %v2469 = vld [vmem:[#allocation4 + $0x108] sm:$0xff]
    %v2470 = vld [vmem:[#allocation4 + $0x110] sm:$0xff]
    %v2471 = vld [vmem:[#allocation4 + $0x118] sm:$0xff]
    %v2472 = vld [vmem:[#allocation4 + $0x120] sm:$0xff]
    %v2473 = vld [vmem:[#allocation4 + $0x128] sm:$0xff]
    %v2474 = vld [vmem:[#allocation4 + $0x130] sm:$0xff]
    %v2475 = vld [vmem:[#allocation4 + $0x138] sm:$0xff]
    %v2476 = vld [vmem:[#allocation4 + $0x140] sm:$0xff]
    %v2477 = vld [vmem:[#allocation4 + $0x148] sm:$0xff]
    %v2478 = vld [vmem:[#allocation4 + $0x150] sm:$0xff]
    %v2479 = vld [vmem:[#allocation4 + $0x158] sm:$0xff]
    %v2480 = vld [vmem:[#allocation4 + $0x160] sm:$0xff]
    %v2481 = vld [vmem:[#allocation4 + $0x168] sm:$0xff]
    %v2482 = vld [vmem:[#allocation4 + $0x170] sm:$0xff]
    %v2483 = vld [vmem:[#allocation4 + $0x178] sm:$0xff]
    %v2484 = vld [vmem:[#allocation4 + $0x180] sm:$0xff]
    %v2485 = vld [vmem:[#allocation4 + $0x188] sm:$0xff]
    %v2486 = vld [vmem:[#allocation4 + $0x190] sm:$0xff]
    %v2487 = vld [vmem:[#allocation4 + $0x198] sm:$0xff]
    %v2488 = vld [vmem:[#allocation4 + $0x1a0] sm:$0xff]
    %v2489 = vld [vmem:[#allocation4 + $0x1a8] sm:$0xff]
    %v2490 = vld [vmem:[#allocation4 + $0x1b0] sm:$0xff]
    %v2491 = vld [vmem:[#allocation4 + $0x1b8] sm:$0xff]
    %v2492 = vld [vmem:[#allocation4 + $0x1c0] sm:$0xff]
    %v2493 = vld [vmem:[#allocation4 + $0x1c8] sm:$0xff]
    %v2494 = vld [vmem:[#allocation4 + $0x1d0] sm:$0xff]
    %v2495 = vld [vmem:[#allocation4 + $0x1d8] sm:$0xff]
    %v2496 = vld [vmem:[#allocation4 + $0x1e0] sm:$0xff]
    %v2497 = vld [vmem:[#allocation4 + $0x1e8] sm:$0xff]
    %v2498 = vld [vmem:[#allocation4 + $0x1f0] sm:$0xff]
    %v2499 = vld [vmem:[#allocation4 + $0x1f8] sm:$0xff]
    %v2500 = vld [vmem:[#allocation2 + $0x160] sm:$0xff]
    %v2501 = vld [vmem:[#allocation2 + $0x168] sm:$0xff]
    %v2502 = vld [vmem:[#allocation2 + $0x170] sm:$0xff]
    %v2503 = vld [vmem:[#allocation2 + $0x178] sm:$0xff]
    %2504 = vmatpush.msra.mxu0 %v2496
    %2505 = vmatpush.msra.mxu0 %v2492
    %2506 = vmatpush.msra.mxu0 %v2488
    %2507 = vmatpush.msra.mxu0 %v2484
    %2508 = vmatpush.msra.mxu0 %v2480
    %2509 = vmatpush.msra.mxu0 %v2476
    %2510 = vmatpush.msra.mxu0 %v2472
    %2511 = vmatpush.msra.mxu0 %v2468
    %2512 = vmatpush.msra.mxu0 %v2464
    %2513 = vmatpush.msra.mxu0 %v2460
    %2514 = vmatpush.msra.mxu0 %v2456
    %2515 = vmatpush.msra.mxu0 %v2452
    %2516 = vmatpush.msra.mxu0 %v2448
    %2517 = vmatpush.msra.mxu0 %v2444
    %2518 = vmatpush.msra.mxu0 %v2440
    %2519 = vmatpush.msra.mxu0 %v2436
    %2520 = vmatmul.f32.gmra.mxu0 %v2434
    %v2521 = vpop.f32.mrf.mxu0
    %v2522 = vadd.f32 %v2500, %v2521
    %2523 = vdwg.mxu0
    %2524 = vmatpush.msra.mxu0 %v2497
    %2525 = vmatpush.msra.mxu0 %v2493
    %2526 = vmatpush.msra.mxu0 %v2489
    %2527 = vmatpush.msra.mxu0 %v2485
    %2528 = vmatpush.msra.mxu0 %v2481
    %2529 = vmatpush.msra.mxu0 %v2477
    %2530 = vmatpush.msra.mxu0 %v2473
    %2531 = vmatpush.msra.mxu0 %v2469
    %2532 = vmatpush.msra.mxu0 %v2465
    %2533 = vmatpush.msra.mxu0 %v2461
    %2534 = vmatpush.msra.mxu0 %v2457
    %2535 = vmatpush.msra.mxu0 %v2453
    %2536 = vmatpush.msra.mxu0 %v2449
    %2537 = vmatpush.msra.mxu0 %v2445
    %2538 = vmatpush.msra.mxu0 %v2441
    %2539 = vmatpush.msra.mxu0 %v2437
    %2540 = vmatmul.f32.gmra.mxu0 %v2434
    %v2541 = vpop.f32.mrf.mxu0
    %v2542 = vadd.f32 %v2501, %v2541
    %2543 = vdwg.mxu0
    %2544 = vmatpush.msra.mxu0 %v2498
    %2545 = vmatpush.msra.mxu0 %v2494
    %2546 = vmatpush.msra.mxu0 %v2490
    %2547 = vmatpush.msra.mxu0 %v2486
    %2548 = vmatpush.msra.mxu0 %v2482
    %2549 = vmatpush.msra.mxu0 %v2478
    %2550 = vmatpush.msra.mxu0 %v2474
    %2551 = vmatpush.msra.mxu0 %v2470
    %2552 = vmatpush.msra.mxu0 %v2466
    %2553 = vmatpush.msra.mxu0 %v2462
    %2554 = vmatpush.msra.mxu0 %v2458
    %2555 = vmatpush.msra.mxu0 %v2454
    %2556 = vmatpush.msra.mxu0 %v2450
    %2557 = vmatpush.msra.mxu0 %v2446
    %2558 = vmatpush.msra.mxu0 %v2442
    %2559 = vmatpush.msra.mxu0 %v2438
    %2560 = vmatmul.f32.gmra.mxu0 %v2434
    %v2561 = vpop.f32.mrf.mxu0
    %v2562 = vadd.f32 %v2502, %v2561
    %2563 = vdwg.mxu0
    %2564 = vmatpush.msra.mxu0 %v2499
    %2565 = vmatpush.msra.mxu0 %v2495
    %2566 = vmatpush.msra.mxu0 %v2491
    %2567 = vmatpush.msra.mxu0 %v2487
    %2568 = vmatpush.msra.mxu0 %v2483
    %2569 = vmatpush.msra.mxu0 %v2479
    %2570 = vmatpush.msra.mxu0 %v2475
    %2571 = vmatpush.msra.mxu0 %v2471
    %2572 = vmatpush.msra.mxu0 %v2467
    %2573 = vmatpush.msra.mxu0 %v2463
    %2574 = vmatpush.msra.mxu0 %v2459
    %2575 = vmatpush.msra.mxu0 %v2455
    %2576 = vmatpush.msra.mxu0 %v2451
    %2577 = vmatpush.msra.mxu0 %v2447
    %2578 = vmatpush.msra.mxu0 %v2443
    %2579 = vmatpush.msra.mxu0 %v2439
    %2580 = vmatmul.f32.gmra.mxu0 %v2434
    %v2581 = vpop.f32.mrf.mxu0
    %v2582 = vadd.f32 %v2503, %v2581
    %2583 = vdwg.mxu0
    %v2584 = vxor.u32 %v2522, 2147483648
    %v2585 = vxor.u32 %v2542, 2147483648
    %v2586 = vmul.f32 %v2584, 1.442695
    %v2587 = vpow.pop %v2586
    %v2588 = vmul.f32 %v2585, 1.442695
    %v2589 = vpow.pop %v2588
    %v2590 = vadd.f32 %v2587, 1.0
    %v2591 = vadd.f32 %v2589, 1.0
    %v2592 = vrcp.pop %v2590
    %v2593 = vmul.f32 %v2590, %v2592
    %v2594 = vsub.f32 1.0, %v2593
    %v2595 = vmul.f32 %v2592, %v2594
    %v2596 = vadd.f32 %v2592, %v2595
    %vm2597 = vweird.f32 %v2590
    %vm2598 = vweird.f32 %v2592
    %vm2599 = vmor %vm2597, %vm2598
    %v2600 = vsel %vm2599, %v2592, %v2596
    %v2601 = vand.u32 2147483647, %v2590
    %vm2602 = vcmp.eq.f32.partialorder %v2601, 8.507059e+37
    %v2603 = vand.u32 %v2590, 2147483648
    %v2604 = vor.u32 1.1754944e-38, %v2603
    %v2605 = vsel %vm2602, %v2604, %v2600
    %v2606 = vmul.f32 1.0, %v2605
    %v2607 = vrcp.pop %v2591
    %v2608 = vmul.f32 %v2591, %v2607
    %v2609 = vsub.f32 1.0, %v2608
    %v2610 = vmul.f32 %v2607, %v2609
    %v2611 = vadd.f32 %v2607, %v2610
    %vm2612 = vweird.f32 %v2591
    %vm2613 = vweird.f32 %v2607
    %vm2614 = vmor %vm2612, %vm2613
    %v2615 = vsel %vm2614, %v2607, %v2611
    %v2616 = vand.u32 2147483647, %v2591
    %vm2617 = vcmp.eq.f32.partialorder %v2616, 8.507059e+37
    %v2618 = vand.u32 %v2591, 2147483648
    %v2619 = vor.u32 1.1754944e-38, %v2618
    %v2620 = vsel %vm2617, %v2619, %v2615
    %v2621 = vmul.f32 1.0, %v2620
    %v2622 = vmul.f32 %v2606, %v2562
    %v2623 = vadd.f32 %v2582, %v2622
    %v2624 = vtanh.pop %v2623
    %v2625 = vsub.f32 %v2434, %v2624
    %v2626 = vmul.f32 %v2621, %v2625
    %v2627 = vadd.f32 %v2624, %v2626
    %2628 = vst [vmem:[#allocation3 + $0x50] sm:$0xff] %v2627
    %v2629 = vld [vmem:[#allocation4] sm:$0xff]
    %v2630 = vld [vmem:[#allocation4 + $0x8] sm:$0xff]
    %v2631 = vld [vmem:[#allocation4 + $0x10] sm:$0xff]
    %v2632 = vld [vmem:[#allocation4 + $0x18] sm:$0xff]
    %v2633 = vld [vmem:[#allocation4 + $0x20] sm:$0xff]
    %v2634 = vld [vmem:[#allocation4 + $0x28] sm:$0xff]
    %v2635 = vld [vmem:[#allocation4 + $0x30] sm:$0xff]
    %v2636 = vld [vmem:[#allocation4 + $0x38] sm:$0xff]
    %v2637 = vld [vmem:[#allocation4 + $0x40] sm:$0xff]
    %v2638 = vld [vmem:[#allocation4 + $0x48] sm:$0xff]
    %v2639 = vld [vmem:[#allocation4 + $0x50] sm:$0xff]
    %v2640 = vld [vmem:[#allocation4 + $0x58] sm:$0xff]
    %v2641 = vld [vmem:[#allocation4 + $0x60] sm:$0xff]
    %v2642 = vld [vmem:[#allocation4 + $0x68] sm:$0xff]
    %v2643 = vld [vmem:[#allocation4 + $0x70] sm:$0xff]
    %v2644 = vld [vmem:[#allocation4 + $0x78] sm:$0xff]
    %v2645 = vld [vmem:[#allocation4 + $0x80] sm:$0xff]
    %v2646 = vld [vmem:[#allocation4 + $0x88] sm:$0xff]
    %v2647 = vld [vmem:[#allocation4 + $0x90] sm:$0xff]
    %v2648 = vld [vmem:[#allocation4 + $0x98] sm:$0xff]
    %v2649 = vld [vmem:[#allocation4 + $0xa0] sm:$0xff]
    %v2650 = vld [vmem:[#allocation4 + $0xa8] sm:$0xff]
    %v2651 = vld [vmem:[#allocation4 + $0xb0] sm:$0xff]
    %v2652 = vld [vmem:[#allocation4 + $0xb8] sm:$0xff]
    %v2653 = vld [vmem:[#allocation4 + $0xc0] sm:$0xff]
    %v2654 = vld [vmem:[#allocation4 + $0xc8] sm:$0xff]
    %v2655 = vld [vmem:[#allocation4 + $0xd0] sm:$0xff]
    %v2656 = vld [vmem:[#allocation4 + $0xd8] sm:$0xff]
    %v2657 = vld [vmem:[#allocation4 + $0xe0] sm:$0xff]
    %v2658 = vld [vmem:[#allocation4 + $0xe8] sm:$0xff]
    %v2659 = vld [vmem:[#allocation4 + $0xf0] sm:$0xff]
    %v2660 = vld [vmem:[#allocation4 + $0xf8] sm:$0xff]
    %v2661 = vld [vmem:[#allocation4 + $0x100] sm:$0xff]
    %v2662 = vld [vmem:[#allocation4 + $0x108] sm:$0xff]
    %v2663 = vld [vmem:[#allocation4 + $0x110] sm:$0xff]
    %v2664 = vld [vmem:[#allocation4 + $0x118] sm:$0xff]
    %v2665 = vld [vmem:[#allocation4 + $0x120] sm:$0xff]
    %v2666 = vld [vmem:[#allocation4 + $0x128] sm:$0xff]
    %v2667 = vld [vmem:[#allocation4 + $0x130] sm:$0xff]
    %v2668 = vld [vmem:[#allocation4 + $0x138] sm:$0xff]
    %v2669 = vld [vmem:[#allocation4 + $0x140] sm:$0xff]
    %v2670 = vld [vmem:[#allocation4 + $0x148] sm:$0xff]
    %v2671 = vld [vmem:[#allocation4 + $0x150] sm:$0xff]
    %v2672 = vld [vmem:[#allocation4 + $0x158] sm:$0xff]
    %v2673 = vld [vmem:[#allocation4 + $0x160] sm:$0xff]
    %v2674 = vld [vmem:[#allocation4 + $0x168] sm:$0xff]
    %v2675 = vld [vmem:[#allocation4 + $0x170] sm:$0xff]
    %v2676 = vld [vmem:[#allocation4 + $0x178] sm:$0xff]
    %v2677 = vld [vmem:[#allocation4 + $0x180] sm:$0xff]
    %v2678 = vld [vmem:[#allocation4 + $0x188] sm:$0xff]
    %v2679 = vld [vmem:[#allocation4 + $0x190] sm:$0xff]
    %v2680 = vld [vmem:[#allocation4 + $0x198] sm:$0xff]
    %v2681 = vld [vmem:[#allocation4 + $0x1a0] sm:$0xff]
    %v2682 = vld [vmem:[#allocation4 + $0x1a8] sm:$0xff]
    %v2683 = vld [vmem:[#allocation4 + $0x1b0] sm:$0xff]
    %v2684 = vld [vmem:[#allocation4 + $0x1b8] sm:$0xff]
    %v2685 = vld [vmem:[#allocation4 + $0x1c0] sm:$0xff]
    %v2686 = vld [vmem:[#allocation4 + $0x1c8] sm:$0xff]
    %v2687 = vld [vmem:[#allocation4 + $0x1d0] sm:$0xff]
    %v2688 = vld [vmem:[#allocation4 + $0x1d8] sm:$0xff]
    %v2689 = vld [vmem:[#allocation4 + $0x1e0] sm:$0xff]
    %v2690 = vld [vmem:[#allocation4 + $0x1e8] sm:$0xff]
    %v2691 = vld [vmem:[#allocation4 + $0x1f0] sm:$0xff]
    %v2692 = vld [vmem:[#allocation4 + $0x1f8] sm:$0xff]
    %v2693 = vld [vmem:[#allocation2 + $0x180] sm:$0xff]
    %v2694 = vld [vmem:[#allocation2 + $0x188] sm:$0xff]
    %v2695 = vld [vmem:[#allocation2 + $0x190] sm:$0xff]
    %v2696 = vld [vmem:[#allocation2 + $0x198] sm:$0xff]
    %2697 = vmatpush.msra.mxu0 %v2689
    %2698 = vmatpush.msra.mxu0 %v2685
    %2699 = vmatpush.msra.mxu0 %v2681
    %2700 = vmatpush.msra.mxu0 %v2677
    %2701 = vmatpush.msra.mxu0 %v2673
    %2702 = vmatpush.msra.mxu0 %v2669
    %2703 = vmatpush.msra.mxu0 %v2665
    %2704 = vmatpush.msra.mxu0 %v2661
    %2705 = vmatpush.msra.mxu0 %v2657
    %2706 = vmatpush.msra.mxu0 %v2653
    %2707 = vmatpush.msra.mxu0 %v2649
    %2708 = vmatpush.msra.mxu0 %v2645
    %2709 = vmatpush.msra.mxu0 %v2641
    %2710 = vmatpush.msra.mxu0 %v2637
    %2711 = vmatpush.msra.mxu0 %v2633
    %2712 = vmatpush.msra.mxu0 %v2629
    %2713 = vmatmul.f32.gmra.mxu0 %v2627
    %v2714 = vpop.f32.mrf.mxu0
    %v2715 = vadd.f32 %v2693, %v2714
    %2716 = vdwg.mxu0
    %2717 = vmatpush.msra.mxu0 %v2690
    %2718 = vmatpush.msra.mxu0 %v2686
    %2719 = vmatpush.msra.mxu0 %v2682
    %2720 = vmatpush.msra.mxu0 %v2678
    %2721 = vmatpush.msra.mxu0 %v2674
    %2722 = vmatpush.msra.mxu0 %v2670
    %2723 = vmatpush.msra.mxu0 %v2666
    %2724 = vmatpush.msra.mxu0 %v2662
    %2725 = vmatpush.msra.mxu0 %v2658
    %2726 = vmatpush.msra.mxu0 %v2654
    %2727 = vmatpush.msra.mxu0 %v2650
    %2728 = vmatpush.msra.mxu0 %v2646
    %2729 = vmatpush.msra.mxu0 %v2642
    %2730 = vmatpush.msra.mxu0 %v2638
    %2731 = vmatpush.msra.mxu0 %v2634
    %2732 = vmatpush.msra.mxu0 %v2630
    %2733 = vmatmul.f32.gmra.mxu0 %v2627
    %v2734 = vpop.f32.mrf.mxu0
    %v2735 = vadd.f32 %v2694, %v2734
    %2736 = vdwg.mxu0
    %2737 = vmatpush.msra.mxu0 %v2691
    %2738 = vmatpush.msra.mxu0 %v2687
    %2739 = vmatpush.msra.mxu0 %v2683
    %2740 = vmatpush.msra.mxu0 %v2679
    %2741 = vmatpush.msra.mxu0 %v2675
    %2742 = vmatpush.msra.mxu0 %v2671
    %2743 = vmatpush.msra.mxu0 %v2667
    %2744 = vmatpush.msra.mxu0 %v2663
    %2745 = vmatpush.msra.mxu0 %v2659
    %2746 = vmatpush.msra.mxu0 %v2655
    %2747 = vmatpush.msra.mxu0 %v2651
    %2748 = vmatpush.msra.mxu0 %v2647
    %2749 = vmatpush.msra.mxu0 %v2643
    %2750 = vmatpush.msra.mxu0 %v2639
    %2751 = vmatpush.msra.mxu0 %v2635
    %2752 = vmatpush.msra.mxu0 %v2631
    %2753 = vmatmul.f32.gmra.mxu0 %v2627
    %v2754 = vpop.f32.mrf.mxu0
    %v2755 = vadd.f32 %v2695, %v2754
    %2756 = vdwg.mxu0
    %2757 = vmatpush.msra.mxu0 %v2692
    %2758 = vmatpush.msra.mxu0 %v2688
    %2759 = vmatpush.msra.mxu0 %v2684
    %2760 = vmatpush.msra.mxu0 %v2680
    %2761 = vmatpush.msra.mxu0 %v2676
    %2762 = vmatpush.msra.mxu0 %v2672
    %2763 = vmatpush.msra.mxu0 %v2668
    %2764 = vmatpush.msra.mxu0 %v2664
    %2765 = vmatpush.msra.mxu0 %v2660
    %2766 = vmatpush.msra.mxu0 %v2656
    %2767 = vmatpush.msra.mxu0 %v2652
    %2768 = vmatpush.msra.mxu0 %v2648
    %2769 = vmatpush.msra.mxu0 %v2644
    %2770 = vmatpush.msra.mxu0 %v2640
    %2771 = vmatpush.msra.mxu0 %v2636
    %2772 = vmatpush.msra.mxu0 %v2632
    %2773 = vmatmul.f32.gmra.mxu0 %v2627
    %v2774 = vpop.f32.mrf.mxu0
    %v2775 = vadd.f32 %v2696, %v2774
    %2776 = vdwg.mxu0
    %v2777 = vxor.u32 %v2715, 2147483648
    %v2778 = vxor.u32 %v2735, 2147483648
    %v2779 = vmul.f32 %v2777, 1.442695
    %v2780 = vpow.pop %v2779
    %v2781 = vmul.f32 %v2778, 1.442695
    %v2782 = vpow.pop %v2781
    %v2783 = vadd.f32 %v2780, 1.0
    %v2784 = vadd.f32 %v2782, 1.0
    %v2785 = vrcp.pop %v2783
    %v2786 = vmul.f32 %v2783, %v2785
    %v2787 = vsub.f32 1.0, %v2786
    %v2788 = vmul.f32 %v2785, %v2787
    %v2789 = vadd.f32 %v2785, %v2788
    %vm2790 = vweird.f32 %v2783
    %vm2791 = vweird.f32 %v2785
    %vm2792 = vmor %vm2790, %vm2791
    %v2793 = vsel %vm2792, %v2785, %v2789
    %v2794 = vand.u32 2147483647, %v2783
    %vm2795 = vcmp.eq.f32.partialorder %v2794, 8.507059e+37
    %v2796 = vand.u32 %v2783, 2147483648
    %v2797 = vor.u32 1.1754944e-38, %v2796
    %v2798 = vsel %vm2795, %v2797, %v2793
    %v2799 = vmul.f32 1.0, %v2798
    %v2800 = vrcp.pop %v2784
    %v2801 = vmul.f32 %v2784, %v2800
    %v2802 = vsub.f32 1.0, %v2801
    %v2803 = vmul.f32 %v2800, %v2802
    %v2804 = vadd.f32 %v2800, %v2803
    %vm2805 = vweird.f32 %v2784
    %vm2806 = vweird.f32 %v2800
    %vm2807 = vmor %vm2805, %vm2806
    %v2808 = vsel %vm2807, %v2800, %v2804
    %v2809 = vand.u32 2147483647, %v2784
    %vm2810 = vcmp.eq.f32.partialorder %v2809, 8.507059e+37
    %v2811 = vand.u32 %v2784, 2147483648
    %v2812 = vor.u32 1.1754944e-38, %v2811
    %v2813 = vsel %vm2810, %v2812, %v2808
    %v2814 = vmul.f32 1.0, %v2813
    %v2815 = vmul.f32 %v2799, %v2755
    %v2816 = vadd.f32 %v2775, %v2815
    %v2817 = vtanh.pop %v2816
    %v2818 = vsub.f32 %v2627, %v2817
    %v2819 = vmul.f32 %v2814, %v2818
    %v2820 = vadd.f32 %v2817, %v2819
    %2821 = vst [vmem:[#allocation3 + $0x58] sm:$0xff] %v2820
    %v2822 = vld [vmem:[#allocation4] sm:$0xff]
    %v2823 = vld [vmem:[#allocation4 + $0x8] sm:$0xff]
    %v2824 = vld [vmem:[#allocation4 + $0x10] sm:$0xff]
    %v2825 = vld [vmem:[#allocation4 + $0x18] sm:$0xff]
    %v2826 = vld [vmem:[#allocation4 + $0x20] sm:$0xff]
    %v2827 = vld [vmem:[#allocation4 + $0x28] sm:$0xff]
    %v2828 = vld [vmem:[#allocation4 + $0x30] sm:$0xff]
    %v2829 = vld [vmem:[#allocation4 + $0x38] sm:$0xff]
    %v2830 = vld [vmem:[#allocation4 + $0x40] sm:$0xff]
    %v2831 = vld [vmem:[#allocation4 + $0x48] sm:$0xff]
    %v2832 = vld [vmem:[#allocation4 + $0x50] sm:$0xff]
    %v2833 = vld [vmem:[#allocation4 + $0x58] sm:$0xff]
    %v2834 = vld [vmem:[#allocation4 + $0x60] sm:$0xff]
    %v2835 = vld [vmem:[#allocation4 + $0x68] sm:$0xff]
    %v2836 = vld [vmem:[#allocation4 + $0x70] sm:$0xff]
    %v2837 = vld [vmem:[#allocation4 + $0x78] sm:$0xff]
    %v2838 = vld [vmem:[#allocation4 + $0x80] sm:$0xff]
    %v2839 = vld [vmem:[#allocation4 + $0x88] sm:$0xff]
    %v2840 = vld [vmem:[#allocation4 + $0x90] sm:$0xff]
    %v2841 = vld [vmem:[#allocation4 + $0x98] sm:$0xff]
    %v2842 = vld [vmem:[#allocation4 + $0xa0] sm:$0xff]
    %v2843 = vld [vmem:[#allocation4 + $0xa8] sm:$0xff]
    %v2844 = vld [vmem:[#allocation4 + $0xb0] sm:$0xff]
    %v2845 = vld [vmem:[#allocation4 + $0xb8] sm:$0xff]
    %v2846 = vld [vmem:[#allocation4 + $0xc0] sm:$0xff]
    %v2847 = vld [vmem:[#allocation4 + $0xc8] sm:$0xff]
    %v2848 = vld [vmem:[#allocation4 + $0xd0] sm:$0xff]
    %v2849 = vld [vmem:[#allocation4 + $0xd8] sm:$0xff]
    %v2850 = vld [vmem:[#allocation4 + $0xe0] sm:$0xff]
    %v2851 = vld [vmem:[#allocation4 + $0xe8] sm:$0xff]
    %v2852 = vld [vmem:[#allocation4 + $0xf0] sm:$0xff]
    %v2853 = vld [vmem:[#allocation4 + $0xf8] sm:$0xff]
    %v2854 = vld [vmem:[#allocation4 + $0x100] sm:$0xff]
    %v2855 = vld [vmem:[#allocation4 + $0x108] sm:$0xff]
    %v2856 = vld [vmem:[#allocation4 + $0x110] sm:$0xff]
    %v2857 = vld [vmem:[#allocation4 + $0x118] sm:$0xff]
    %v2858 = vld [vmem:[#allocation4 + $0x120] sm:$0xff]
    %v2859 = vld [vmem:[#allocation4 + $0x128] sm:$0xff]
    %v2860 = vld [vmem:[#allocation4 + $0x130] sm:$0xff]
    %v2861 = vld [vmem:[#allocation4 + $0x138] sm:$0xff]
    %v2862 = vld [vmem:[#allocation4 + $0x140] sm:$0xff]
    %v2863 = vld [vmem:[#allocation4 + $0x148] sm:$0xff]
    %v2864 = vld [vmem:[#allocation4 + $0x150] sm:$0xff]
    %v2865 = vld [vmem:[#allocation4 + $0x158] sm:$0xff]
    %v2866 = vld [vmem:[#allocation4 + $0x160] sm:$0xff]
    %v2867 = vld [vmem:[#allocation4 + $0x168] sm:$0xff]
    %v2868 = vld [vmem:[#allocation4 + $0x170] sm:$0xff]
    %v2869 = vld [vmem:[#allocation4 + $0x178] sm:$0xff]
    %v2870 = vld [vmem:[#allocation4 + $0x180] sm:$0xff]
    %v2871 = vld [vmem:[#allocation4 + $0x188] sm:$0xff]
    %v2872 = vld [vmem:[#allocation4 + $0x190] sm:$0xff]
    %v2873 = vld [vmem:[#allocation4 + $0x198] sm:$0xff]
    %v2874 = vld [vmem:[#allocation4 + $0x1a0] sm:$0xff]
    %v2875 = vld [vmem:[#allocation4 + $0x1a8] sm:$0xff]
    %v2876 = vld [vmem:[#allocation4 + $0x1b0] sm:$0xff]
    %v2877 = vld [vmem:[#allocation4 + $0x1b8] sm:$0xff]
    %v2878 = vld [vmem:[#allocation4 + $0x1c0] sm:$0xff]
    %v2879 = vld [vmem:[#allocation4 + $0x1c8] sm:$0xff]
    %v2880 = vld [vmem:[#allocation4 + $0x1d0] sm:$0xff]
    %v2881 = vld [vmem:[#allocation4 + $0x1d8] sm:$0xff]
    %v2882 = vld [vmem:[#allocation4 + $0x1e0] sm:$0xff]
    %v2883 = vld [vmem:[#allocation4 + $0x1e8] sm:$0xff]
    %v2884 = vld [vmem:[#allocation4 + $0x1f0] sm:$0xff]
    %v2885 = vld [vmem:[#allocation4 + $0x1f8] sm:$0xff]
    %v2886 = vld [vmem:[#allocation2 + $0x1a0] sm:$0xff]
    %v2887 = vld [vmem:[#allocation2 + $0x1a8] sm:$0xff]
    %v2888 = vld [vmem:[#allocation2 + $0x1b0] sm:$0xff]
    %v2889 = vld [vmem:[#allocation2 + $0x1b8] sm:$0xff]
    %2890 = vmatpush.msra.mxu0 %v2882
    %2891 = vmatpush.msra.mxu0 %v2878
    %2892 = vmatpush.msra.mxu0 %v2874
    %2893 = vmatpush.msra.mxu0 %v2870
    %2894 = vmatpush.msra.mxu0 %v2866
    %2895 = vmatpush.msra.mxu0 %v2862
    %2896 = vmatpush.msra.mxu0 %v2858
    %2897 = vmatpush.msra.mxu0 %v2854
    %2898 = vmatpush.msra.mxu0 %v2850
    %2899 = vmatpush.msra.mxu0 %v2846
    %2900 = vmatpush.msra.mxu0 %v2842
    %2901 = vmatpush.msra.mxu0 %v2838
    %2902 = vmatpush.msra.mxu0 %v2834
    %2903 = vmatpush.msra.mxu0 %v2830
    %2904 = vmatpush.msra.mxu0 %v2826
    %2905 = vmatpush.msra.mxu0 %v2822
    %2906 = vmatmul.f32.gmra.mxu0 %v2820
    %v2907 = vpop.f32.mrf.mxu0
    %v2908 = vadd.f32 %v2886, %v2907
    %2909 = vdwg.mxu0
    %2910 = vmatpush.msra.mxu0 %v2883
    %2911 = vmatpush.msra.mxu0 %v2879
    %2912 = vmatpush.msra.mxu0 %v2875
    %2913 = vmatpush.msra.mxu0 %v2871
    %2914 = vmatpush.msra.mxu0 %v2867
    %2915 = vmatpush.msra.mxu0 %v2863
    %2916 = vmatpush.msra.mxu0 %v2859
    %2917 = vmatpush.msra.mxu0 %v2855
    %2918 = vmatpush.msra.mxu0 %v2851
    %2919 = vmatpush.msra.mxu0 %v2847
    %2920 = vmatpush.msra.mxu0 %v2843
    %2921 = vmatpush.msra.mxu0 %v2839
    %2922 = vmatpush.msra.mxu0 %v2835
    %2923 = vmatpush.msra.mxu0 %v2831
    %2924 = vmatpush.msra.mxu0 %v2827
    %2925 = vmatpush.msra.mxu0 %v2823
    %2926 = vmatmul.f32.gmra.mxu0 %v2820
    %v2927 = vpop.f32.mrf.mxu0
    %v2928 = vadd.f32 %v2887, %v2927
    %2929 = vdwg.mxu0
    %2930 = vmatpush.msra.mxu0 %v2884
    %2931 = vmatpush.msra.mxu0 %v2880
    %2932 = vmatpush.msra.mxu0 %v2876
    %2933 = vmatpush.msra.mxu0 %v2872
    %2934 = vmatpush.msra.mxu0 %v2868
    %2935 = vmatpush.msra.mxu0 %v2864
    %2936 = vmatpush.msra.mxu0 %v2860
    %2937 = vmatpush.msra.mxu0 %v2856
    %2938 = vmatpush.msra.mxu0 %v2852
    %2939 = vmatpush.msra.mxu0 %v2848
    %2940 = vmatpush.msra.mxu0 %v2844
    %2941 = vmatpush.msra.mxu0 %v2840
    %2942 = vmatpush.msra.mxu0 %v2836
    %2943 = vmatpush.msra.mxu0 %v2832
    %2944 = vmatpush.msra.mxu0 %v2828
    %2945 = vmatpush.msra.mxu0 %v2824
    %2946 = vmatmul.f32.gmra.mxu0 %v2820
    %v2947 = vpop.f32.mrf.mxu0
    %v2948 = vadd.f32 %v2888, %v2947
    %2949 = vdwg.mxu0
    %2950 = vmatpush.msra.mxu0 %v2885
    %2951 = vmatpush.msra.mxu0 %v2881
    %2952 = vmatpush.msra.mxu0 %v2877
    %2953 = vmatpush.msra.mxu0 %v2873
    %2954 = vmatpush.msra.mxu0 %v2869
    %2955 = vmatpush.msra.mxu0 %v2865
    %2956 = vmatpush.msra.mxu0 %v2861
    %2957 = vmatpush.msra.mxu0 %v2857
    %2958 = vmatpush.msra.mxu0 %v2853
    %2959 = vmatpush.msra.mxu0 %v2849
    %2960 = vmatpush.msra.mxu0 %v2845
    %2961 = vmatpush.msra.mxu0 %v2841
    %2962 = vmatpush.msra.mxu0 %v2837
    %2963 = vmatpush.msra.mxu0 %v2833
    %2964 = vmatpush.msra.mxu0 %v2829
    %2965 = vmatpush.msra.mxu0 %v2825
    %2966 = vmatmul.f32.gmra.mxu0 %v2820
    %v2967 = vpop.f32.mrf.mxu0
    %v2968 = vadd.f32 %v2889, %v2967
    %2969 = vdwg.mxu0
    %v2970 = vxor.u32 %v2908, 2147483648
    %v2971 = vxor.u32 %v2928, 2147483648
    %v2972 = vmul.f32 %v2970, 1.442695
    %v2973 = vpow.pop %v2972
    %v2974 = vmul.f32 %v2971, 1.442695
    %v2975 = vpow.pop %v2974
    %v2976 = vadd.f32 %v2973, 1.0
    %v2977 = vadd.f32 %v2975, 1.0
    %v2978 = vrcp.pop %v2976
    %v2979 = vmul.f32 %v2976, %v2978
    %v2980 = vsub.f32 1.0, %v2979
    %v2981 = vmul.f32 %v2978, %v2980
    %v2982 = vadd.f32 %v2978, %v2981
    %vm2983 = vweird.f32 %v2976
    %vm2984 = vweird.f32 %v2978
    %vm2985 = vmor %vm2983, %vm2984
    %v2986 = vsel %vm2985, %v2978, %v2982
    %v2987 = vand.u32 2147483647, %v2976
    %vm2988 = vcmp.eq.f32.partialorder %v2987, 8.507059e+37
    %v2989 = vand.u32 %v2976, 2147483648
    %v2990 = vor.u32 1.1754944e-38, %v2989
    %v2991 = vsel %vm2988, %v2990, %v2986
    %v2992 = vmul.f32 1.0, %v2991
    %v2993 = vrcp.pop %v2977
    %v2994 = vmul.f32 %v2977, %v2993
    %v2995 = vsub.f32 1.0, %v2994
    %v2996 = vmul.f32 %v2993, %v2995
    %v2997 = vadd.f32 %v2993, %v2996
    %vm2998 = vweird.f32 %v2977
    %vm2999 = vweird.f32 %v2993
    %vm3000 = vmor %vm2998, %vm2999
    %v3001 = vsel %vm3000, %v2993, %v2997
    %v3002 = vand.u32 2147483647, %v2977
    %vm3003 = vcmp.eq.f32.partialorder %v3002, 8.507059e+37
    %v3004 = vand.u32 %v2977, 2147483648
    %v3005 = vor.u32 1.1754944e-38, %v3004
    %v3006 = vsel %vm3003, %v3005, %v3001
    %v3007 = vmul.f32 1.0, %v3006
    %v3008 = vmul.f32 %v2992, %v2948
    %v3009 = vadd.f32 %v2968, %v3008
    %v3010 = vtanh.pop %v3009
    %v3011 = vsub.f32 %v2820, %v3010
    %v3012 = vmul.f32 %v3007, %v3011
    %v3013 = vadd.f32 %v3010, %v3012
    %3014 = vst [vmem:[#allocation3 + $0x60] sm:$0xff] %v3013
    %v3015 = vld [vmem:[#allocation4] sm:$0xff]
    %v3016 = vld [vmem:[#allocation4 + $0x8] sm:$0xff]
    %v3017 = vld [vmem:[#allocation4 + $0x10] sm:$0xff]
    %v3018 = vld [vmem:[#allocation4 + $0x18] sm:$0xff]
    %v3019 = vld [vmem:[#allocation4 + $0x20] sm:$0xff]
    %v3020 = vld [vmem:[#allocation4 + $0x28] sm:$0xff]
    %v3021 = vld [vmem:[#allocation4 + $0x30] sm:$0xff]
    %v3022 = vld [vmem:[#allocation4 + $0x38] sm:$0xff]
    %v3023 = vld [vmem:[#allocation4 + $0x40] sm:$0xff]
    %v3024 = vld [vmem:[#allocation4 + $0x48] sm:$0xff]
    %v3025 = vld [vmem:[#allocation4 + $0x50] sm:$0xff]
    %v3026 = vld [vmem:[#allocation4 + $0x58] sm:$0xff]
    %v3027 = vld [vmem:[#allocation4 + $0x60] sm:$0xff]
    %v3028 = vld [vmem:[#allocation4 + $0x68] sm:$0xff]
    %v3029 = vld [vmem:[#allocation4 + $0x70] sm:$0xff]
    %v3030 = vld [vmem:[#allocation4 + $0x78] sm:$0xff]
    %v3031 = vld [vmem:[#allocation4 + $0x80] sm:$0xff]
    %v3032 = vld [vmem:[#allocation4 + $0x88] sm:$0xff]
    %v3033 = vld [vmem:[#allocation4 + $0x90] sm:$0xff]
    %v3034 = vld [vmem:[#allocation4 + $0x98] sm:$0xff]
    %v3035 = vld [vmem:[#allocation4 + $0xa0] sm:$0xff]
    %v3036 = vld [vmem:[#allocation4 + $0xa8] sm:$0xff]
    %v3037 = vld [vmem:[#allocation4 + $0xb0] sm:$0xff]
    %v3038 = vld [vmem:[#allocation4 + $0xb8] sm:$0xff]
    %v3039 = vld [vmem:[#allocation4 + $0xc0] sm:$0xff]
    %v3040 = vld [vmem:[#allocation4 + $0xc8] sm:$0xff]
    %v3041 = vld [vmem:[#allocation4 + $0xd0] sm:$0xff]
    %v3042 = vld [vmem:[#allocation4 + $0xd8] sm:$0xff]
    %v3043 = vld [vmem:[#allocation4 + $0xe0] sm:$0xff]
    %v3044 = vld [vmem:[#allocation4 + $0xe8] sm:$0xff]
    %v3045 = vld [vmem:[#allocation4 + $0xf0] sm:$0xff]
    %v3046 = vld [vmem:[#allocation4 + $0xf8] sm:$0xff]
    %v3047 = vld [vmem:[#allocation4 + $0x100] sm:$0xff]
    %v3048 = vld [vmem:[#allocation4 + $0x108] sm:$0xff]
    %v3049 = vld [vmem:[#allocation4 + $0x110] sm:$0xff]
    %v3050 = vld [vmem:[#allocation4 + $0x118] sm:$0xff]
    %v3051 = vld [vmem:[#allocation4 + $0x120] sm:$0xff]
    %v3052 = vld [vmem:[#allocation4 + $0x128] sm:$0xff]
    %v3053 = vld [vmem:[#allocation4 + $0x130] sm:$0xff]
    %v3054 = vld [vmem:[#allocation4 + $0x138] sm:$0xff]
    %v3055 = vld [vmem:[#allocation4 + $0x140] sm:$0xff]
    %v3056 = vld [vmem:[#allocation4 + $0x148] sm:$0xff]
    %v3057 = vld [vmem:[#allocation4 + $0x150] sm:$0xff]
    %v3058 = vld [vmem:[#allocation4 + $0x158] sm:$0xff]
    %v3059 = vld [vmem:[#allocation4 + $0x160] sm:$0xff]
    %v3060 = vld [vmem:[#allocation4 + $0x168] sm:$0xff]
    %v3061 = vld [vmem:[#allocation4 + $0x170] sm:$0xff]
    %v3062 = vld [vmem:[#allocation4 + $0x178] sm:$0xff]
    %v3063 = vld [vmem:[#allocation4 + $0x180] sm:$0xff]
    %v3064 = vld [vmem:[#allocation4 + $0x188] sm:$0xff]
    %v3065 = vld [vmem:[#allocation4 + $0x190] sm:$0xff]
    %v3066 = vld [vmem:[#allocation4 + $0x198] sm:$0xff]
    %v3067 = vld [vmem:[#allocation4 + $0x1a0] sm:$0xff]
    %v3068 = vld [vmem:[#allocation4 + $0x1a8] sm:$0xff]
    %v3069 = vld [vmem:[#allocation4 + $0x1b0] sm:$0xff]
    %v3070 = vld [vmem:[#allocation4 + $0x1b8] sm:$0xff]
    %v3071 = vld [vmem:[#allocation4 + $0x1c0] sm:$0xff]
    %v3072 = vld [vmem:[#allocation4 + $0x1c8] sm:$0xff]
    %v3073 = vld [vmem:[#allocation4 + $0x1d0] sm:$0xff]
    %v3074 = vld [vmem:[#allocation4 + $0x1d8] sm:$0xff]
    %v3075 = vld [vmem:[#allocation4 + $0x1e0] sm:$0xff]
    %v3076 = vld [vmem:[#allocation4 + $0x1e8] sm:$0xff]
    %v3077 = vld [vmem:[#allocation4 + $0x1f0] sm:$0xff]
    %v3078 = vld [vmem:[#allocation4 + $0x1f8] sm:$0xff]
    %v3079 = vld [vmem:[#allocation2 + $0x1c0] sm:$0xff]
    %v3080 = vld [vmem:[#allocation2 + $0x1c8] sm:$0xff]
    %v3081 = vld [vmem:[#allocation2 + $0x1d0] sm:$0xff]
    %v3082 = vld [vmem:[#allocation2 + $0x1d8] sm:$0xff]
    %3083 = vmatpush.msra.mxu0 %v3075
    %3084 = vmatpush.msra.mxu0 %v3071
    %3085 = vmatpush.msra.mxu0 %v3067
    %3086 = vmatpush.msra.mxu0 %v3063
    %3087 = vmatpush.msra.mxu0 %v3059
    %3088 = vmatpush.msra.mxu0 %v3055
    %3089 = vmatpush.msra.mxu0 %v3051
    %3090 = vmatpush.msra.mxu0 %v3047
    %3091 = vmatpush.msra.mxu0 %v3043
    %3092 = vmatpush.msra.mxu0 %v3039
    %3093 = vmatpush.msra.mxu0 %v3035
    %3094 = vmatpush.msra.mxu0 %v3031
    %3095 = vmatpush.msra.mxu0 %v3027
    %3096 = vmatpush.msra.mxu0 %v3023
    %3097 = vmatpush.msra.mxu0 %v3019
    %3098 = vmatpush.msra.mxu0 %v3015
    %3099 = vmatmul.f32.gmra.mxu0 %v3013
    %v3100 = vpop.f32.mrf.mxu0
    %v3101 = vadd.f32 %v3079, %v3100
    %3102 = vdwg.mxu0
    %3103 = vmatpush.msra.mxu0 %v3076
    %3104 = vmatpush.msra.mxu0 %v3072
    %3105 = vmatpush.msra.mxu0 %v3068
    %3106 = vmatpush.msra.mxu0 %v3064
    %3107 = vmatpush.msra.mxu0 %v3060
    %3108 = vmatpush.msra.mxu0 %v3056
    %3109 = vmatpush.msra.mxu0 %v3052
    %3110 = vmatpush.msra.mxu0 %v3048
    %3111 = vmatpush.msra.mxu0 %v3044
    %3112 = vmatpush.msra.mxu0 %v3040
    %3113 = vmatpush.msra.mxu0 %v3036
    %3114 = vmatpush.msra.mxu0 %v3032
    %3115 = vmatpush.msra.mxu0 %v3028
    %3116 = vmatpush.msra.mxu0 %v3024
    %3117 = vmatpush.msra.mxu0 %v3020
    %3118 = vmatpush.msra.mxu0 %v3016
    %3119 = vmatmul.f32.gmra.mxu0 %v3013
    %v3120 = vpop.f32.mrf.mxu0
    %v3121 = vadd.f32 %v3080, %v3120
    %3122 = vdwg.mxu0
    %3123 = vmatpush.msra.mxu0 %v3077
    %3124 = vmatpush.msra.mxu0 %v3073
    %3125 = vmatpush.msra.mxu0 %v3069
    %3126 = vmatpush.msra.mxu0 %v3065
    %3127 = vmatpush.msra.mxu0 %v3061
    %3128 = vmatpush.msra.mxu0 %v3057
    %3129 = vmatpush.msra.mxu0 %v3053
    %3130 = vmatpush.msra.mxu0 %v3049
    %3131 = vmatpush.msra.mxu0 %v3045
    %3132 = vmatpush.msra.mxu0 %v3041
    %3133 = vmatpush.msra.mxu0 %v3037
    %3134 = vmatpush.msra.mxu0 %v3033
    %3135 = vmatpush.msra.mxu0 %v3029
    %3136 = vmatpush.msra.mxu0 %v3025
    %3137 = vmatpush.msra.mxu0 %v3021
    %3138 = vmatpush.msra.mxu0 %v3017
    %3139 = vmatmul.f32.gmra.mxu0 %v3013
    %v3140 = vpop.f32.mrf.mxu0
    %v3141 = vadd.f32 %v3081, %v3140
    %3142 = vdwg.mxu0
    %3143 = vmatpush.msra.mxu0 %v3078
    %3144 = vmatpush.msra.mxu0 %v3074
    %3145 = vmatpush.msra.mxu0 %v3070
    %3146 = vmatpush.msra.mxu0 %v3066
    %3147 = vmatpush.msra.mxu0 %v3062
    %3148 = vmatpush.msra.mxu0 %v3058
    %3149 = vmatpush.msra.mxu0 %v3054
    %3150 = vmatpush.msra.mxu0 %v3050
    %3151 = vmatpush.msra.mxu0 %v3046
    %3152 = vmatpush.msra.mxu0 %v3042
    %3153 = vmatpush.msra.mxu0 %v3038
    %3154 = vmatpush.msra.mxu0 %v3034
    %3155 = vmatpush.msra.mxu0 %v3030
    %3156 = vmatpush.msra.mxu0 %v3026
    %3157 = vmatpush.msra.mxu0 %v3022
    %3158 = vmatpush.msra.mxu0 %v3018
    %3159 = vmatmul.f32.gmra.mxu0 %v3013
    %v3160 = vpop.f32.mrf.mxu0
    %v3161 = vadd.f32 %v3082, %v3160
    %3162 = vdwg.mxu0
    %v3163 = vxor.u32 %v3101, 2147483648
    %v3164 = vxor.u32 %v3121, 2147483648
    %v3165 = vmul.f32 %v3163, 1.442695
    %v3166 = vpow.pop %v3165
    %v3167 = vmul.f32 %v3164, 1.442695
    %v3168 = vpow.pop %v3167
    %v3169 = vadd.f32 %v3166, 1.0
    %v3170 = vadd.f32 %v3168, 1.0
    %v3171 = vrcp.pop %v3169
    %v3172 = vmul.f32 %v3169, %v3171
    %v3173 = vsub.f32 1.0, %v3172
    %v3174 = vmul.f32 %v3171, %v3173
    %v3175 = vadd.f32 %v3171, %v3174
    %vm3176 = vweird.f32 %v3169
    %vm3177 = vweird.f32 %v3171
    %vm3178 = vmor %vm3176, %vm3177
    %v3179 = vsel %vm3178, %v3171, %v3175
    %v3180 = vand.u32 2147483647, %v3169
    %vm3181 = vcmp.eq.f32.partialorder %v3180, 8.507059e+37
    %v3182 = vand.u32 %v3169, 2147483648
    %v3183 = vor.u32 1.1754944e-38, %v3182
    %v3184 = vsel %vm3181, %v3183, %v3179
    %v3185 = vmul.f32 1.0, %v3184
    %v3186 = vrcp.pop %v3170
    %v3187 = vmul.f32 %v3170, %v3186
    %v3188 = vsub.f32 1.0, %v3187
    %v3189 = vmul.f32 %v3186, %v3188
    %v3190 = vadd.f32 %v3186, %v3189
    %vm3191 = vweird.f32 %v3170
    %vm3192 = vweird.f32 %v3186
    %vm3193 = vmor %vm3191, %vm3192
    %v3194 = vsel %vm3193, %v3186, %v3190
    %v3195 = vand.u32 2147483647, %v3170
    %vm3196 = vcmp.eq.f32.partialorder %v3195, 8.507059e+37
    %v3197 = vand.u32 %v3170, 2147483648
    %v3198 = vor.u32 1.1754944e-38, %v3197
    %v3199 = vsel %vm3196, %v3198, %v3194
    %v3200 = vmul.f32 1.0, %v3199
    %v3201 = vmul.f32 %v3185, %v3141
    %v3202 = vadd.f32 %v3161, %v3201
    %v3203 = vtanh.pop %v3202
    %v3204 = vsub.f32 %v3013, %v3203
    %v3205 = vmul.f32 %v3200, %v3204
    %v3206 = vadd.f32 %v3203, %v3205
    %3207 = vst [vmem:[#allocation3 + $0x68] sm:$0xff] %v3206
    %v3208 = vld [vmem:[#allocation4] sm:$0xff]
    %v3209 = vld [vmem:[#allocation4 + $0x8] sm:$0xff]
    %v3210 = vld [vmem:[#allocation4 + $0x10] sm:$0xff]
    %v3211 = vld [vmem:[#allocation4 + $0x18] sm:$0xff]
    %v3212 = vld [vmem:[#allocation4 + $0x20] sm:$0xff]
    %v3213 = vld [vmem:[#allocation4 + $0x28] sm:$0xff]
    %v3214 = vld [vmem:[#allocation4 + $0x30] sm:$0xff]
    %v3215 = vld [vmem:[#allocation4 + $0x38] sm:$0xff]
    %v3216 = vld [vmem:[#allocation4 + $0x40] sm:$0xff]
    %v3217 = vld [vmem:[#allocation4 + $0x48] sm:$0xff]
    %v3218 = vld [vmem:[#allocation4 + $0x50] sm:$0xff]
    %v3219 = vld [vmem:[#allocation4 + $0x58] sm:$0xff]
    %v3220 = vld [vmem:[#allocation4 + $0x60] sm:$0xff]
    %v3221 = vld [vmem:[#allocation4 + $0x68] sm:$0xff]
    %v3222 = vld [vmem:[#allocation4 + $0x70] sm:$0xff]
    %v3223 = vld [vmem:[#allocation4 + $0x78] sm:$0xff]
    %v3224 = vld [vmem:[#allocation4 + $0x80] sm:$0xff]
    %v3225 = vld [vmem:[#allocation4 + $0x88] sm:$0xff]
    %v3226 = vld [vmem:[#allocation4 + $0x90] sm:$0xff]
    %v3227 = vld [vmem:[#allocation4 + $0x98] sm:$0xff]
    %v3228 = vld [vmem:[#allocation4 + $0xa0] sm:$0xff]
    %v3229 = vld [vmem:[#allocation4 + $0xa8] sm:$0xff]
    %v3230 = vld [vmem:[#allocation4 + $0xb0] sm:$0xff]
    %v3231 = vld [vmem:[#allocation4 + $0xb8] sm:$0xff]
    %v3232 = vld [vmem:[#allocation4 + $0xc0] sm:$0xff]
    %v3233 = vld [vmem:[#allocation4 + $0xc8] sm:$0xff]
    %v3234 = vld [vmem:[#allocation4 + $0xd0] sm:$0xff]
    %v3235 = vld [vmem:[#allocation4 + $0xd8] sm:$0xff]
    %v3236 = vld [vmem:[#allocation4 + $0xe0] sm:$0xff]
    %v3237 = vld [vmem:[#allocation4 + $0xe8] sm:$0xff]
    %v3238 = vld [vmem:[#allocation4 + $0xf0] sm:$0xff]
    %v3239 = vld [vmem:[#allocation4 + $0xf8] sm:$0xff]
    %v3240 = vld [vmem:[#allocation4 + $0x100] sm:$0xff]
    %v3241 = vld [vmem:[#allocation4 + $0x108] sm:$0xff]
    %v3242 = vld [vmem:[#allocation4 + $0x110] sm:$0xff]
    %v3243 = vld [vmem:[#allocation4 + $0x118] sm:$0xff]
    %v3244 = vld [vmem:[#allocation4 + $0x120] sm:$0xff]
    %v3245 = vld [vmem:[#allocation4 + $0x128] sm:$0xff]
    %v3246 = vld [vmem:[#allocation4 + $0x130] sm:$0xff]
    %v3247 = vld [vmem:[#allocation4 + $0x138] sm:$0xff]
    %v3248 = vld [vmem:[#allocation4 + $0x140] sm:$0xff]
    %v3249 = vld [vmem:[#allocation4 + $0x148] sm:$0xff]
    %v3250 = vld [vmem:[#allocation4 + $0x150] sm:$0xff]
    %v3251 = vld [vmem:[#allocation4 + $0x158] sm:$0xff]
    %v3252 = vld [vmem:[#allocation4 + $0x160] sm:$0xff]
    %v3253 = vld [vmem:[#allocation4 + $0x168] sm:$0xff]
    %v3254 = vld [vmem:[#allocation4 + $0x170] sm:$0xff]
    %v3255 = vld [vmem:[#allocation4 + $0x178] sm:$0xff]
    %v3256 = vld [vmem:[#allocation4 + $0x180] sm:$0xff]
    %v3257 = vld [vmem:[#allocation4 + $0x188] sm:$0xff]
    %v3258 = vld [vmem:[#allocation4 + $0x190] sm:$0xff]
    %v3259 = vld [vmem:[#allocation4 + $0x198] sm:$0xff]
    %v3260 = vld [vmem:[#allocation4 + $0x1a0] sm:$0xff]
    %v3261 = vld [vmem:[#allocation4 + $0x1a8] sm:$0xff]
    %v3262 = vld [vmem:[#allocation4 + $0x1b0] sm:$0xff]
    %v3263 = vld [vmem:[#allocation4 + $0x1b8] sm:$0xff]
    %v3264 = vld [vmem:[#allocation4 + $0x1c0] sm:$0xff]
    %v3265 = vld [vmem:[#allocation4 + $0x1c8] sm:$0xff]
    %v3266 = vld [vmem:[#allocation4 + $0x1d0] sm:$0xff]
    %v3267 = vld [vmem:[#allocation4 + $0x1d8] sm:$0xff]
    %v3268 = vld [vmem:[#allocation4 + $0x1e0] sm:$0xff]
    %v3269 = vld [vmem:[#allocation4 + $0x1e8] sm:$0xff]
    %v3270 = vld [vmem:[#allocation4 + $0x1f0] sm:$0xff]
    %v3271 = vld [vmem:[#allocation4 + $0x1f8] sm:$0xff]
    %v3272 = vld [vmem:[#allocation2 + $0x1e0] sm:$0xff]
    %v3273 = vld [vmem:[#allocation2 + $0x1e8] sm:$0xff]
    %v3274 = vld [vmem:[#allocation2 + $0x1f0] sm:$0xff]
    %v3275 = vld [vmem:[#allocation2 + $0x1f8] sm:$0xff]
    %3276 = vmatpush.msra.mxu0 %v3268
    %3277 = vmatpush.msra.mxu0 %v3264
    %3278 = vmatpush.msra.mxu0 %v3260
    %3279 = vmatpush.msra.mxu0 %v3256
    %3280 = vmatpush.msra.mxu0 %v3252
    %3281 = vmatpush.msra.mxu0 %v3248
    %3282 = vmatpush.msra.mxu0 %v3244
    %3283 = vmatpush.msra.mxu0 %v3240
    %3284 = vmatpush.msra.mxu0 %v3236
    %3285 = vmatpush.msra.mxu0 %v3232
    %3286 = vmatpush.msra.mxu0 %v3228
    %3287 = vmatpush.msra.mxu0 %v3224
    %3288 = vmatpush.msra.mxu0 %v3220
    %3289 = vmatpush.msra.mxu0 %v3216
    %3290 = vmatpush.msra.mxu0 %v3212
    %3291 = vmatpush.msra.mxu0 %v3208
    %3292 = vmatmul.f32.gmra.mxu0 %v3206
    %v3293 = vpop.f32.mrf.mxu0
    %v3294 = vadd.f32 %v3272, %v3293
    %3295 = vdwg.mxu0
    %3296 = vmatpush.msra.mxu0 %v3269
    %3297 = vmatpush.msra.mxu0 %v3265
    %3298 = vmatpush.msra.mxu0 %v3261
    %3299 = vmatpush.msra.mxu0 %v3257
    %3300 = vmatpush.msra.mxu0 %v3253
    %3301 = vmatpush.msra.mxu0 %v3249
    %3302 = vmatpush.msra.mxu0 %v3245
    %3303 = vmatpush.msra.mxu0 %v3241
    %3304 = vmatpush.msra.mxu0 %v3237
    %3305 = vmatpush.msra.mxu0 %v3233
    %3306 = vmatpush.msra.mxu0 %v3229
    %3307 = vmatpush.msra.mxu0 %v3225
    %3308 = vmatpush.msra.mxu0 %v3221
    %3309 = vmatpush.msra.mxu0 %v3217
    %3310 = vmatpush.msra.mxu0 %v3213
    %3311 = vmatpush.msra.mxu0 %v3209
    %3312 = vmatmul.f32.gmra.mxu0 %v3206
    %v3313 = vpop.f32.mrf.mxu0
    %v3314 = vadd.f32 %v3273, %v3313
    %3315 = vdwg.mxu0
    %3316 = vmatpush.msra.mxu0 %v3270
    %3317 = vmatpush.msra.mxu0 %v3266
    %3318 = vmatpush.msra.mxu0 %v3262
    %3319 = vmatpush.msra.mxu0 %v3258
    %3320 = vmatpush.msra.mxu0 %v3254
    %3321 = vmatpush.msra.mxu0 %v3250
    %3322 = vmatpush.msra.mxu0 %v3246
    %3323 = vmatpush.msra.mxu0 %v3242
    %3324 = vmatpush.msra.mxu0 %v3238
    %3325 = vmatpush.msra.mxu0 %v3234
    %3326 = vmatpush.msra.mxu0 %v3230
    %3327 = vmatpush.msra.mxu0 %v3226
    %3328 = vmatpush.msra.mxu0 %v3222
    %3329 = vmatpush.msra.mxu0 %v3218
    %3330 = vmatpush.msra.mxu0 %v3214
    %3331 = vmatpush.msra.mxu0 %v3210
    %3332 = vmatmul.f32.gmra.mxu0 %v3206
    %v3333 = vpop.f32.mrf.mxu0
    %v3334 = vadd.f32 %v3274, %v3333
    %3335 = vdwg.mxu0
    %3336 = vmatpush.msra.mxu0 %v3271
    %3337 = vmatpush.msra.mxu0 %v3267
    %3338 = vmatpush.msra.mxu0 %v3263
    %3339 = vmatpush.msra.mxu0 %v3259
    %3340 = vmatpush.msra.mxu0 %v3255
    %3341 = vmatpush.msra.mxu0 %v3251
    %3342 = vmatpush.msra.mxu0 %v3247
    %3343 = vmatpush.msra.mxu0 %v3243
    %3344 = vmatpush.msra.mxu0 %v3239
    %3345 = vmatpush.msra.mxu0 %v3235
    %3346 = vmatpush.msra.mxu0 %v3231
    %3347 = vmatpush.msra.mxu0 %v3227
    %3348 = vmatpush.msra.mxu0 %v3223
    %3349 = vmatpush.msra.mxu0 %v3219
    %3350 = vmatpush.msra.mxu0 %v3215
    %3351 = vmatpush.msra.mxu0 %v3211
    %3352 = vmatmul.f32.gmra.mxu0 %v3206
    %v3353 = vpop.f32.mrf.mxu0
    %v3354 = vadd.f32 %v3275, %v3353
    %3355 = vdwg.mxu0
    %v3356 = vxor.u32 %v3294, 2147483648
    %v3357 = vxor.u32 %v3314, 2147483648
    %v3358 = vmul.f32 %v3356, 1.442695
    %v3359 = vpow.pop %v3358
    %v3360 = vmul.f32 %v3357, 1.442695
    %v3361 = vpow.pop %v3360
    %v3362 = vadd.f32 %v3359, 1.0
    %v3363 = vadd.f32 %v3361, 1.0
    %v3364 = vrcp.pop %v3362
    %v3365 = vmul.f32 %v3362, %v3364
    %v3366 = vsub.f32 1.0, %v3365
    %v3367 = vmul.f32 %v3364, %v3366
    %v3368 = vadd.f32 %v3364, %v3367
    %vm3369 = vweird.f32 %v3362
    %vm3370 = vweird.f32 %v3364
    %vm3371 = vmor %vm3369, %vm3370
    %v3372 = vsel %vm3371, %v3364, %v3368
    %v3373 = vand.u32 2147483647, %v3362
    %vm3374 = vcmp.eq.f32.partialorder %v3373, 8.507059e+37
    %v3375 = vand.u32 %v3362, 2147483648
    %v3376 = vor.u32 1.1754944e-38, %v3375
    %v3377 = vsel %vm3374, %v3376, %v3372
    %v3378 = vmul.f32 1.0, %v3377
    %v3379 = vrcp.pop %v3363
    %v3380 = vmul.f32 %v3363, %v3379
    %v3381 = vsub.f32 1.0, %v3380
    %v3382 = vmul.f32 %v3379, %v3381
    %v3383 = vadd.f32 %v3379, %v3382
    %vm3384 = vweird.f32 %v3363
    %vm3385 = vweird.f32 %v3379
    %vm3386 = vmor %vm3384, %vm3385
    %v3387 = vsel %vm3386, %v3379, %v3383
    %v3388 = vand.u32 2147483647, %v3363
    %vm3389 = vcmp.eq.f32.partialorder %v3388, 8.507059e+37
    %v3390 = vand.u32 %v3363, 2147483648
    %v3391 = vor.u32 1.1754944e-38, %v3390
    %v3392 = vsel %vm3389, %v3391, %v3387
    %v3393 = vmul.f32 1.0, %v3392
    %v3394 = vmul.f32 %v3378, %v3334
    %v3395 = vadd.f32 %v3354, %v3394
    %v3396 = vtanh.pop %v3395
    %v3397 = vsub.f32 %v3206, %v3396
    %v3398 = vmul.f32 %v3393, %v3397
    %v3399 = vadd.f32 %v3396, %v3398
    %3400 = vst [vmem:[#allocation3 + $0x70] sm:$0xff] %v3399
    %v3401 = vld [vmem:[#allocation4] sm:$0xff]
    %v3402 = vld [vmem:[#allocation4 + $0x8] sm:$0xff]
    %v3403 = vld [vmem:[#allocation4 + $0x10] sm:$0xff]
    %v3404 = vld [vmem:[#allocation4 + $0x18] sm:$0xff]
    %v3405 = vld [vmem:[#allocation4 + $0x20] sm:$0xff]
    %v3406 = vld [vmem:[#allocation4 + $0x28] sm:$0xff]
    %v3407 = vld [vmem:[#allocation4 + $0x30] sm:$0xff]
    %v3408 = vld [vmem:[#allocation4 + $0x38] sm:$0xff]
    %v3409 = vld [vmem:[#allocation4 + $0x40] sm:$0xff]
    %v3410 = vld [vmem:[#allocation4 + $0x48] sm:$0xff]
    %v3411 = vld [vmem:[#allocation4 + $0x50] sm:$0xff]
    %v3412 = vld [vmem:[#allocation4 + $0x58] sm:$0xff]
    %v3413 = vld [vmem:[#allocation4 + $0x60] sm:$0xff]
    %v3414 = vld [vmem:[#allocation4 + $0x68] sm:$0xff]
    %v3415 = vld [vmem:[#allocation4 + $0x70] sm:$0xff]
    %v3416 = vld [vmem:[#allocation4 + $0x78] sm:$0xff]
    %v3417 = vld [vmem:[#allocation4 + $0x80] sm:$0xff]
    %v3418 = vld [vmem:[#allocation4 + $0x88] sm:$0xff]
    %v3419 = vld [vmem:[#allocation4 + $0x90] sm:$0xff]
    %v3420 = vld [vmem:[#allocation4 + $0x98] sm:$0xff]
    %v3421 = vld [vmem:[#allocation4 + $0xa0] sm:$0xff]
    %v3422 = vld [vmem:[#allocation4 + $0xa8] sm:$0xff]
    %v3423 = vld [vmem:[#allocation4 + $0xb0] sm:$0xff]
    %v3424 = vld [vmem:[#allocation4 + $0xb8] sm:$0xff]
    %v3425 = vld [vmem:[#allocation4 + $0xc0] sm:$0xff]
    %v3426 = vld [vmem:[#allocation4 + $0xc8] sm:$0xff]
    %v3427 = vld [vmem:[#allocation4 + $0xd0] sm:$0xff]
    %v3428 = vld [vmem:[#allocation4 + $0xd8] sm:$0xff]
    %v3429 = vld [vmem:[#allocation4 + $0xe0] sm:$0xff]
    %v3430 = vld [vmem:[#allocation4 + $0xe8] sm:$0xff]
    %v3431 = vld [vmem:[#allocation4 + $0xf0] sm:$0xff]
    %v3432 = vld [vmem:[#allocation4 + $0xf8] sm:$0xff]
    %v3433 = vld [vmem:[#allocation4 + $0x100] sm:$0xff]
    %v3434 = vld [vmem:[#allocation4 + $0x108] sm:$0xff]
    %v3435 = vld [vmem:[#allocation4 + $0x110] sm:$0xff]
    %v3436 = vld [vmem:[#allocation4 + $0x118] sm:$0xff]
    %v3437 = vld [vmem:[#allocation4 + $0x120] sm:$0xff]
    %v3438 = vld [vmem:[#allocation4 + $0x128] sm:$0xff]
    %v3439 = vld [vmem:[#allocation4 + $0x130] sm:$0xff]
    %v3440 = vld [vmem:[#allocation4 + $0x138] sm:$0xff]
    %v3441 = vld [vmem:[#allocation4 + $0x140] sm:$0xff]
    %v3442 = vld [vmem:[#allocation4 + $0x148] sm:$0xff]
    %v3443 = vld [vmem:[#allocation4 + $0x150] sm:$0xff]
    %v3444 = vld [vmem:[#allocation4 + $0x158] sm:$0xff]
    %v3445 = vld [vmem:[#allocation4 + $0x160] sm:$0xff]
    %v3446 = vld [vmem:[#allocation4 + $0x168] sm:$0xff]
    %v3447 = vld [vmem:[#allocation4 + $0x170] sm:$0xff]
    %v3448 = vld [vmem:[#allocation4 + $0x178] sm:$0xff]
    %v3449 = vld [vmem:[#allocation4 + $0x180] sm:$0xff]
    %v3450 = vld [vmem:[#allocation4 + $0x188] sm:$0xff]
    %v3451 = vld [vmem:[#allocation4 + $0x190] sm:$0xff]
    %v3452 = vld [vmem:[#allocation4 + $0x198] sm:$0xff]
    %v3453 = vld [vmem:[#allocation4 + $0x1a0] sm:$0xff]
    %v3454 = vld [vmem:[#allocation4 + $0x1a8] sm:$0xff]
    %v3455 = vld [vmem:[#allocation4 + $0x1b0] sm:$0xff]
    %v3456 = vld [vmem:[#allocation4 + $0x1b8] sm:$0xff]
    %v3457 = vld [vmem:[#allocation4 + $0x1c0] sm:$0xff]
    %v3458 = vld [vmem:[#allocation4 + $0x1c8] sm:$0xff]
    %v3459 = vld [vmem:[#allocation4 + $0x1d0] sm:$0xff]
    %v3460 = vld [vmem:[#allocation4 + $0x1d8] sm:$0xff]
    %v3461 = vld [vmem:[#allocation4 + $0x1e0] sm:$0xff]
    %v3462 = vld [vmem:[#allocation4 + $0x1e8] sm:$0xff]
    %v3463 = vld [vmem:[#allocation4 + $0x1f0] sm:$0xff]
    %v3464 = vld [vmem:[#allocation4 + $0x1f8] sm:$0xff]
    %v3465 = vld [vmem:[#allocation2 + $0x1e0] sm:$0xff]
    %v3466 = vld [vmem:[#allocation2 + $0x1e8] sm:$0xff]
    %v3467 = vld [vmem:[#allocation2 + $0x1f0] sm:$0xff]
    %v3468 = vld [vmem:[#allocation2 + $0x1f8] sm:$0xff]
    %3469 = vmatpush.msra.mxu0 %v3461
    %3470 = vmatpush.msra.mxu0 %v3457
    %3471 = vmatpush.msra.mxu0 %v3453
    %3472 = vmatpush.msra.mxu0 %v3449
    %3473 = vmatpush.msra.mxu0 %v3445
    %3474 = vmatpush.msra.mxu0 %v3441
    %3475 = vmatpush.msra.mxu0 %v3437
    %3476 = vmatpush.msra.mxu0 %v3433
    %3477 = vmatpush.msra.mxu0 %v3429
    %3478 = vmatpush.msra.mxu0 %v3425
    %3479 = vmatpush.msra.mxu0 %v3421
    %3480 = vmatpush.msra.mxu0 %v3417
    %3481 = vmatpush.msra.mxu0 %v3413
    %3482 = vmatpush.msra.mxu0 %v3409
    %3483 = vmatpush.msra.mxu0 %v3405
    %3484 = vmatpush.msra.mxu0 %v3401
    %3485 = vmatmul.f32.gmra.mxu0 %v3399
    %v3486 = vpop.f32.mrf.mxu0
    %v3487 = vadd.f32 %v3465, %v3486
    %3488 = vdwg.mxu0
    %3489 = vmatpush.msra.mxu0 %v3462
    %3490 = vmatpush.msra.mxu0 %v3458
    %3491 = vmatpush.msra.mxu0 %v3454
    %3492 = vmatpush.msra.mxu0 %v3450
    %3493 = vmatpush.msra.mxu0 %v3446
    %3494 = vmatpush.msra.mxu0 %v3442
    %3495 = vmatpush.msra.mxu0 %v3438
    %3496 = vmatpush.msra.mxu0 %v3434
    %3497 = vmatpush.msra.mxu0 %v3430
    %3498 = vmatpush.msra.mxu0 %v3426
    %3499 = vmatpush.msra.mxu0 %v3422
    %3500 = vmatpush.msra.mxu0 %v3418
    %3501 = vmatpush.msra.mxu0 %v3414
    %3502 = vmatpush.msra.mxu0 %v3410
    %3503 = vmatpush.msra.mxu0 %v3406
    %3504 = vmatpush.msra.mxu0 %v3402
    %3505 = vmatmul.f32.gmra.mxu0 %v3399
    %v3506 = vpop.f32.mrf.mxu0
    %v3507 = vadd.f32 %v3466, %v3506
    %3508 = vdwg.mxu0
    %3509 = vmatpush.msra.mxu0 %v3463
    %3510 = vmatpush.msra.mxu0 %v3459
    %3511 = vmatpush.msra.mxu0 %v3455
    %3512 = vmatpush.msra.mxu0 %v3451
    %3513 = vmatpush.msra.mxu0 %v3447
    %3514 = vmatpush.msra.mxu0 %v3443
    %3515 = vmatpush.msra.mxu0 %v3439
    %3516 = vmatpush.msra.mxu0 %v3435
    %3517 = vmatpush.msra.mxu0 %v3431
    %3518 = vmatpush.msra.mxu0 %v3427
    %3519 = vmatpush.msra.mxu0 %v3423
    %3520 = vmatpush.msra.mxu0 %v3419
    %3521 = vmatpush.msra.mxu0 %v3415
    %3522 = vmatpush.msra.mxu0 %v3411
    %3523 = vmatpush.msra.mxu0 %v3407
    %3524 = vmatpush.msra.mxu0 %v3403
    %3525 = vmatmul.f32.gmra.mxu0 %v3399
    %v3526 = vpop.f32.mrf.mxu0
    %v3527 = vadd.f32 %v3467, %v3526
    %3528 = vdwg.mxu0
    %3529 = vmatpush.msra.mxu0 %v3464
    %3530 = vmatpush.msra.mxu0 %v3460
    %3531 = vmatpush.msra.mxu0 %v3456
    %3532 = vmatpush.msra.mxu0 %v3452
    %3533 = vmatpush.msra.mxu0 %v3448
    %3534 = vmatpush.msra.mxu0 %v3444
    %3535 = vmatpush.msra.mxu0 %v3440
    %3536 = vmatpush.msra.mxu0 %v3436
    %3537 = vmatpush.msra.mxu0 %v3432
    %3538 = vmatpush.msra.mxu0 %v3428
    %3539 = vmatpush.msra.mxu0 %v3424
    %3540 = vmatpush.msra.mxu0 %v3420
    %3541 = vmatpush.msra.mxu0 %v3416
    %3542 = vmatpush.msra.mxu0 %v3412
    %3543 = vmatpush.msra.mxu0 %v3408
    %3544 = vmatpush.msra.mxu0 %v3404
    %3545 = vmatmul.f32.gmra.mxu0 %v3399
    %v3546 = vpop.f32.mrf.mxu0
    %v3547 = vadd.f32 %v3468, %v3546
    %3548 = vdwg.mxu0
    %v3549 = vxor.u32 %v3487, 2147483648
    %v3550 = vxor.u32 %v3507, 2147483648
    %v3551 = vmul.f32 %v3549, 1.442695
    %v3552 = vpow.pop %v3551
    %v3553 = vmul.f32 %v3550, 1.442695
    %v3554 = vpow.pop %v3553
    %v3555 = vadd.f32 %v3552, 1.0
    %v3556 = vadd.f32 %v3554, 1.0
    %v3557 = vrcp.pop %v3555
    %v3558 = vmul.f32 %v3555, %v3557
    %v3559 = vsub.f32 1.0, %v3558
    %v3560 = vmul.f32 %v3557, %v3559
    %v3561 = vadd.f32 %v3557, %v3560
    %vm3562 = vweird.f32 %v3555
    %vm3563 = vweird.f32 %v3557
    %vm3564 = vmor %vm3562, %vm3563
    %v3565 = vsel %vm3564, %v3557, %v3561
    %v3566 = vand.u32 2147483647, %v3555
    %vm3567 = vcmp.eq.f32.partialorder %v3566, 8.507059e+37
    %v3568 = vand.u32 %v3555, 2147483648
    %v3569 = vor.u32 1.1754944e-38, %v3568
    %v3570 = vsel %vm3567, %v3569, %v3565
    %v3571 = vmul.f32 1.0, %v3570
    %v3572 = vrcp.pop %v3556
    %v3573 = vmul.f32 %v3556, %v3572
    %v3574 = vsub.f32 1.0, %v3573
    %v3575 = vmul.f32 %v3572, %v3574
    %v3576 = vadd.f32 %v3572, %v3575
    %vm3577 = vweird.f32 %v3556
    %vm3578 = vweird.f32 %v3572
    %vm3579 = vmor %vm3577, %vm3578
    %v3580 = vsel %vm3579, %v3572, %v3576
    %v3581 = vand.u32 2147483647, %v3556
    %vm3582 = vcmp.eq.f32.partialorder %v3581, 8.507059e+37
    %v3583 = vand.u32 %v3556, 2147483648
    %v3584 = vor.u32 1.1754944e-38, %v3583
    %v3585 = vsel %vm3582, %v3584, %v3580
    %v3586 = vmul.f32 1.0, %v3585
    %v3587 = vmul.f32 %v3571, %v3527
    %v3588 = vadd.f32 %v3547, %v3587
    %v3589 = vtanh.pop %v3588
    %v3590 = vsub.f32 %v3399, %v3589
    %v3591 = vmul.f32 %v3586, %v3590
    %v3592 = vadd.f32 %v3589, %v3591
    %v3593 = vsel %vm456, %v3399, %v3592
    %3594 = vst [vmem:[#allocation3 + $0x78] sm:$0xff] %v3593
    %v3595 = vld [vmem:[#allocation3] sm:$0xff]
    %v3596 = vld [vmem:[#allocation3 + $0x8] sm:$0xff]
    %v3597 = vld [vmem:[#allocation3 + $0x10] sm:$0xff]
    %v3598 = vld [vmem:[#allocation3 + $0x18] sm:$0xff]
    %v3599 = vld [vmem:[#allocation3 + $0x20] sm:$0xff]
    %v3600 = vld [vmem:[#allocation3 + $0x28] sm:$0xff]
    %v3601 = vld [vmem:[#allocation3 + $0x30] sm:$0xff]
    %v3602 = vld [vmem:[#allocation3 + $0x38] sm:$0xff]
    %v3603 = vld [vmem:[#allocation3 + $0x40] sm:$0xff]
    %v3604 = vld [vmem:[#allocation3 + $0x48] sm:$0xff]
    %v3605 = vld [vmem:[#allocation3 + $0x50] sm:$0xff]
    %v3606 = vld [vmem:[#allocation3 + $0x58] sm:$0xff]
    %v3607 = vld [vmem:[#allocation3 + $0x60] sm:$0xff]
    %v3608 = vld [vmem:[#allocation3 + $0x68] sm:$0xff]
    %v3609 = vld [vmem:[#allocation3 + $0x70] sm:$0xff]
    %v3610 = vld [vmem:[#allocation3 + $0x78] sm:$0xff]
    %v3611 = vld [vmem:[%s4] sm:$0xff]
    %v3612 = vld [vmem:[%s4 + $0x8] sm:$0xff]
    %v3613 = vld [vmem:[%s4 + $0x10] sm:$0xff]
    %v3614 = vld [vmem:[%s4 + $0x18] sm:$0xff]
    %v3615 = vld [vmem:[%s4 + $0x20] sm:$0xff]
    %v3616 = vld [vmem:[%s4 + $0x28] sm:$0xff]
    %v3617 = vld [vmem:[%s4 + $0x30] sm:$0xff]
    %v3618 = vld [vmem:[%s4 + $0x38] sm:$0xff]
    %v3619 = vld [vmem:[%s4 + $0x40] sm:$0xff]
    %v3620 = vld [vmem:[%s4 + $0x48] sm:$0xff]
    %v3621 = vld [vmem:[%s4 + $0x50] sm:$0xff]
    %v3622 = vld [vmem:[%s4 + $0x58] sm:$0xff]
    %v3623 = vld [vmem:[%s4 + $0x60] sm:$0xff]
    %v3624 = vld [vmem:[%s4 + $0x68] sm:$0xff]
    %v3625 = vld [vmem:[%s4 + $0x70] sm:$0xff]
    %v3626 = vld [vmem:[%s4 + $0x78] sm:$0xff]
    %v3627 = vld [vmem:[%s5] sm:$0x1]
    %v3629 = vperm.slane %v3627, 0
    %3631 = vmatpush.msra.mxu0 %v3626
    %3632 = vmatpush.msra.mxu0 %v3625
    %3633 = vmatpush.msra.mxu0 %v3624
    %3634 = vmatpush.msra.mxu0 %v3623
    %3635 = vmatpush.msra.mxu0 %v3622
    %3636 = vmatpush.msra.mxu0 %v3621
    %3637 = vmatpush.msra.mxu0 %v3620
    %3638 = vmatpush.msra.mxu0 %v3619
    %3639 = vmatpush.msra.mxu0 %v3618
    %3640 = vmatpush.msra.mxu0 %v3617
    %3641 = vmatpush.msra.mxu0 %v3616
    %3642 = vmatpush.msra.mxu0 %v3615
    %3643 = vmatpush.msra.mxu0 %v3614
    %3644 = vmatpush.msra.mxu0 %v3613
    %3645 = vmatpush.msra.mxu0 %v3612
    %3646 = vmatpush.msra.mxu0 %v3611
    %3647 = vmatmul.f32.gmra.mxu0 %v3595
    %v3648 = vpop.f32.mrf.mxu0
    %v3649 = vadd.f32 %v3629, %v3648
    %3650 = vmatmul.f32.gmra.mxu0 %v3596
    %v3651 = vpop.f32.mrf.mxu0
    %v3652 = vadd.f32 %v3629, %v3651
    %3653 = vmatmul.f32.gmra.mxu0 %v3597
    %v3654 = vpop.f32.mrf.mxu0
    %v3655 = vadd.f32 %v3629, %v3654
    %3656 = vmatmul.f32.gmra.mxu0 %v3598
    %v3657 = vpop.f32.mrf.mxu0
    %v3658 = vadd.f32 %v3629, %v3657
    %3659 = vmatmul.f32.gmra.mxu0 %v3599
    %v3660 = vpop.f32.mrf.mxu0
    %v3661 = vadd.f32 %v3629, %v3660
    %3662 = vmatmul.f32.gmra.mxu0 %v3600
    %v3663 = vpop.f32.mrf.mxu0
    %v3664 = vadd.f32 %v3629, %v3663
    %3665 = vmatmul.f32.gmra.mxu0 %v3601
    %v3666 = vpop.f32.mrf.mxu0
    %v3667 = vadd.f32 %v3629, %v3666
    %3668 = vmatmul.f32.gmra.mxu0 %v3602
    %v3669 = vpop.f32.mrf.mxu0
    %v3670 = vadd.f32 %v3629, %v3669
    %3671 = vmatmul.f32.gmra.mxu0 %v3603
    %v3672 = vpop.f32.mrf.mxu0
    %v3673 = vadd.f32 %v3629, %v3672
    %3674 = vmatmul.f32.gmra.mxu0 %v3604
    %v3675 = vpop.f32.mrf.mxu0
    %v3676 = vadd.f32 %v3629, %v3675
    %3677 = vmatmul.f32.gmra.mxu0 %v3605
    %v3678 = vpop.f32.mrf.mxu0
    %v3679 = vadd.f32 %v3629, %v3678
    %3680 = vmatmul.f32.gmra.mxu0 %v3606
    %v3681 = vpop.f32.mrf.mxu0
    %v3682 = vadd.f32 %v3629, %v3681
    %3683 = vmatmul.f32.gmra.mxu0 %v3607
    %v3684 = vpop.f32.mrf.mxu0
    %v3685 = vadd.f32 %v3629, %v3684
    %3686 = vmatmul.f32.gmra.mxu0 %v3608
    %v3687 = vpop.f32.mrf.mxu0
    %v3688 = vadd.f32 %v3629, %v3687
    %3689 = vmatmul.f32.gmra.mxu0 %v3609
    %v3690 = vpop.f32.mrf.mxu0
    %v3691 = vadd.f32 %v3629, %v3690
    %3692 = vmatmul.f32.gmra.mxu0 %v3610
    %v3693 = vpop.f32.mrf.mxu0
    %v3694 = vadd.f32 %v3629, %v3693
    %3695 = vdwg.mxu0
    %3708 = vrot.lane.b32.xlu0 %v3649, 126
    %v3709 = vpop.permute.xlu0 %3708
    %3710 = vrot.lane.b32.xlu0 %v3652, 126
    %v3711 = vpop.permute.xlu0 %3710
    %3712 = vrot.lane.b32.xlu0 %v3655, 126
    %v3713 = vpop.permute.xlu0 %3712
    %3714 = vrot.lane.b32.xlu0 %v3658, 126
    %v3715 = vpop.permute.xlu0 %3714
    %3716 = vrot.lane.b32.xlu0 %v3661, 126
    %v3717 = vpop.permute.xlu0 %3716
    %3718 = vrot.lane.b32.xlu0 %v3664, 126
    %v3719 = vpop.permute.xlu0 %3718
    %3720 = vrot.lane.b32.xlu0 %v3667, 126
    %v3721 = vpop.permute.xlu0 %3720
    %3722 = vrot.lane.b32.xlu0 %v3670, 126
    %v3723 = vpop.permute.xlu0 %3722
    %3724 = vrot.lane.b32.xlu0 %v3673, 126
    %v3725 = vpop.permute.xlu0 %3724
    %3726 = vrot.lane.b32.xlu0 %v3676, 126
    %v3727 = vpop.permute.xlu0 %3726
    %3728 = vrot.lane.b32.xlu0 %v3679, 126
    %v3729 = vpop.permute.xlu0 %3728
    %3730 = vrot.lane.b32.xlu0 %v3682, 126
    %v3731 = vpop.permute.xlu0 %3730
    %v3744 = vadd.f32 %v3661, %v3709
    %v3745 = vadd.f32 %v3664, %v3711
    %v3746 = vadd.f32 %v3667, %v3713
    %v3747 = vadd.f32 %v3670, %v3715
    %v3748 = vadd.f32 %v3673, %v3717
    %v3749 = vadd.f32 %v3676, %v3719
    %v3750 = vadd.f32 %v3679, %v3721
    %v3751 = vadd.f32 %v3682, %v3723
    %v3752 = vadd.f32 %v3685, %v3725
    %v3753 = vadd.f32 %v3688, %v3727
    %v3754 = vadd.f32 %v3691, %v3729
    %v3755 = vadd.f32 %v3694, %v3731
    %3757 = vrot.lane.b32.xlu0 %v3685, 126
    %v3758 = vpop.permute.xlu0 %3757
    %v3760 = vadd.f32 %v3661, %v3711
    %v3761 = vadd.f32 %v3664, %v3713
    %v3762 = vadd.f32 %v3667, %v3715
    %v3763 = vadd.f32 %v3670, %v3717
    %v3764 = vadd.f32 %v3673, %v3719
    %v3765 = vadd.f32 %v3676, %v3721
    %v3766 = vadd.f32 %v3679, %v3723
    %v3767 = vadd.f32 %v3682, %v3725
    %v3768 = vadd.f32 %v3685, %v3727
    %v3769 = vadd.f32 %v3688, %v3729
    %v3770 = vadd.f32 %v3691, %v3731
    %v3771 = vadd.f32 %v3694, %v3758
    %3773 = vrot.lane.b32.xlu0 %v3688, 126
    %v3774 = vpop.permute.xlu0 %3773
    %v3776 = vadd.f32 %v3661, %v3713
    %v3777 = vadd.f32 %v3664, %v3715
    %v3778 = vadd.f32 %v3667, %v3717
    %v3779 = vadd.f32 %v3670, %v3719
    %v3780 = vadd.f32 %v3673, %v3721
    %v3781 = vadd.f32 %v3676, %v3723
    %v3782 = vadd.f32 %v3679, %v3725
    %v3783 = vadd.f32 %v3682, %v3727
    %v3784 = vadd.f32 %v3685, %v3729
    %v3785 = vadd.f32 %v3688, %v3731
    %v3786 = vadd.f32 %v3691, %v3758
    %v3787 = vadd.f32 %v3694, %v3774
    %3789 = vrot.lane.b32.xlu0 %v3691, 126
    %v3790 = vpop.permute.xlu0 %3789
    %v3792 = vadd.f32 %v3661, %v3715
    %v3793 = vadd.f32 %v3664, %v3717
    %v3794 = vadd.f32 %v3667, %v3719
    %v3795 = vadd.f32 %v3670, %v3721
    %v3796 = vadd.f32 %v3673, %v3723
    %v3797 = vadd.f32 %v3676, %v3725
    %v3798 = vadd.f32 %v3679, %v3727
    %v3799 = vadd.f32 %v3682, %v3729
    %v3800 = vadd.f32 %v3685, %v3731
    %v3801 = vadd.f32 %v3688, %v3758
    %v3802 = vadd.f32 %v3691, %v3774
    %v3803 = vadd.f32 %v3694, %v3790
    %v3804 = vmax.f32 %v3744, %v3760
    %v3805 = vmax.f32 %v3745, %v3761
    %v3806 = vmax.f32 %v3746, %v3762
    %v3807 = vmax.f32 %v3747, %v3763
    %v3808 = vmax.f32 %v3748, %v3764
    %v3809 = vmax.f32 %v3749, %v3765
    %v3810 = vmax.f32 %v3750, %v3766
    %v3811 = vmax.f32 %v3751, %v3767
    %v3812 = vmax.f32 %v3752, %v3768
    %v3813 = vmax.f32 %v3753, %v3769
    %v3814 = vmax.f32 %v3754, %v3770
    %v3815 = vmax.f32 %v3755, %v3771
    %v3816 = vmax.f32 %v3804, %v3776
    %v3817 = vmax.f32 %v3805, %v3777
    %v3818 = vmax.f32 %v3806, %v3778
    %v3819 = vmax.f32 %v3807, %v3779
    %v3820 = vmax.f32 %v3808, %v3780
    %v3821 = vmax.f32 %v3809, %v3781
    %v3822 = vmax.f32 %v3810, %v3782
    %v3823 = vmax.f32 %v3811, %v3783
    %v3824 = vmax.f32 %v3812, %v3784
    %v3825 = vmax.f32 %v3813, %v3785
    %v3826 = vmax.f32 %v3814, %v3786
    %v3827 = vmax.f32 %v3815, %v3787
    %v3828 = vmax.f32 %v3816, %v3792
    %v3829 = vmax.f32 %v3817, %v3793
    %v3830 = vmax.f32 %v3818, %v3794
    %v3831 = vmax.f32 %v3819, %v3795
    %v3832 = vmax.f32 %v3820, %v3796
    %v3833 = vmax.f32 %v3821, %v3797
    %v3834 = vmax.f32 %v3822, %v3798
    %v3835 = vmax.f32 %v3823, %v3799
    %v3836 = vmax.f32 %v3824, %v3800
    %v3837 = vmax.f32 %v3825, %v3801
    %v3838 = vmax.f32 %v3826, %v3802
    %v3839 = vmax.f32 %v3827, %v3803
    %v3840 = vsub.f32 %v3744, %v3828
    %v3841 = vsub.f32 %v3745, %v3829
    %v3842 = vsub.f32 %v3746, %v3830
    %v3843 = vsub.f32 %v3747, %v3831
    %v3844 = vsub.f32 %v3748, %v3832
    %v3845 = vsub.f32 %v3749, %v3833
    %v3846 = vsub.f32 %v3750, %v3834
    %v3847 = vsub.f32 %v3751, %v3835
    %v3848 = vsub.f32 %v3752, %v3836
    %v3849 = vsub.f32 %v3753, %v3837
    %v3850 = vsub.f32 %v3754, %v3838
    %v3851 = vsub.f32 %v3755, %v3839
    %v3852 = vmul.f32 %v3840, 1.442695
    %v3853 = vpow.pop %v3852
    %v3854 = vmul.f32 %v3841, 1.442695
    %v3855 = vpow.pop %v3854
    %v3856 = vmul.f32 %v3842, 1.442695
    %v3857 = vpow.pop %v3856
    %v3858 = vmul.f32 %v3843, 1.442695
    %v3859 = vpow.pop %v3858
    %v3860 = vmul.f32 %v3844, 1.442695
    %v3861 = vpow.pop %v3860
    %v3862 = vmul.f32 %v3845, 1.442695
    %v3863 = vpow.pop %v3862
    %v3864 = vmul.f32 %v3846, 1.442695
    %v3865 = vpow.pop %v3864
    %v3866 = vmul.f32 %v3847, 1.442695
    %v3867 = vpow.pop %v3866
    %v3868 = vmul.f32 %v3848, 1.442695
    %v3869 = vpow.pop %v3868
    %v3870 = vmul.f32 %v3849, 1.442695
    %v3871 = vpow.pop %v3870
    %v3872 = vmul.f32 %v3850, 1.442695
    %v3873 = vpow.pop %v3872
    %v3874 = vmul.f32 %v3851, 1.442695
    %v3875 = vpow.pop %v3874
    %v3876 = vsub.f32 %v3760, %v3828
    %v3877 = vsub.f32 %v3761, %v3829
    %v3878 = vsub.f32 %v3762, %v3830
    %v3879 = vsub.f32 %v3763, %v3831
    %v3880 = vsub.f32 %v3764, %v3832
    %v3881 = vsub.f32 %v3765, %v3833
    %v3882 = vsub.f32 %v3766, %v3834
    %v3883 = vsub.f32 %v3767, %v3835
    %v3884 = vsub.f32 %v3768, %v3836
    %v3885 = vsub.f32 %v3769, %v3837
    %v3886 = vsub.f32 %v3770, %v3838
    %v3887 = vsub.f32 %v3771, %v3839
    %v3888 = vmul.f32 %v3876, 1.442695
    %v3889 = vpow.pop %v3888
    %v3890 = vmul.f32 %v3877, 1.442695
    %v3891 = vpow.pop %v3890
    %v3892 = vmul.f32 %v3878, 1.442695
    %v3893 = vpow.pop %v3892
    %v3894 = vmul.f32 %v3879, 1.442695
    %v3895 = vpow.pop %v3894
    %v3896 = vmul.f32 %v3880, 1.442695
    %v3897 = vpow.pop %v3896
    %v3898 = vmul.f32 %v3881, 1.442695
    %v3899 = vpow.pop %v3898
    %v3900 = vmul.f32 %v3882, 1.442695
    %v3901 = vpow.pop %v3900
    %v3902 = vmul.f32 %v3883, 1.442695
    %v3903 = vpow.pop %v3902
    %v3904 = vmul.f32 %v3884, 1.442695
    %v3905 = vpow.pop %v3904
    %v3906 = vmul.f32 %v3885, 1.442695
    %v3907 = vpow.pop %v3906
    %v3908 = vmul.f32 %v3886, 1.442695
    %v3909 = vpow.pop %v3908
    %v3910 = vmul.f32 %v3887, 1.442695
    %v3911 = vpow.pop %v3910
    %v3912 = vsub.f32 %v3776, %v3828
    %v3913 = vsub.f32 %v3777, %v3829
    %v3914 = vsub.f32 %v3778, %v3830
    %v3915 = vsub.f32 %v3779, %v3831
    %v3916 = vsub.f32 %v3780, %v3832
    %v3917 = vsub.f32 %v3781, %v3833
    %v3918 = vsub.f32 %v3782, %v3834
    %v3919 = vsub.f32 %v3783, %v3835
    %v3920 = vsub.f32 %v3784, %v3836
    %v3921 = vsub.f32 %v3785, %v3837
    %v3922 = vsub.f32 %v3786, %v3838
    %v3923 = vsub.f32 %v3787, %v3839
    %v3924 = vmul.f32 %v3912, 1.442695
    %v3925 = vpow.pop %v3924
    %v3926 = vmul.f32 %v3913, 1.442695
    %v3927 = vpow.pop %v3926
    %v3928 = vmul.f32 %v3914, 1.442695
    %v3929 = vpow.pop %v3928
    %v3930 = vmul.f32 %v3915, 1.442695
    %v3931 = vpow.pop %v3930
    %v3932 = vmul.f32 %v3916, 1.442695
    %v3933 = vpow.pop %v3932
    %v3934 = vmul.f32 %v3917, 1.442695
    %v3935 = vpow.pop %v3934
    %v3936 = vmul.f32 %v3918, 1.442695
    %v3937 = vpow.pop %v3936
    %v3938 = vmul.f32 %v3919, 1.442695
    %v3939 = vpow.pop %v3938
    %v3940 = vmul.f32 %v3920, 1.442695
    %v3941 = vpow.pop %v3940
    %v3942 = vmul.f32 %v3921, 1.442695
    %v3943 = vpow.pop %v3942
    %v3944 = vmul.f32 %v3922, 1.442695
    %v3945 = vpow.pop %v3944
    %v3946 = vmul.f32 %v3923, 1.442695
    %v3947 = vpow.pop %v3946
    %v3948 = vsub.f32 %v3792, %v3828
    %v3949 = vsub.f32 %v3793, %v3829
    %v3950 = vsub.f32 %v3794, %v3830
    %v3951 = vsub.f32 %v3795, %v3831
    %v3952 = vsub.f32 %v3796, %v3832
    %v3953 = vsub.f32 %v3797, %v3833
    %v3954 = vsub.f32 %v3798, %v3834
    %v3955 = vsub.f32 %v3799, %v3835
    %v3956 = vsub.f32 %v3800, %v3836
    %v3957 = vsub.f32 %v3801, %v3837
    %v3958 = vsub.f32 %v3802, %v3838
    %v3959 = vsub.f32 %v3803, %v3839
    %v3960 = vmul.f32 %v3948, 1.442695
    %v3961 = vpow.pop %v3960
    %v3962 = vmul.f32 %v3949, 1.442695
    %v3963 = vpow.pop %v3962
    %v3964 = vmul.f32 %v3950, 1.442695
    %v3965 = vpow.pop %v3964
    %v3966 = vmul.f32 %v3951, 1.442695
    %v3967 = vpow.pop %v3966
    %v3968 = vmul.f32 %v3952, 1.442695
    %v3969 = vpow.pop %v3968
    %v3970 = vmul.f32 %v3953, 1.442695
    %v3971 = vpow.pop %v3970
    %v3972 = vmul.f32 %v3954, 1.442695
    %v3973 = vpow.pop %v3972
    %v3974 = vmul.f32 %v3955, 1.442695
    %v3975 = vpow.pop %v3974
    %v3976 = vmul.f32 %v3956, 1.442695
    %v3977 = vpow.pop %v3976
    %v3978 = vmul.f32 %v3957, 1.442695
    %v3979 = vpow.pop %v3978
    %v3980 = vmul.f32 %v3958, 1.442695
    %v3981 = vpow.pop %v3980
    %v3982 = vmul.f32 %v3959, 1.442695
    %v3983 = vpow.pop %v3982
    %v3984 = vadd.f32 %v3853, %v3889
    %v3985 = vadd.f32 %v3855, %v3891
    %v3986 = vadd.f32 %v3857, %v3893
    %v3987 = vadd.f32 %v3859, %v3895
    %v3988 = vadd.f32 %v3861, %v3897
    %v3989 = vadd.f32 %v3863, %v3899
    %v3990 = vadd.f32 %v3865, %v3901
    %v3991 = vadd.f32 %v3867, %v3903
    %v3992 = vadd.f32 %v3869, %v3905
    %v3993 = vadd.f32 %v3871, %v3907
    %v3994 = vadd.f32 %v3873, %v3909
    %v3995 = vadd.f32 %v3875, %v3911
    %v3996 = vadd.f32 %v3984, %v3925
    %v3997 = vadd.f32 %v3985, %v3927
    %v3998 = vadd.f32 %v3986, %v3929
    %v3999 = vadd.f32 %v3987, %v3931
    %v4000 = vadd.f32 %v3988, %v3933
    %v4001 = vadd.f32 %v3989, %v3935
    %v4002 = vadd.f32 %v3990, %v3937
    %v4003 = vadd.f32 %v3991, %v3939
    %v4004 = vadd.f32 %v3992, %v3941
    %v4005 = vadd.f32 %v3993, %v3943
    %v4006 = vadd.f32 %v3994, %v3945
    %v4007 = vadd.f32 %v3995, %v3947
    %v4008 = vadd.f32 %v3996, %v3961
    %v4009 = vadd.f32 %v3997, %v3963
    %v4010 = vadd.f32 %v3998, %v3965
    %v4011 = vadd.f32 %v3999, %v3967
    %v4012 = vadd.f32 %v4000, %v3969
    %v4013 = vadd.f32 %v4001, %v3971
    %v4014 = vadd.f32 %v4002, %v3973
    %v4015 = vadd.f32 %v4003, %v3975
    %v4016 = vadd.f32 %v4004, %v3977
    %v4017 = vadd.f32 %v4005, %v3979
    %v4018 = vadd.f32 %v4006, %v3981
    %v4019 = vadd.f32 %v4007, %v3983
    %4020 = vrot.lane.b32.xlu0 %v3649, 124
    %v4021 = vpop.permute.xlu0 %4020
    %4022 = vrot.lane.b32.xlu0 %v3652, 124
    %v4023 = vpop.permute.xlu0 %4022
    %4024 = vrot.lane.b32.xlu0 %v3655, 124
    %v4025 = vpop.permute.xlu0 %4024
    %4026 = vrot.lane.b32.xlu0 %v3658, 124
    %v4027 = vpop.permute.xlu0 %4026
    %4028 = vrot.lane.b32.xlu0 %v3661, 124
    %v4029 = vpop.permute.xlu0 %4028
    %4030 = vrot.lane.b32.xlu0 %v3664, 124
    %v4031 = vpop.permute.xlu0 %4030
    %4032 = vrot.lane.b32.xlu0 %v3667, 124
    %v4033 = vpop.permute.xlu0 %4032
    %4034 = vrot.lane.b32.xlu0 %v3670, 124
    %v4035 = vpop.permute.xlu0 %4034
    %4036 = vrot.lane.b32.xlu0 %v3673, 124
    %v4037 = vpop.permute.xlu0 %4036
    %4038 = vrot.lane.b32.xlu0 %v3676, 124
    %v4039 = vpop.permute.xlu0 %4038
    %4040 = vrot.lane.b32.xlu0 %v3679, 124
    %v4041 = vpop.permute.xlu0 %4040
    %4042 = vrot.lane.b32.xlu0 %v3682, 124
    %v4043 = vpop.permute.xlu0 %4042
    %v4056 = vmul.f32 %v3853, %v4021
    %v4057 = vmul.f32 %v3855, %v4023
    %v4058 = vmul.f32 %v3857, %v4025
    %v4059 = vmul.f32 %v3859, %v4027
    %v4060 = vmul.f32 %v3861, %v4029
    %v4061 = vmul.f32 %v3863, %v4031
    %v4062 = vmul.f32 %v3865, %v4033
    %v4063 = vmul.f32 %v3867, %v4035
    %v4064 = vmul.f32 %v3869, %v4037
    %v4065 = vmul.f32 %v3871, %v4039
    %v4066 = vmul.f32 %v3873, %v4041
    %v4067 = vmul.f32 %v3875, %v4043
    %4068 = vrot.lane.b32.xlu0 %v3685, 124
    %v4069 = vpop.permute.xlu0 %4068
    %v4071 = vmul.f32 %v3889, %v4023
    %v4072 = vmul.f32 %v3891, %v4025
    %v4073 = vmul.f32 %v3893, %v4027
    %v4074 = vmul.f32 %v3895, %v4029
    %v4075 = vmul.f32 %v3897, %v4031
    %v4076 = vmul.f32 %v3899, %v4033
    %v4077 = vmul.f32 %v3901, %v4035
    %v4078 = vmul.f32 %v3903, %v4037
    %v4079 = vmul.f32 %v3905, %v4039
    %v4080 = vmul.f32 %v3907, %v4041
    %v4081 = vmul.f32 %v3909, %v4043
    %v4082 = vmul.f32 %v3911, %v4069
    %v4083 = vadd.f32 %v4056, %v4071
    %v4084 = vadd.f32 %v4057, %v4072
    %v4085 = vadd.f32 %v4058, %v4073
    %v4086 = vadd.f32 %v4059, %v4074
    %v4087 = vadd.f32 %v4060, %v4075
    %v4088 = vadd.f32 %v4061, %v4076
    %v4089 = vadd.f32 %v4062, %v4077
    %v4090 = vadd.f32 %v4063, %v4078
    %v4091 = vadd.f32 %v4064, %v4079
    %v4092 = vadd.f32 %v4065, %v4080
    %v4093 = vadd.f32 %v4066, %v4081
    %v4094 = vadd.f32 %v4067, %v4082
    %4095 = vrot.lane.b32.xlu0 %v3688, 124
    %v4096 = vpop.permute.xlu0 %4095
    %v4098 = vmul.f32 %v3925, %v4025
    %v4099 = vmul.f32 %v3927, %v4027
    %v4100 = vmul.f32 %v3929, %v4029
    %v4101 = vmul.f32 %v3931, %v4031
    %v4102 = vmul.f32 %v3933, %v4033
    %v4103 = vmul.f32 %v3935, %v4035
    %v4104 = vmul.f32 %v3937, %v4037
    %v4105 = vmul.f32 %v3939, %v4039
    %v4106 = vmul.f32 %v3941, %v4041
    %v4107 = vmul.f32 %v3943, %v4043
    %v4108 = vmul.f32 %v3945, %v4069
    %v4109 = vmul.f32 %v3947, %v4096
    %v4110 = vadd.f32 %v4083, %v4098
    %v4111 = vadd.f32 %v4084, %v4099
    %v4112 = vadd.f32 %v4085, %v4100
    %v4113 = vadd.f32 %v4086, %v4101
    %v4114 = vadd.f32 %v4087, %v4102
    %v4115 = vadd.f32 %v4088, %v4103
    %v4116 = vadd.f32 %v4089, %v4104
    %v4117 = vadd.f32 %v4090, %v4105
    %v4118 = vadd.f32 %v4091, %v4106
    %v4119 = vadd.f32 %v4092, %v4107
    %v4120 = vadd.f32 %v4093, %v4108
    %v4121 = vadd.f32 %v4094, %v4109
    %4122 = vrot.lane.b32.xlu0 %v3691, 124
    %v4123 = vpop.permute.xlu0 %4122
    %v4125 = vmul.f32 %v3961, %v4027
    %v4126 = vmul.f32 %v3963, %v4029
    %v4127 = vmul.f32 %v3965, %v4031
    %v4128 = vmul.f32 %v3967, %v4033
    %v4129 = vmul.f32 %v3969, %v4035
    %v4130 = vmul.f32 %v3971, %v4037
    %v4131 = vmul.f32 %v3973, %v4039
    %v4132 = vmul.f32 %v3975, %v4041
    %v4133 = vmul.f32 %v3977, %v4043
    %v4134 = vmul.f32 %v3979, %v4069
    %v4135 = vmul.f32 %v3981, %v4096
    %v4136 = vmul.f32 %v3983, %v4123
    %v4137 = vadd.f32 %v4110, %v4125
    %v4138 = vadd.f32 %v4111, %v4126
    %v4139 = vadd.f32 %v4112, %v4127
    %v4140 = vadd.f32 %v4113, %v4128
    %v4141 = vadd.f32 %v4114, %v4129
    %v4142 = vadd.f32 %v4115, %v4130
    %v4143 = vadd.f32 %v4116, %v4131
    %v4144 = vadd.f32 %v4117, %v4132
    %v4145 = vadd.f32 %v4118, %v4133
    %v4146 = vadd.f32 %v4119, %v4134
    %v4147 = vadd.f32 %v4120, %v4135
    %v4148 = vadd.f32 %v4121, %v4136
    %v4149 = vrcp.pop %v4008
    %v4150 = vmul.f32 %v4008, %v4149
    %v4151 = vsub.f32 1.0, %v4150
    %v4152 = vmul.f32 %v4149, %v4151
    %v4153 = vadd.f32 %v4149, %v4152
    %vm4154 = vweird.f32 %v4008
    %vm4155 = vweird.f32 %v4149
    %vm4156 = vmor %vm4154, %vm4155
    %v4157 = vsel %vm4156, %v4149, %v4153
    %v4158 = vand.u32 2147483647, %v4008
    %vm4159 = vcmp.eq.f32.partialorder %v4158, 8.507059e+37
    %v4160 = vand.u32 %v4008, 2147483648
    %v4161 = vor.u32 1.1754944e-38, %v4160
    %v4162 = vsel %vm4159, %v4161, %v4157
    %v4163 = vrcp.pop %v4009
    %v4164 = vmul.f32 %v4009, %v4163
    %v4165 = vsub.f32 1.0, %v4164
    %v4166 = vmul.f32 %v4163, %v4165
    %v4167 = vadd.f32 %v4163, %v4166
    %vm4168 = vweird.f32 %v4009
    %vm4169 = vweird.f32 %v4163
    %vm4170 = vmor %vm4168, %vm4169
    %v4171 = vsel %vm4170, %v4163, %v4167
    %v4172 = vand.u32 2147483647, %v4009
    %vm4173 = vcmp.eq.f32.partialorder %v4172, 8.507059e+37
    %v4174 = vand.u32 %v4009, 2147483648
    %v4175 = vor.u32 1.1754944e-38, %v4174
    %v4176 = vsel %vm4173, %v4175, %v4171
    %v4177 = vrcp.pop %v4010
    %v4178 = vmul.f32 %v4010, %v4177
    %v4179 = vsub.f32 1.0, %v4178
    %v4180 = vmul.f32 %v4177, %v4179
    %v4181 = vadd.f32 %v4177, %v4180
    %vm4182 = vweird.f32 %v4010
    %vm4183 = vweird.f32 %v4177
    %vm4184 = vmor %vm4182, %vm4183
    %v4185 = vsel %vm4184, %v4177, %v4181
    %v4186 = vand.u32 2147483647, %v4010
    %vm4187 = vcmp.eq.f32.partialorder %v4186, 8.507059e+37
    %v4188 = vand.u32 %v4010, 2147483648
    %v4189 = vor.u32 1.1754944e-38, %v4188
    %v4190 = vsel %vm4187, %v4189, %v4185
    %v4191 = vrcp.pop %v4011
    %v4192 = vmul.f32 %v4011, %v4191
    %v4193 = vsub.f32 1.0, %v4192
    %v4194 = vmul.f32 %v4191, %v4193
    %v4195 = vadd.f32 %v4191, %v4194
    %vm4196 = vweird.f32 %v4011
    %vm4197 = vweird.f32 %v4191
    %vm4198 = vmor %vm4196, %vm4197
    %v4199 = vsel %vm4198, %v4191, %v4195
    %v4200 = vand.u32 2147483647, %v4011
    %vm4201 = vcmp.eq.f32.partialorder %v4200, 8.507059e+37
    %v4202 = vand.u32 %v4011, 2147483648
    %v4203 = vor.u32 1.1754944e-38, %v4202
    %v4204 = vsel %vm4201, %v4203, %v4199
    %v4205 = vrcp.pop %v4012
    %v4206 = vmul.f32 %v4012, %v4205
    %v4207 = vsub.f32 1.0, %v4206
    %v4208 = vmul.f32 %v4205, %v4207
    %v4209 = vadd.f32 %v4205, %v4208
    %vm4210 = vweird.f32 %v4012
    %vm4211 = vweird.f32 %v4205
    %vm4212 = vmor %vm4210, %vm4211
    %v4213 = vsel %vm4212, %v4205, %v4209
    %v4214 = vand.u32 2147483647, %v4012
    %vm4215 = vcmp.eq.f32.partialorder %v4214, 8.507059e+37
    %v4216 = vand.u32 %v4012, 2147483648
    %v4217 = vor.u32 1.1754944e-38, %v4216
    %v4218 = vsel %vm4215, %v4217, %v4213
    %v4219 = vrcp.pop %v4013
    %v4220 = vmul.f32 %v4013, %v4219
    %v4221 = vsub.f32 1.0, %v4220
    %v4222 = vmul.f32 %v4219, %v4221
    %v4223 = vadd.f32 %v4219, %v4222
    %vm4224 = vweird.f32 %v4013
    %vm4225 = vweird.f32 %v4219
    %vm4226 = vmor %vm4224, %vm4225
    %v4227 = vsel %vm4226, %v4219, %v4223
    %v4228 = vand.u32 2147483647, %v4013
    %vm4229 = vcmp.eq.f32.partialorder %v4228, 8.507059e+37
    %v4230 = vand.u32 %v4013, 2147483648
    %v4231 = vor.u32 1.1754944e-38, %v4230
    %v4232 = vsel %vm4229, %v4231, %v4227
    %v4233 = vrcp.pop %v4014
    %v4234 = vmul.f32 %v4014, %v4233
    %v4235 = vsub.f32 1.0, %v4234
    %v4236 = vmul.f32 %v4233, %v4235
    %v4237 = vadd.f32 %v4233, %v4236
    %vm4238 = vweird.f32 %v4014
    %vm4239 = vweird.f32 %v4233
    %vm4240 = vmor %vm4238, %vm4239
    %v4241 = vsel %vm4240, %v4233, %v4237
    %v4242 = vand.u32 2147483647, %v4014
    %vm4243 = vcmp.eq.f32.partialorder %v4242, 8.507059e+37
    %v4244 = vand.u32 %v4014, 2147483648
    %v4245 = vor.u32 1.1754944e-38, %v4244
    %v4246 = vsel %vm4243, %v4245, %v4241
    %v4247 = vrcp.pop %v4015
    %v4248 = vmul.f32 %v4015, %v4247
    %v4249 = vsub.f32 1.0, %v4248
    %v4250 = vmul.f32 %v4247, %v4249
    %v4251 = vadd.f32 %v4247, %v4250
    %vm4252 = vweird.f32 %v4015
    %vm4253 = vweird.f32 %v4247
    %vm4254 = vmor %vm4252, %vm4253
    %v4255 = vsel %vm4254, %v4247, %v4251
    %v4256 = vand.u32 2147483647, %v4015
    %vm4257 = vcmp.eq.f32.partialorder %v4256, 8.507059e+37
    %v4258 = vand.u32 %v4015, 2147483648
    %v4259 = vor.u32 1.1754944e-38, %v4258
    %v4260 = vsel %vm4257, %v4259, %v4255
    %v4261 = vrcp.pop %v4016
    %v4262 = vmul.f32 %v4016, %v4261
    %v4263 = vsub.f32 1.0, %v4262
    %v4264 = vmul.f32 %v4261, %v4263
    %v4265 = vadd.f32 %v4261, %v4264
    %vm4266 = vweird.f32 %v4016
    %vm4267 = vweird.f32 %v4261
    %vm4268 = vmor %vm4266, %vm4267
    %v4269 = vsel %vm4268, %v4261, %v4265
    %v4270 = vand.u32 2147483647, %v4016
    %vm4271 = vcmp.eq.f32.partialorder %v4270, 8.507059e+37
    %v4272 = vand.u32 %v4016, 2147483648
    %v4273 = vor.u32 1.1754944e-38, %v4272
    %v4274 = vsel %vm4271, %v4273, %v4269
    %v4275 = vrcp.pop %v4017
    %v4276 = vmul.f32 %v4017, %v4275
    %v4277 = vsub.f32 1.0, %v4276
    %v4278 = vmul.f32 %v4275, %v4277
    %v4279 = vadd.f32 %v4275, %v4278
    %vm4280 = vweird.f32 %v4017
    %vm4281 = vweird.f32 %v4275
    %vm4282 = vmor %vm4280, %vm4281
    %v4283 = vsel %vm4282, %v4275, %v4279
    %v4284 = vand.u32 2147483647, %v4017
    %vm4285 = vcmp.eq.f32.partialorder %v4284, 8.507059e+37
    %v4286 = vand.u32 %v4017, 2147483648
    %v4287 = vor.u32 1.1754944e-38, %v4286
    %v4288 = vsel %vm4285, %v4287, %v4283
    %v4289 = vrcp.pop %v4018
    %v4290 = vmul.f32 %v4018, %v4289
    %v4291 = vsub.f32 1.0, %v4290
    %v4292 = vmul.f32 %v4289, %v4291
    %v4293 = vadd.f32 %v4289, %v4292
    %vm4294 = vweird.f32 %v4018
    %vm4295 = vweird.f32 %v4289
    %vm4296 = vmor %vm4294, %vm4295
    %v4297 = vsel %vm4296, %v4289, %v4293
    %v4298 = vand.u32 2147483647, %v4018
    %vm4299 = vcmp.eq.f32.partialorder %v4298, 8.507059e+37
    %v4300 = vand.u32 %v4018, 2147483648
    %v4301 = vor.u32 1.1754944e-38, %v4300
    %v4302 = vsel %vm4299, %v4301, %v4297
    %v4303 = vrcp.pop %v4019
    %v4304 = vmul.f32 %v4019, %v4303
    %v4305 = vsub.f32 1.0, %v4304
    %v4306 = vmul.f32 %v4303, %v4305
    %v4307 = vadd.f32 %v4303, %v4306
    %vm4308 = vweird.f32 %v4019
    %vm4309 = vweird.f32 %v4303
    %vm4310 = vmor %vm4308, %vm4309
    %v4311 = vsel %vm4310, %v4303, %v4307
    %v4312 = vand.u32 2147483647, %v4019
    %vm4313 = vcmp.eq.f32.partialorder %v4312, 8.507059e+37
    %v4314 = vand.u32 %v4019, 2147483648
    %v4315 = vor.u32 1.1754944e-38, %v4314
    %v4316 = vsel %vm4313, %v4315, %v4311
    %v4317 = vmul.f32 %v4137, %v4162
    %v4318 = vmul.f32 %v4138, %v4176
    %v4319 = vmul.f32 %v4139, %v4190
    %v4320 = vmul.f32 %v4140, %v4204
    %v4321 = vmul.f32 %v4141, %v4218
    %v4322 = vmul.f32 %v4142, %v4232
    %v4323 = vmul.f32 %v4143, %v4246
    %v4324 = vmul.f32 %v4144, %v4260
    %v4325 = vmul.f32 %v4145, %v4274
    %v4326 = vmul.f32 %v4146, %v4288
    %v4327 = vmul.f32 %v4147, %v4302
    %v4328 = vmul.f32 %v4148, %v4316
    %4330 = vrot.lane.b32.xlu0 %v3661, 122
    %v4331 = vpop.permute.xlu0 %4330
    %4332 = vrot.lane.b32.xlu0 %v3664, 122
    %v4333 = vpop.permute.xlu0 %4332
    %4334 = vrot.lane.b32.xlu0 %v3667, 122
    %v4335 = vpop.permute.xlu0 %4334
    %4336 = vrot.lane.b32.xlu0 %v3670, 122
    %v4337 = vpop.permute.xlu0 %4336
    %4338 = vrot.lane.b32.xlu0 %v3673, 122
    %v4339 = vpop.permute.xlu0 %4338
    %4340 = vrot.lane.b32.xlu0 %v3676, 122
    %v4341 = vpop.permute.xlu0 %4340
    %4342 = vrot.lane.b32.xlu0 %v3679, 122
    %v4343 = vpop.permute.xlu0 %4342
    %4344 = vrot.lane.b32.xlu0 %v3682, 122
    %v4345 = vpop.permute.xlu0 %4344
    %4346 = vrot.lane.b32.xlu0 %v3685, 122
    %v4347 = vpop.permute.xlu0 %4346
    %4348 = vrot.lane.b32.xlu0 %v3688, 122
    %v4349 = vpop.permute.xlu0 %4348
    %4350 = vrot.lane.b32.xlu0 %v3691, 122
    %v4351 = vpop.permute.xlu0 %4350
    %4352 = vrot.lane.b32.xlu0 %v3694, 122
    %v4353 = vpop.permute.xlu0 %4352
    %v4366 = vadd.f32 %v4317, %v4331
    %v4367 = vadd.f32 %v4318, %v4333
    %v4368 = vadd.f32 %v4319, %v4335
    %v4369 = vadd.f32 %v4320, %v4337
    %v4370 = vadd.f32 %v4321, %v4339
    %v4371 = vadd.f32 %v4322, %v4341
    %v4372 = vadd.f32 %v4323, %v4343
    %v4373 = vadd.f32 %v4324, %v4345
    %v4374 = vadd.f32 %v4325, %v4347
    %v4375 = vadd.f32 %v4326, %v4349
    %v4376 = vadd.f32 %v4327, %v4351
    %v4377 = vadd.f32 %v4328, %v4353
    %4390 = vrot.lane.b32.xlu0 %v4366, 8
    %v4391 = vpop.permute.xlu0 %4390
    %4392 = vrot.lane.b32.xlu0 %v4367, 8
    %v4393 = vpop.permute.xlu0 %4392
    %4394 = vrot.lane.b32.xlu0 %v4368, 8
    %v4395 = vpop.permute.xlu0 %4394
    %4396 = vrot.lane.b32.xlu0 %v4369, 8
    %v4397 = vpop.permute.xlu0 %4396
    %4398 = vrot.lane.b32.xlu0 %v4370, 8
    %v4399 = vpop.permute.xlu0 %4398
    %4400 = vrot.lane.b32.xlu0 %v4371, 8
    %v4401 = vpop.permute.xlu0 %4400
    %4402 = vrot.lane.b32.xlu0 %v4372, 8
    %v4403 = vpop.permute.xlu0 %4402
    %4404 = vrot.lane.b32.xlu0 %v4373, 8
    %v4405 = vpop.permute.xlu0 %4404
    %4406 = vrot.lane.b32.xlu0 %v4374, 8
    %v4407 = vpop.permute.xlu0 %4406
    %4408 = vrot.lane.b32.xlu0 %v4375, 8
    %v4409 = vpop.permute.xlu0 %4408
    %4410 = vrot.lane.b32.xlu0 %v4376, 8
    %v4411 = vpop.permute.xlu0 %4410
    %4412 = vrot.lane.b32.xlu0 %v4377, 8
    %v4413 = vpop.permute.xlu0 %4412
    %4426 = vrot.lane.b32.xlu0 %v3649, 127
    %v4427 = vpop.permute.xlu0 %4426
    %4428 = vrot.lane.b32.xlu0 %v4391, 127
    %v4429 = vpop.permute.xlu0 %4428
    %4430 = vrot.lane.b32.xlu0 %v4393, 127
    %v4431 = vpop.permute.xlu0 %4430
    %4432 = vrot.lane.b32.xlu0 %v4395, 127
    %v4433 = vpop.permute.xlu0 %4432
    %4434 = vrot.lane.b32.xlu0 %v4397, 127
    %v4435 = vpop.permute.xlu0 %4434
    %4436 = vrot.lane.b32.xlu0 %v4399, 127
    %v4437 = vpop.permute.xlu0 %4436
    %4438 = vrot.lane.b32.xlu0 %v4401, 127
    %v4439 = vpop.permute.xlu0 %4438
    %4440 = vrot.lane.b32.xlu0 %v4403, 127
    %v4441 = vpop.permute.xlu0 %4440
    %4442 = vrot.lane.b32.xlu0 %v4405, 127
    %v4443 = vpop.permute.xlu0 %4442
    %4444 = vrot.lane.b32.xlu0 %v4407, 127
    %v4445 = vpop.permute.xlu0 %4444
    %4446 = vrot.lane.b32.xlu0 %v4409, 127
    %v4447 = vpop.permute.xlu0 %4446
    %4448 = vrot.lane.b32.xlu0 %v4411, 127
    %v4449 = vpop.permute.xlu0 %4448
    %4450 = vrot.lane.b32.xlu0 %v4413, 127
    %v4451 = vpop.permute.xlu0 %4450
    %v4465 = vadd.f32 %v3649, %v4427
    %v4466 = vadd.f32 %v3649, %v4429
    %v4467 = vadd.f32 %v3649, %v4431
    %v4468 = vadd.f32 %v4391, %v4433
    %v4469 = vadd.f32 %v4393, %v4435
    %v4470 = vadd.f32 %v4395, %v4437
    %v4471 = vadd.f32 %v4397, %v4439
    %v4472 = vadd.f32 %v4399, %v4441
    %v4473 = vadd.f32 %v4401, %v4443
    %v4474 = vadd.f32 %v4403, %v4445
    %v4475 = vadd.f32 %v4405, %v4447
    %v4476 = vadd.f32 %v4407, %v4449
    %v4477 = vadd.f32 %v4409, %v4451
    %v4478 = vadd.f32 %v4411, %v4451
    %v4479 = vadd.f32 %v4413, %v4451
    %4480 = vrot.lane.b32.xlu0 %v3694, 126
    %v4481 = vpop.permute.xlu0 %4480
    %v4483 = vadd.f32 %v4465, %v3709
    %v4484 = vadd.f32 %v4465, %v3711
    %v4485 = vadd.f32 %v4466, %v3713
    %v4486 = vadd.f32 %v4467, %v3715
    %v4487 = vadd.f32 %v4468, %v3717
    %v4488 = vadd.f32 %v4469, %v3719
    %v4489 = vadd.f32 %v4470, %v3721
    %v4490 = vadd.f32 %v4471, %v3723
    %v4491 = vadd.f32 %v4472, %v3725
    %v4492 = vadd.f32 %v4473, %v3727
    %v4493 = vadd.f32 %v4474, %v3729
    %v4494 = vadd.f32 %v4475, %v3731
    %v4495 = vadd.f32 %v4476, %v3758
    %v4496 = vadd.f32 %v4477, %v3774
    %v4497 = vadd.f32 %v4478, %v3790
    %v4498 = vadd.f32 %v4479, %v4481
    %v4499 = vxor.u32 %v4483, 2147483648
    %v4500 = vxor.u32 %v4484, 2147483648
    %v4501 = vxor.u32 %v4485, 2147483648
    %v4502 = vxor.u32 %v4486, 2147483648
    %v4503 = vxor.u32 %v4487, 2147483648
    %v4504 = vxor.u32 %v4488, 2147483648
    %v4505 = vxor.u32 %v4489, 2147483648
    %v4506 = vxor.u32 %v4490, 2147483648
    %v4507 = vxor.u32 %v4491, 2147483648
    %v4508 = vxor.u32 %v4492, 2147483648
    %v4509 = vxor.u32 %v4493, 2147483648
    %v4510 = vxor.u32 %v4494, 2147483648
    %v4511 = vxor.u32 %v4495, 2147483648
    %v4512 = vxor.u32 %v4496, 2147483648
    %v4513 = vxor.u32 %v4497, 2147483648
    %v4514 = vxor.u32 %v4498, 2147483648
    %v4515 = vmul.f32 %v4499, 1.442695
    %v4516 = vpow.pop %v4515
    %v4517 = vmul.f32 %v4500, 1.442695
    %v4518 = vpow.pop %v4517
    %v4519 = vmul.f32 %v4501, 1.442695
    %v4520 = vpow.pop %v4519
    %v4521 = vmul.f32 %v4502, 1.442695
    %v4522 = vpow.pop %v4521
    %v4523 = vmul.f32 %v4503, 1.442695
    %v4524 = vpow.pop %v4523
    %v4525 = vmul.f32 %v4504, 1.442695
    %v4526 = vpow.pop %v4525
    %v4527 = vmul.f32 %v4505, 1.442695
    %v4528 = vpow.pop %v4527
    %v4529 = vmul.f32 %v4506, 1.442695
    %v4530 = vpow.pop %v4529
    %v4531 = vmul.f32 %v4507, 1.442695
    %v4532 = vpow.pop %v4531
    %v4533 = vmul.f32 %v4508, 1.442695
    %v4534 = vpow.pop %v4533
    %v4535 = vmul.f32 %v4509, 1.442695
    %v4536 = vpow.pop %v4535
    %v4537 = vmul.f32 %v4510, 1.442695
    %v4538 = vpow.pop %v4537
    %v4539 = vmul.f32 %v4511, 1.442695
    %v4540 = vpow.pop %v4539
    %v4541 = vmul.f32 %v4512, 1.442695
    %v4542 = vpow.pop %v4541
    %v4543 = vmul.f32 %v4513, 1.442695
    %v4544 = vpow.pop %v4543
    %v4545 = vmul.f32 %v4514, 1.442695
    %v4546 = vpow.pop %v4545
    %v4547 = vadd.f32 %v4516, 1.0
    %v4548 = vadd.f32 %v4518, 1.0
    %v4549 = vadd.f32 %v4520, 1.0
    %v4550 = vadd.f32 %v4522, 1.0
    %v4551 = vadd.f32 %v4524, 1.0
    %v4552 = vadd.f32 %v4526, 1.0
    %v4553 = vadd.f32 %v4528, 1.0
    %v4554 = vadd.f32 %v4530, 1.0
    %v4555 = vadd.f32 %v4532, 1.0
    %v4556 = vadd.f32 %v4534, 1.0
    %v4557 = vadd.f32 %v4536, 1.0
    %v4558 = vadd.f32 %v4538, 1.0
    %v4559 = vadd.f32 %v4540, 1.0
    %v4560 = vadd.f32 %v4542, 1.0
    %v4561 = vadd.f32 %v4544, 1.0
    %v4562 = vadd.f32 %v4546, 1.0
    %v4563 = vrcp.pop %v4547
    %v4564 = vmul.f32 %v4547, %v4563
    %v4565 = vsub.f32 1.0, %v4564
    %v4566 = vmul.f32 %v4563, %v4565
    %v4567 = vadd.f32 %v4563, %v4566
    %vm4568 = vweird.f32 %v4547
    %vm4569 = vweird.f32 %v4563
    %vm4570 = vmor %vm4568, %vm4569
    %v4571 = vsel %vm4570, %v4563, %v4567
    %v4572 = vand.u32 2147483647, %v4547
    %vm4573 = vcmp.eq.f32.partialorder %v4572, 8.507059e+37
    %v4574 = vand.u32 %v4547, 2147483648
    %v4575 = vor.u32 1.1754944e-38, %v4574
    %v4576 = vsel %vm4573, %v4575, %v4571
    %v4577 = vmul.f32 1.0, %v4576
    %v4578 = vrcp.pop %v4548
    %v4579 = vmul.f32 %v4548, %v4578
    %v4580 = vsub.f32 1.0, %v4579
    %v4581 = vmul.f32 %v4578, %v4580
    %v4582 = vadd.f32 %v4578, %v4581
    %vm4583 = vweird.f32 %v4548
    %vm4584 = vweird.f32 %v4578
    %vm4585 = vmor %vm4583, %vm4584
    %v4586 = vsel %vm4585, %v4578, %v4582
    %v4587 = vand.u32 2147483647, %v4548
    %vm4588 = vcmp.eq.f32.partialorder %v4587, 8.507059e+37
    %v4589 = vand.u32 %v4548, 2147483648
    %v4590 = vor.u32 1.1754944e-38, %v4589
    %v4591 = vsel %vm4588, %v4590, %v4586
    %v4592 = vmul.f32 1.0, %v4591
    %v4593 = vrcp.pop %v4549
    %v4594 = vmul.f32 %v4549, %v4593
    %v4595 = vsub.f32 1.0, %v4594
    %v4596 = vmul.f32 %v4593, %v4595
    %v4597 = vadd.f32 %v4593, %v4596
    %vm4598 = vweird.f32 %v4549
    %vm4599 = vweird.f32 %v4593
    %vm4600 = vmor %vm4598, %vm4599
    %v4601 = vsel %vm4600, %v4593, %v4597
    %v4602 = vand.u32 2147483647, %v4549
    %vm4603 = vcmp.eq.f32.partialorder %v4602, 8.507059e+37
    %v4604 = vand.u32 %v4549, 2147483648
    %v4605 = vor.u32 1.1754944e-38, %v4604
    %v4606 = vsel %vm4603, %v4605, %v4601
    %v4607 = vmul.f32 1.0, %v4606
    %v4608 = vrcp.pop %v4550
    %v4609 = vmul.f32 %v4550, %v4608
    %v4610 = vsub.f32 1.0, %v4609
    %v4611 = vmul.f32 %v4608, %v4610
    %v4612 = vadd.f32 %v4608, %v4611
    %vm4613 = vweird.f32 %v4550
    %vm4614 = vweird.f32 %v4608
    %vm4615 = vmor %vm4613, %vm4614
    %v4616 = vsel %vm4615, %v4608, %v4612
    %v4617 = vand.u32 2147483647, %v4550
    %vm4618 = vcmp.eq.f32.partialorder %v4617, 8.507059e+37
    %v4619 = vand.u32 %v4550, 2147483648
    %v4620 = vor.u32 1.1754944e-38, %v4619
    %v4621 = vsel %vm4618, %v4620, %v4616
    %v4622 = vmul.f32 1.0, %v4621
    %v4623 = vrcp.pop %v4551
    %v4624 = vmul.f32 %v4551, %v4623
    %v4625 = vsub.f32 1.0, %v4624
    %v4626 = vmul.f32 %v4623, %v4625
    %v4627 = vadd.f32 %v4623, %v4626
    %vm4628 = vweird.f32 %v4551
    %vm4629 = vweird.f32 %v4623
    %vm4630 = vmor %vm4628, %vm4629
    %v4631 = vsel %vm4630, %v4623, %v4627
    %v4632 = vand.u32 2147483647, %v4551
    %vm4633 = vcmp.eq.f32.partialorder %v4632, 8.507059e+37
    %v4634 = vand.u32 %v4551, 2147483648
    %v4635 = vor.u32 1.1754944e-38, %v4634
    %v4636 = vsel %vm4633, %v4635, %v4631
    %v4637 = vmul.f32 1.0, %v4636
    %v4638 = vrcp.pop %v4552
    %v4639 = vmul.f32 %v4552, %v4638
    %v4640 = vsub.f32 1.0, %v4639
    %v4641 = vmul.f32 %v4638, %v4640
    %v4642 = vadd.f32 %v4638, %v4641
    %vm4643 = vweird.f32 %v4552
    %vm4644 = vweird.f32 %v4638
    %vm4645 = vmor %vm4643, %vm4644
    %v4646 = vsel %vm4645, %v4638, %v4642
    %v4647 = vand.u32 2147483647, %v4552
    %vm4648 = vcmp.eq.f32.partialorder %v4647, 8.507059e+37
    %v4649 = vand.u32 %v4552, 2147483648
    %v4650 = vor.u32 1.1754944e-38, %v4649
    %v4651 = vsel %vm4648, %v4650, %v4646
    %v4652 = vmul.f32 1.0, %v4651
    %v4653 = vrcp.pop %v4553
    %v4654 = vmul.f32 %v4553, %v4653
    %v4655 = vsub.f32 1.0, %v4654
    %v4656 = vmul.f32 %v4653, %v4655
    %v4657 = vadd.f32 %v4653, %v4656
    %vm4658 = vweird.f32 %v4553
    %vm4659 = vweird.f32 %v4653
    %vm4660 = vmor %vm4658, %vm4659
    %v4661 = vsel %vm4660, %v4653, %v4657
    %v4662 = vand.u32 2147483647, %v4553
    %vm4663 = vcmp.eq.f32.partialorder %v4662, 8.507059e+37
    %v4664 = vand.u32 %v4553, 2147483648
    %v4665 = vor.u32 1.1754944e-38, %v4664
    %v4666 = vsel %vm4663, %v4665, %v4661
    %v4667 = vmul.f32 1.0, %v4666
    %v4668 = vrcp.pop %v4554
    %v4669 = vmul.f32 %v4554, %v4668
    %v4670 = vsub.f32 1.0, %v4669
    %v4671 = vmul.f32 %v4668, %v4670
    %v4672 = vadd.f32 %v4668, %v4671
    %vm4673 = vweird.f32 %v4554
    %vm4674 = vweird.f32 %v4668
    %vm4675 = vmor %vm4673, %vm4674
    %v4676 = vsel %vm4675, %v4668, %v4672
    %v4677 = vand.u32 2147483647, %v4554
    %vm4678 = vcmp.eq.f32.partialorder %v4677, 8.507059e+37
    %v4679 = vand.u32 %v4554, 2147483648
    %v4680 = vor.u32 1.1754944e-38, %v4679
    %v4681 = vsel %vm4678, %v4680, %v4676
    %v4682 = vmul.f32 1.0, %v4681
    %v4683 = vrcp.pop %v4555
    %v4684 = vmul.f32 %v4555, %v4683
    %v4685 = vsub.f32 1.0, %v4684
    %v4686 = vmul.f32 %v4683, %v4685
    %v4687 = vadd.f32 %v4683, %v4686
    %vm4688 = vweird.f32 %v4555
    %vm4689 = vweird.f32 %v4683
    %vm4690 = vmor %vm4688, %vm4689
    %v4691 = vsel %vm4690, %v4683, %v4687
    %v4692 = vand.u32 2147483647, %v4555
    %vm4693 = vcmp.eq.f32.partialorder %v4692, 8.507059e+37
    %v4694 = vand.u32 %v4555, 2147483648
    %v4695 = vor.u32 1.1754944e-38, %v4694
    %v4696 = vsel %vm4693, %v4695, %v4691
    %v4697 = vmul.f32 1.0, %v4696
    %v4698 = vrcp.pop %v4556
    %v4699 = vmul.f32 %v4556, %v4698
    %v4700 = vsub.f32 1.0, %v4699
    %v4701 = vmul.f32 %v4698, %v4700
    %v4702 = vadd.f32 %v4698, %v4701
    %vm4703 = vweird.f32 %v4556
    %vm4704 = vweird.f32 %v4698
    %vm4705 = vmor %vm4703, %vm4704
    %v4706 = vsel %vm4705, %v4698, %v4702
    %v4707 = vand.u32 2147483647, %v4556
    %vm4708 = vcmp.eq.f32.partialorder %v4707, 8.507059e+37
    %v4709 = vand.u32 %v4556, 2147483648
    %v4710 = vor.u32 1.1754944e-38, %v4709
    %v4711 = vsel %vm4708, %v4710, %v4706
    %v4712 = vmul.f32 1.0, %v4711
    %v4713 = vrcp.pop %v4557
    %v4714 = vmul.f32 %v4557, %v4713
    %v4715 = vsub.f32 1.0, %v4714
    %v4716 = vmul.f32 %v4713, %v4715
    %v4717 = vadd.f32 %v4713, %v4716
    %vm4718 = vweird.f32 %v4557
    %vm4719 = vweird.f32 %v4713
    %vm4720 = vmor %vm4718, %vm4719
    %v4721 = vsel %vm4720, %v4713, %v4717
    %v4722 = vand.u32 2147483647, %v4557
    %vm4723 = vcmp.eq.f32.partialorder %v4722, 8.507059e+37
    %v4724 = vand.u32 %v4557, 2147483648
    %v4725 = vor.u32 1.1754944e-38, %v4724
    %v4726 = vsel %vm4723, %v4725, %v4721
    %v4727 = vmul.f32 1.0, %v4726
    %v4728 = vrcp.pop %v4558
    %v4729 = vmul.f32 %v4558, %v4728
    %v4730 = vsub.f32 1.0, %v4729
    %v4731 = vmul.f32 %v4728, %v4730
    %v4732 = vadd.f32 %v4728, %v4731
    %vm4733 = vweird.f32 %v4558
    %vm4734 = vweird.f32 %v4728
    %vm4735 = vmor %vm4733, %vm4734
    %v4736 = vsel %vm4735, %v4728, %v4732
    %v4737 = vand.u32 2147483647, %v4558
    %vm4738 = vcmp.eq.f32.partialorder %v4737, 8.507059e+37
    %v4739 = vand.u32 %v4558, 2147483648
    %v4740 = vor.u32 1.1754944e-38, %v4739
    %v4741 = vsel %vm4738, %v4740, %v4736
    %v4742 = vmul.f32 1.0, %v4741
    %v4743 = vrcp.pop %v4559
    %v4744 = vmul.f32 %v4559, %v4743
    %v4745 = vsub.f32 1.0, %v4744
    %v4746 = vmul.f32 %v4743, %v4745
    %v4747 = vadd.f32 %v4743, %v4746
    %vm4748 = vweird.f32 %v4559
    %vm4749 = vweird.f32 %v4743
    %vm4750 = vmor %vm4748, %vm4749
    %v4751 = vsel %vm4750, %v4743, %v4747
    %v4752 = vand.u32 2147483647, %v4559
    %vm4753 = vcmp.eq.f32.partialorder %v4752, 8.507059e+37
    %v4754 = vand.u32 %v4559, 2147483648
    %v4755 = vor.u32 1.1754944e-38, %v4754
    %v4756 = vsel %vm4753, %v4755, %v4751
    %v4757 = vmul.f32 1.0, %v4756
    %v4758 = vrcp.pop %v4560
    %v4759 = vmul.f32 %v4560, %v4758
    %v4760 = vsub.f32 1.0, %v4759
    %v4761 = vmul.f32 %v4758, %v4760
    %v4762 = vadd.f32 %v4758, %v4761
    %vm4763 = vweird.f32 %v4560
    %vm4764 = vweird.f32 %v4758
    %vm4765 = vmor %vm4763, %vm4764
    %v4766 = vsel %vm4765, %v4758, %v4762
    %v4767 = vand.u32 2147483647, %v4560
    %vm4768 = vcmp.eq.f32.partialorder %v4767, 8.507059e+37
    %v4769 = vand.u32 %v4560, 2147483648
    %v4770 = vor.u32 1.1754944e-38, %v4769
    %v4771 = vsel %vm4768, %v4770, %v4766
    %v4772 = vmul.f32 1.0, %v4771
    %v4773 = vrcp.pop %v4561
    %v4774 = vmul.f32 %v4561, %v4773
    %v4775 = vsub.f32 1.0, %v4774
    %v4776 = vmul.f32 %v4773, %v4775
    %v4777 = vadd.f32 %v4773, %v4776
    %vm4778 = vweird.f32 %v4561
    %vm4779 = vweird.f32 %v4773
    %vm4780 = vmor %vm4778, %vm4779
    %v4781 = vsel %vm4780, %v4773, %v4777
    %v4782 = vand.u32 2147483647, %v4561
    %vm4783 = vcmp.eq.f32.partialorder %v4782, 8.507059e+37
    %v4784 = vand.u32 %v4561, 2147483648
    %v4785 = vor.u32 1.1754944e-38, %v4784
    %v4786 = vsel %vm4783, %v4785, %v4781
    %v4787 = vmul.f32 1.0, %v4786
    %v4788 = vrcp.pop %v4562
    %v4789 = vmul.f32 %v4562, %v4788
    %v4790 = vsub.f32 1.0, %v4789
    %v4791 = vmul.f32 %v4788, %v4790
    %v4792 = vadd.f32 %v4788, %v4791
    %vm4793 = vweird.f32 %v4562
    %vm4794 = vweird.f32 %v4788
    %vm4795 = vmor %vm4793, %vm4794
    %v4796 = vsel %vm4795, %v4788, %v4792
    %v4797 = vand.u32 2147483647, %v4562
    %vm4798 = vcmp.eq.f32.partialorder %v4797, 8.507059e+37
    %v4799 = vand.u32 %v4562, 2147483648
    %v4800 = vor.u32 1.1754944e-38, %v4799
    %v4801 = vsel %vm4798, %v4800, %v4796
    %v4802 = vmul.f32 1.0, %v4801
    %4819 = vrot.lane.b32.xlu0 %v4577, 120
    %v4820 = vpop.permute.xlu0 %4819
    %4821 = vrot.lane.b32.xlu0 %v4592, 120
    %v4822 = vpop.permute.xlu0 %4821
    %4823 = vrot.lane.b32.xlu0 %v4607, 120
    %v4824 = vpop.permute.xlu0 %4823
    %4825 = vrot.lane.b32.xlu0 %v4622, 120
    %v4826 = vpop.permute.xlu0 %4825
    %4827 = vrot.lane.b32.xlu0 %v4637, 120
    %v4828 = vpop.permute.xlu0 %4827
    %4829 = vrot.lane.b32.xlu0 %v4652, 120
    %v4830 = vpop.permute.xlu0 %4829
    %4831 = vrot.lane.b32.xlu0 %v4667, 120
    %v4832 = vpop.permute.xlu0 %4831
    %4833 = vrot.lane.b32.xlu0 %v4682, 120
    %v4834 = vpop.permute.xlu0 %4833
    %4835 = vrot.lane.b32.xlu0 %v4697, 120
    %v4836 = vpop.permute.xlu0 %4835
    %4837 = vrot.lane.b32.xlu0 %v4712, 120
    %v4838 = vpop.permute.xlu0 %4837
    %4839 = vrot.lane.b32.xlu0 %v4727, 120
    %v4840 = vpop.permute.xlu0 %4839
    %4841 = vrot.lane.b32.xlu0 %v4742, 120
    %v4842 = vpop.permute.xlu0 %4841
    %4843 = vrot.lane.b32.xlu0 %v4757, 120
    %v4844 = vpop.permute.xlu0 %4843
    %4845 = vrot.lane.b32.xlu0 %v4772, 120
    %v4846 = vpop.permute.xlu0 %4845
    %4847 = vrot.lane.b32.xlu0 %v4787, 120
    %v4848 = vpop.permute.xlu0 %4847
    %4849 = vrot.lane.b32.xlu0 %v4802, 120
    %v4850 = vpop.permute.xlu0 %4849
    %vm4867 = vcmask 7168
    %4868 = vst.msk [vmem:[%s6] sm:$0xff] %vm4867, %v4820
    %4869 = vst.msk [vmem:[%s6 + $0x8] sm:$0xff] %vm4867, %v4822
    %4870 = vst.msk [vmem:[%s6 + $0x10] sm:$0xff] %vm4867, %v4824
    %4871 = vst.msk [vmem:[%s6 + $0x18] sm:$0xff] %vm4867, %v4826
    %4872 = vst.msk [vmem:[%s6 + $0x20] sm:$0xff] %vm4867, %v4828
    %4873 = vst.msk [vmem:[%s6 + $0x28] sm:$0xff] %vm4867, %v4830
    %4874 = vst.msk [vmem:[%s6 + $0x30] sm:$0xff] %vm4867, %v4832
    %4875 = vst.msk [vmem:[%s6 + $0x38] sm:$0xff] %vm4867, %v4834
    %4876 = vst.msk [vmem:[%s6 + $0x40] sm:$0xff] %vm4867, %v4836
    %4877 = vst.msk [vmem:[%s6 + $0x48] sm:$0xff] %vm4867, %v4838
    %4878 = vst.msk [vmem:[%s6 + $0x50] sm:$0xff] %vm4867, %v4840
    %4879 = vst.msk [vmem:[%s6 + $0x58] sm:$0xff] %vm4867, %v4842
    %4880 = vst.msk [vmem:[%s6 + $0x60] sm:$0xff] %vm4867, %v4844
    %4881 = vst.msk [vmem:[%s6 + $0x68] sm:$0xff] %vm4867, %v4846
    %4882 = vst.msk [vmem:[%s6 + $0x70] sm:$0xff] %vm4867, %v4848
    %4883 = vst.msk [vmem:[%s6 + $0x78] sm:$0xff] %vm4867, %v4850
    // Predicated region
    $region30: #{tpu_custom_call.1} parent=1 // pred_check
      _
    $region31: #{tpu_custom_call.1} parent=1 // pred_check_branch
      %4885 = sbr.rel (0) target = $region33
    $region32: #{tpu_custom_call.1} parent=1 // pred_region
      _
    $region33: #{tpu_custom_call.1} parent=1 // pred_fallthru
      _
    // Predicated region
    $region34: #{tpu_custom_call.1} parent=1 // pred_check
      _
    $region35: #{tpu_custom_call.1} parent=1 // pred_check_branch
      %4887 = sbr.rel (0) target = $region37
    $region36: #{tpu_custom_call.1} parent=1 // pred_region
      _
    $region37: #{tpu_custom_call.1} parent=1 // pred_fallthru
      _
    %4888 = vsyncpa [#allocation5], 1

</llo_original>
